<compile_context>
chip_gen: v7x
topology: tpu7x:2x2x1
jax: 0.10.0
libtpu: 0.0.40
codegen_flags: <defaults>
</compile_context>

<pallas_src>
import jax
import jax.numpy as jnp
from jax import lax
from jax.experimental import pallas as pl
from jax.experimental.pallas import tpu as pltpu

EXPANSION = 4
_MM_DTYPE = jnp.bfloat16                 # MXU input dtype (accumulation stays f32)
_VMEM_LIMIT = 48 * 1024 * 1024           # under v7x's 64 MiB; fine on v5e/v6e (128 MiB)


# ---------------------------------------------------------------------------
# Kernel
# ---------------------------------------------------------------------------

def _bottleneck_kernel(x_first_ref, x_next_ref, w1_ref, b1_ref,
                       w2_ref, b2_ref, w3_ref, b3_ref,
                       o_ref, ring_ref, xres_ref):
    """One (n, d) plane of the full bottleneck block.

    ring_ref : (3, H+2, W+2, C) bf16 rolling halo ring of y1 planes (slot = plane % 3),
               zero border in H/W, zero interior for virtual planes -1 and D.
    xres_ref : (2, H, W, Cout) carry of the x plane needed as residual at the *next* step.
    """
    d = pl.program_id(1)
    nd = pl.num_programs(1)
    _, _, H, W, Cin = x_next_ref.shape
    C = w1_ref.shape[1]            # planes
    C2 = w2_ref.shape[-1]          # conv2 out channels (== planes)
    Cout = w3_ref.shape[-1]        # planes * expansion
    mm = w1_ref.dtype

    slot_m1 = lax.rem(d + 2, 3)    # slot holding plane d-1
    slot_0 = lax.rem(d, 3)         # slot holding plane d
    slot_p1 = lax.rem(d + 1, 3)    # slot holding plane d+1

    def conv1_bn_relu(x_plane):
        acc = jnp.dot(x_plane.reshape(H * W, Cin).astype(mm), w1_ref[...],
                      preferred_element_type=jnp.float32)
        y = jnp.maximum(acc + b1_ref[...], 0.0)
        return y.reshape(H, W, C).astype(ring_ref.dtype)

    # --- first step of each image: reset the ring (borders + virtual plane -1) and seed
    #     plane 0 + its residual carry. Re-running this per n keeps the kernel correct
    #     under megacore sharding of the N axis. ---
    @pl.when(d == 0)
    def _():
        ring_ref[...] = jnp.zeros(ring_ref.shape, ring_ref.dtype)
        x0 = x_first_ref[0, 0]
        ring_ref[0, 1:H + 1, 1:W + 1, :] = conv1_bn_relu(x0)       # plane 0 -> slot 0
        xres_ref[0] = x0.astype(xres_ref.dtype)                    # residual for step 0

    # --- every step but the last: produce y1 for plane d+1 and carry x[d+1] for the next
    #     step's residual (so x is only read once from HBM). ---
    @pl.when(d + 1 < nd)
    def _():
        xn = x_next_ref[0, 0]
        ring_ref[slot_p1, 1:H + 1, 1:W + 1, :] = conv1_bn_relu(xn)
        xres_ref[lax.rem(d + 1, 2)] = xn.astype(xres_ref.dtype)

    # --- last step of each image: the slot for virtual plane D must read as zeros. ---
    @pl.when(d == nd - 1)
    def _():
        ring_ref[slot_p1, 1:H + 1, 1:W + 1, :] = jnp.zeros((H, W, C), ring_ref.dtype)

    # --- 3x3x3 conv + bn2 + relu: im2col along kw -> 9 MXU dots with K = 3*C,
    #     accumulated in registers (single store at the end). ---
    slots = (slot_m1, slot_0, slot_p1)
    acc = jnp.zeros((H * W, C2), jnp.float32)
    for kd in range(3):
        for kh in range(3):
            rows = ring_ref[slots[kd], kh:kh + H, :, :]            # (H, W+2, C) bf16
            im = jnp.concatenate(
                [rows[:, 0:W, :], rows[:, 1:W + 1, :], rows[:, 2:W + 2, :]], axis=-1)
            acc = acc + jnp.dot(im.reshape(H * W, 3 * C), w2_ref[kd, kh],
                                preferred_element_type=jnp.float32)
    y2 = jnp.maximum(acc + b2_ref[...], 0.0)

    # --- 1x1x1 conv + bn3 + residual add + relu. ---
    out = jnp.dot(y2.astype(mm), w3_ref[...], preferred_element_type=jnp.float32)
    res = xres_ref[lax.rem(d, 2)].reshape(H * W, Cout).astype(jnp.float32)
    out = jnp.maximum(out + b3_ref[...] + res, 0.0)
    o_ref[0, 0] = out.reshape(H, W, Cout).astype(o_ref.dtype)


# ---------------------------------------------------------------------------
# Wrapper (pallas_call plumbing)
# ---------------------------------------------------------------------------

def bottleneck_forward(x, params):
    """x: (N, D, H, W, Cin) channels-last; requires Cin == planes * 4 (no downsample)."""
    N, D, H, W, Cin = x.shape

    w1f, b1 = _fold_bn(params["w1"], params["bn1"])
    w2f, b2 = _fold_bn(params["w2"], params["bn2"])
    w3f, b3 = _fold_bn(params["w3"], params["bn3"])
    C = w1f.shape[1]
    C2 = w2f.shape[-1]
    Cout = w3f.shape[-1]
    assert Cin == Cout, "identity residual requires in_planes == planes * expansion"

    # Fold kw into the contraction dim: (kd, kh, kw, cin, cout) -> (kd, kh, kw*C + cin, cout).
    w2k = w2f.reshape(3, 3, 3 * C, C2).astype(_MM_DTYPE)
    w1m = w1f.astype(_MM_DTYPE)
    w3m = w3f.astype(_MM_DTYPE)

    flops = 2 * N * D * H * W * (Cin * C + 27 * C * C2 + C2 * Cout)
    bytes_accessed = (x.size * x.dtype.itemsize            # x streamed ~once
                      + N * D * H * W * Cout * 4           # output write
                      + (w1m.size + w2k.size + w3m.size) * 2
                      + (b1.size + b2.size + b3.size) * 4)

    def x_spec(index_map):
        return pl.BlockSpec((1, 1, H, W, Cin), index_map)

    return pl.pallas_call(
        _bottleneck_kernel,
        out_shape=jax.ShapeDtypeStruct((N, D, H, W, Cout), x.dtype),
        grid=(N, D),
        in_specs=[
            # x plane 0 (fetched once per image; used at d==0 for y1[0] and the first residual).
            x_spec(lambda n, d: (n, 0, 0, 0, 0)),
            # x plane d+1 (edge-clamped; the only per-step HBM stream besides the output).
            x_spec(lambda n, d: (n, jnp.minimum(d + 1, D - 1), 0, 0, 0)),
            pl.BlockSpec((Cin, C), lambda n, d: (0, 0)),                 # conv1 weights (bf16)
            pl.BlockSpec((1, C), lambda n, d: (0, 0)),                   # bn1 bias (f32)
            pl.BlockSpec((3, 3, 3 * C, C2), lambda n, d: (0, 0, 0, 0)),  # conv2 weights (bf16)
            pl.BlockSpec((1, C2), lambda n, d: (0, 0)),                  # bn2 bias (f32)
            pl.BlockSpec((C2, Cout), lambda n, d: (0, 0)),               # conv3 weights (bf16)
            pl.BlockSpec((1, Cout), lambda n, d: (0, 0)),                # bn3 bias (f32)
        ],
        out_specs=pl.BlockSpec((1, 1, H, W, Cout), lambda n, d: (n, d, 0, 0, 0)),
        scratch_shapes=[
            pltpu.VMEM((3, H + 2, W + 2, C), _MM_DTYPE),   # rolling y1 halo ring (bf16)
            pltpu.VMEM((2, H, W, Cout), x.dtype),          # residual x-plane carry
        ],
        compiler_params=pltpu.CompilerParams(
            # D must stay sequential (rolling carry); N still shards across megacore TCs.
            dimension_semantics=("parallel", "arbitrary"),
            vmem_limit_bytes=_VMEM_LIMIT),
        cost_estimate=pl.CostEstimate(flops=flops, transcendentals=0,
                                      bytes_accessed=bytes_accessed),
    )(x, x, w1m, b1.reshape(1, C), w2k, b2.reshape(1, C2), w3m, b3.reshape(1, Cout))


# ---------------------------------------------------------------------------
# Parameters / BN folding / reference
# ---------------------------------------------------------------------------

def init_params(key, in_planes, planes):
    out_planes = planes * EXPANSION
    ks = jax.random.split(key, 6)

    def bn_params(k, c):
        k1, k2, k3, k4 = jax.random.split(k, 4)
        gamma = jax.random.uniform(k1, (c,), jnp.float32, 0.5, 1.5)
        beta = jax.random.normal(k2, (c,), jnp.float32) * 0.1
        mean = jax.random.normal(k3, (c,), jnp.float32) * 0.1
        var = jax.random.uniform(k4, (c,), jnp.float32, 0.5, 1.5)
        return gamma, beta, mean, var

    return dict(
        w1=jax.random.normal(ks[0], (in_planes, planes), jnp.float32) * 0.1,
        bn1=bn_params(ks[3], planes),
        w2=jax.random.normal(ks[1], (3, 3, 3, planes, planes), jnp.float32) * 0.1,
        bn2=bn_params(ks[4], planes),
        w3=jax.random.normal(ks[2], (planes, out_planes), jnp.float32) * 0.1,
        bn3=bn_params(ks[5], out_planes),
    )


def _fold_bn(w, bn, eps=1e-5):
    # Inference-mode BN folded into per-output-channel scale + bias.
    gamma, beta, mean, var = bn
    scale = gamma / jnp.sqrt(var + eps)
    return (w * scale).astype(jnp.float32), (beta - mean * scale).astype(jnp.float32)


def _reference_forward(x, params):
    # Pure-JAX f32 reference (same folded-BN inference semantics).
    w1f, b1 = _fold_bn(params["w1"], params["bn1"])
    w2f, b2 = _fold_bn(params["w2"], params["bn2"])
    w3f, b3 = _fold_bn(params["w3"], params["bn3"])
    hp = jax.lax.Precision.HIGHEST
    y1 = jax.nn.relu(jnp.einsum("ndhwc,ck->ndhwk", x, w1f, precision=hp) + b1)
    y2 = jax.lax.conv_general_dilated(
        y1, w2f, window_strides=(1, 1, 1), padding="SAME",
        dimension_numbers=("NDHWC", "DHWIO", "NDHWC"), precision=hp)
    y2 = jax.nn.relu(y2 + b2)
    y3 = jnp.einsum("ndhwc,ck->ndhwk", y2, w3f, precision=hp) + b3
    return jax.nn.relu(y3 + x)


if __name__ == "__main__":
    key = jax.random.PRNGKey(0)
    k_x, k_p = jax.random.split(key)

    planes = 4
    in_planes = planes * EXPANSION          # 16, so the residual add is shape-valid
    N, D, H, W = 2, 8, 8, 8

    x = jax.random.normal(k_x, (N, D, H, W, in_planes), jnp.float32)
    params = init_params(k_p, in_planes, planes)

    out = jax.block_until_ready(bottleneck_forward(x, params))
    assert out.shape == (N, D, H, W, in_planes)
    assert bool(jnp.all(out >= 0.0))        # final ReLU

    ref = _reference_forward(x, params)
    max_err = float(jnp.max(jnp.abs(out - ref)))
    assert bool(jnp.allclose(out, ref, atol=5e-2, rtol=5e-2)), max_err
    print("KERNEL_OK")
</pallas_src>

<mosaic_0001>
module attributes {stable_mosaic.version = 11 : i64} {
  func.func @_bottleneck_kernel(%arg0: i32, %arg1: i32, %arg2: memref<1x1x8x8x16xf32, #tpu.memory_space<vmem>>, %arg3: memref<1x1x8x8x16xf32, #tpu.memory_space<vmem>>, %arg4: memref<16x4xbf16, #tpu.memory_space<vmem>>, %arg5: memref<1x4xf32, #tpu.memory_space<vmem>>, %arg6: memref<3x3x12x4xbf16, #tpu.memory_space<vmem>>, %arg7: memref<1x4xf32, #tpu.memory_space<vmem>>, %arg8: memref<4x16xbf16, #tpu.memory_space<vmem>>, %arg9: memref<1x16xf32, #tpu.memory_space<vmem>>, %arg10: memref<1x1x8x8x16xf32, #tpu.memory_space<vmem>>, %arg11: memref<3x10x10x4xbf16, #tpu.memory_space<vmem>>, %arg12: memref<2x8x8x16xf32, #tpu.memory_space<vmem>>) attributes {dimension_semantics = [#tpu.dimension_semantics<parallel>, #tpu.dimension_semantics<arbitrary>], iteration_bounds = array<i64: 2, 8>, scalar_prefetch = 0 : i64, scratch_operands = 2 : i64, tpu.core_type = #tpu.core_type<tc>, window_params = [{transform_indices = @transform_0, window_bounds = array<i64: 1, 1, 8, 8, 16>}, {transform_indices = @transform_1, window_bounds = array<i64: 1, 1, 8, 8, 16>}, {pipeline_mode = #tpu.pipeline_mode<synchronous>, transform_indices = @transform_2, window_bounds = array<i64: 16, 4>}, {pipeline_mode = #tpu.pipeline_mode<synchronous>, transform_indices = @transform_3, window_bounds = array<i64: 1, 4>}, {pipeline_mode = #tpu.pipeline_mode<synchronous>, transform_indices = @transform_4, window_bounds = array<i64: 3, 3, 12, 4>}, {pipeline_mode = #tpu.pipeline_mode<synchronous>, transform_indices = @transform_5, window_bounds = array<i64: 1, 4>}, {pipeline_mode = #tpu.pipeline_mode<synchronous>, transform_indices = @transform_6, window_bounds = array<i64: 4, 16>}, {pipeline_mode = #tpu.pipeline_mode<synchronous>, transform_indices = @transform_7, window_bounds = array<i64: 1, 16>}, {transform_indices = @transform_8, window_bounds = array<i64: 1, 1, 8, 8, 16>}]} {
    %c2_i32 = arith.constant 2 : i32
    %0 = arith.addi %arg1, %c2_i32 : i32
    %c3_i32 = arith.constant 3 : i32
    %1 = arith.remsi %0, %c3_i32 : i32
    %c3_i32_0 = arith.constant 3 : i32
    %2 = arith.remsi %arg1, %c3_i32_0 : i32
    %c1_i32 = arith.constant 1 : i32
    %3 = arith.addi %arg1, %c1_i32 : i32
    %c3_i32_1 = arith.constant 3 : i32
    %4 = arith.remsi %3, %c3_i32_1 : i32
    %c0_i32 = arith.constant 0 : i32
    %5 = arith.cmpi eq, %arg1, %c0_i32 : i32
    %6 = arith.extui %5 : i1 to i32
    %c0_i32_2 = arith.constant 0 : i32
    %7 = arith.cmpi ne, %6, %c0_i32_2 : i32
    scf.if %7 {
      %cst_93 = arith.constant 0.000000e+00 : bf16
      %147 = vector.broadcast %cst_93 : bf16 to vector<3x10x10x4xbf16>
      %c0_94 = arith.constant 0 : index
      %c0_95 = arith.constant 0 : index
      %c0_96 = arith.constant 0 : index
      %c0_97 = arith.constant 0 : index
      %148 = vector.load %arg11[%c0_94, %c0_95, %c0_96, %c0_97] : memref<3x10x10x4xbf16, #tpu.memory_space<vmem>>, vector<3x10x10x4xbf16>
      tpu.vector_store %arg11[%c0_94, %c0_95, %c0_96, %c0_97], %147 {strides = array<i32>} : memref<3x10x10x4xbf16, #tpu.memory_space<vmem>>, vector<3x10x10x4xbf16>,
      %c0_98 = arith.constant 0 : index
      %c0_99 = arith.constant 0 : index
      %c0_100 = arith.constant 0 : index
      %c0_101 = arith.constant 0 : index
      %c0_102 = arith.constant 0 : index
      %149 = vector.load %arg2[%c0_98, %c0_99, %c0_100, %c0_101, %c0_102] : memref<1x1x8x8x16xf32, #tpu.memory_space<vmem>>, vector<1x1x8x8x16xf32>
      %150 = vector.shape_cast %149 : vector<1x1x8x8x16xf32> to vector<8x8x16xf32>
      %151 = vector.shape_cast %150 : vector<8x8x16xf32> to vector<64x16xf32>
      %152 = arith.truncf %151 : vector<64x16xf32> to vector<64x16xbf16>
      %c0_103 = arith.constant 0 : index
      %c0_104 = arith.constant 0 : index
      %153 = vector.load %arg4[%c0_103, %c0_104] : memref<16x4xbf16, #tpu.memory_space<vmem>>, vector<16x4xbf16>
      %cst_105 = arith.constant dense<0.000000e+00> : vector<64x4xf32>
      %154 = tpu.matmul %152, %153, %cst_105 {dimension_numbers = #tpu.dot_dimension_numbers<[1], [0], [0], [1], [0, 0, 1, 1], [], []>} : vector<64x16xbf16>, vector<16x4xbf16>, vector<64x4xf32> -> vector<64x4xf32>
      %c0_106 = arith.constant 0 : index
      %c0_107 = arith.constant 0 : index
      %155 = vector.load %arg5[%c0_106, %c0_107] : memref<1x4xf32, #tpu.memory_space<vmem>>, vector<1x4xf32>
      %156 = vector.broadcast %155 : vector<1x4xf32> to vector<64x4xf32>
      %157 = arith.addf %154, %156 : vector<64x4xf32>
      %cst_108 = arith.constant 0.000000e+00 : f32
      %158 = vector.broadcast %cst_108 : f32 to vector<64x4xf32>
      %159 = arith.maximumf %157, %158 : vector<64x4xf32>
      %160 = vector.shape_cast %159 : vector<64x4xf32> to vector<8x8x4xf32>
      %161 = arith.truncf %160 : vector<8x8x4xf32> to vector<8x8x4xbf16>
      %c0_109 = arith.constant 0 : index
      %c1_110 = arith.constant 1 : index
      %c1_111 = arith.constant 1 : index
      %c0_112 = arith.constant 0 : index
      %162 = vector.load %arg11[%c0_109, %c1_110, %c1_111, %c0_112] : memref<3x10x10x4xbf16, #tpu.memory_space<vmem>>, vector<1x8x8x4xbf16>
      %163 = vector.shape_cast %162 : vector<1x8x8x4xbf16> to vector<8x8x4xbf16>
      %164 = vector.shape_cast %161 : vector<8x8x4xbf16> to vector<1x8x8x4xbf16>
      tpu.vector_store %arg11[%c0_109, %c1_110, %c1_111, %c0_112], %164 {strides = array<i32>} : memref<3x10x10x4xbf16, #tpu.memory_space<vmem>>, vector<1x8x8x4xbf16>,
      %c0_113 = arith.constant 0 : index
      %c0_114 = arith.constant 0 : index
      %c0_115 = arith.constant 0 : index
      %c0_116 = arith.constant 0 : index
      %165 = vector.load %arg12[%c0_113, %c0_114, %c0_115, %c0_116] : memref<2x8x8x16xf32, #tpu.memory_space<vmem>>, vector<1x8x8x16xf32>
      %166 = vector.shape_cast %165 : vector<1x8x8x16xf32> to vector<8x8x16xf32>
      %167 = vector.shape_cast %150 : vector<8x8x16xf32> to vector<1x8x8x16xf32>
      tpu.vector_store %arg12[%c0_113, %c0_114, %c0_115, %c0_116], %167 {strides = array<i32>} : memref<2x8x8x16xf32, #tpu.memory_space<vmem>>, vector<1x8x8x16xf32>,
    } else {
    }
    %c1_i32_3 = arith.constant 1 : i32
    %8 = arith.addi %arg1, %c1_i32_3 : i32
    %c8_i32 = arith.constant 8 : i32
    %9 = arith.cmpi slt, %8, %c8_i32 : i32
    %10 = arith.extui %9 : i1 to i32
    %c0_i32_4 = arith.constant 0 : i32
    %11 = arith.cmpi ne, %10, %c0_i32_4 : i32
    scf.if %11 {
      %c0_93 = arith.constant 0 : index
      %c0_94 = arith.constant 0 : index
      %c0_95 = arith.constant 0 : index
      %c0_96 = arith.constant 0 : index
      %c0_97 = arith.constant 0 : index
      %147 = vector.load %arg3[%c0_93, %c0_94, %c0_95, %c0_96, %c0_97] : memref<1x1x8x8x16xf32, #tpu.memory_space<vmem>>, vector<1x1x8x8x16xf32>
      %148 = vector.shape_cast %147 : vector<1x1x8x8x16xf32> to vector<8x8x16xf32>
      %149 = vector.shape_cast %148 : vector<8x8x16xf32> to vector<64x16xf32>
      %150 = arith.truncf %149 : vector<64x16xf32> to vector<64x16xbf16>
      %c0_98 = arith.constant 0 : index
      %c0_99 = arith.constant 0 : index
      %151 = vector.load %arg4[%c0_98, %c0_99] : memref<16x4xbf16, #tpu.memory_space<vmem>>, vector<16x4xbf16>
      %cst_100 = arith.constant dense<0.000000e+00> : vector<64x4xf32>
      %152 = tpu.matmul %150, %151, %cst_100 {dimension_numbers = #tpu.dot_dimension_numbers<[1], [0], [0], [1], [0, 0, 1, 1], [], []>} : vector<64x16xbf16>, vector<16x4xbf16>, vector<64x4xf32> -> vector<64x4xf32>
      %c0_101 = arith.constant 0 : index
      %c0_102 = arith.constant 0 : index
      %153 = vector.load %arg5[%c0_101, %c0_102] : memref<1x4xf32, #tpu.memory_space<vmem>>, vector<1x4xf32>
      %154 = vector.broadcast %153 : vector<1x4xf32> to vector<64x4xf32>
      %155 = arith.addf %152, %154 : vector<64x4xf32>
      %cst_103 = arith.constant 0.000000e+00 : f32
      %156 = vector.broadcast %cst_103 : f32 to vector<64x4xf32>
      %157 = arith.maximumf %155, %156 : vector<64x4xf32>
      %158 = vector.shape_cast %157 : vector<64x4xf32> to vector<8x8x4xf32>
      %159 = arith.truncf %158 : vector<8x8x4xf32> to vector<8x8x4xbf16>
      %160 = arith.index_cast %4 : i32 to index
      %c1_104 = arith.constant 1 : index
      %c1_105 = arith.constant 1 : index
      %c0_106 = arith.constant 0 : index
      %161 = vector.load %arg11[%160, %c1_104, %c1_105, %c0_106] : memref<3x10x10x4xbf16, #tpu.memory_space<vmem>>, vector<1x8x8x4xbf16>
      %162 = vector.shape_cast %161 : vector<1x8x8x4xbf16> to vector<8x8x4xbf16>
      %163 = vector.shape_cast %159 : vector<8x8x4xbf16> to vector<1x8x8x4xbf16>
      tpu.vector_store %arg11[%160, %c1_104, %c1_105, %c0_106], %163 {strides = array<i32>} : memref<3x10x10x4xbf16, #tpu.memory_space<vmem>>, vector<1x8x8x4xbf16>,
      %c1_i32_107 = arith.constant 1 : i32
      %164 = arith.addi %arg1, %c1_i32_107 : i32
      %c2_i32_108 = arith.constant 2 : i32
      %165 = arith.remsi %164, %c2_i32_108 : i32
      %166 = arith.index_cast %165 : i32 to index
      %c0_109 = arith.constant 0 : index
      %c0_110 = arith.constant 0 : index
      %c0_111 = arith.constant 0 : index
      %167 = vector.load %arg12[%166, %c0_109, %c0_110, %c0_111] : memref<2x8x8x16xf32, #tpu.memory_space<vmem>>, vector<1x8x8x16xf32>
      %168 = vector.shape_cast %167 : vector<1x8x8x16xf32> to vector<8x8x16xf32>
      %169 = vector.shape_cast %148 : vector<8x8x16xf32> to vector<1x8x8x16xf32>
      tpu.vector_store %arg12[%166, %c0_109, %c0_110, %c0_111], %169 {strides = array<i32>} : memref<2x8x8x16xf32, #tpu.memory_space<vmem>>, vector<1x8x8x16xf32>,
    } else {
    }
    %c7_i32 = arith.constant 7 : i32
    %12 = arith.cmpi eq, %arg1, %c7_i32 : i32
    %13 = arith.extui %12 : i1 to i32
    %c0_i32_5 = arith.constant 0 : i32
    %14 = arith.cmpi ne, %13, %c0_i32_5 : i32
    scf.if %14 {
      %cst_93 = arith.constant 0.000000e+00 : bf16
      %147 = vector.broadcast %cst_93 : bf16 to vector<8x8x4xbf16>
      %148 = arith.index_cast %4 : i32 to index
      %c1_94 = arith.constant 1 : index
      %c1_95 = arith.constant 1 : index
      %c0_96 = arith.constant 0 : index
      %149 = vector.load %arg11[%148, %c1_94, %c1_95, %c0_96] : memref<3x10x10x4xbf16, #tpu.memory_space<vmem>>, vector<1x8x8x4xbf16>
      %150 = vector.shape_cast %149 : vector<1x8x8x4xbf16> to vector<8x8x4xbf16>
      %151 = vector.shape_cast %147 : vector<8x8x4xbf16> to vector<1x8x8x4xbf16>
      tpu.vector_store %arg11[%148, %c1_94, %c1_95, %c0_96], %151 {strides = array<i32>} : memref<3x10x10x4xbf16, #tpu.memory_space<vmem>>, vector<1x8x8x4xbf16>,
    } else {
    }
    %cst = arith.constant 0.000000e+00 : f32
    %15 = vector.broadcast %cst : f32 to vector<64x4xf32>
    %16 = arith.index_cast %1 : i32 to index
    %c0 = arith.constant 0 : index
    %c0_6 = arith.constant 0 : index
    %c0_7 = arith.constant 0 : index
    %17 = vector.load %arg11[%16, %c0, %c0_6, %c0_7] : memref<3x10x10x4xbf16, #tpu.memory_space<vmem>>, vector<1x8x10x4xbf16>
    %18 = vector.shape_cast %17 : vector<1x8x10x4xbf16> to vector<8x10x4xbf16>
    %19 = vector.extract_strided_slice %18 {offsets = [0, 0, 0], sizes = [8, 8, 4], strides = [1, 1, 1]} : vector<8x10x4xbf16> to vector<8x8x4xbf16>
    %20 = vector.extract_strided_slice %18 {offsets = [0, 1, 0], sizes = [8, 8, 4], strides = [1, 1, 1]} : vector<8x10x4xbf16> to vector<8x8x4xbf16>
    %21 = vector.extract_strided_slice %18 {offsets = [0, 2, 0], sizes = [8, 8, 4], strides = [1, 1, 1]} : vector<8x10x4xbf16> to vector<8x8x4xbf16>
    %22 = tpu.concatenate %19, %20, %21 in 2 : vector<8x8x4xbf16>, vector<8x8x4xbf16>, vector<8x8x4xbf16> -> vector<8x8x12xbf16>
    %23 = vector.shape_cast %22 : vector<8x8x12xbf16> to vector<64x12xbf16>
    %c0_8 = arith.constant 0 : index
    %c0_9 = arith.constant 0 : index
    %c0_10 = arith.constant 0 : index
    %c0_11 = arith.constant 0 : index
    %24 = vector.load %arg6[%c0_8, %c0_9, %c0_10, %c0_11] : memref<3x3x12x4xbf16, #tpu.memory_space<vmem>>, vector<1x1x12x4xbf16>
    %25 = vector.shape_cast %24 : vector<1x1x12x4xbf16> to vector<12x4xbf16>
    %cst_12 = arith.constant dense<0.000000e+00> : vector<64x4xf32>
    %26 = tpu.matmul %23, %25, %cst_12 {dimension_numbers = #tpu.dot_dimension_numbers<[1], [0], [0], [1], [0, 0, 1, 1], [], []>} : vector<64x12xbf16>, vector<12x4xbf16>, vector<64x4xf32> -> vector<64x4xf32>
    %27 = arith.addf %15, %26 : vector<64x4xf32>
    %28 = arith.index_cast %1 : i32 to index
    %c1 = arith.constant 1 : index
    %c0_13 = arith.constant 0 : index
    %c0_14 = arith.constant 0 : index
    %29 = vector.load %arg11[%28, %c1, %c0_13, %c0_14] : memref<3x10x10x4xbf16, #tpu.memory_space<vmem>>, vector<1x8x10x4xbf16>
    %30 = vector.shape_cast %29 : vector<1x8x10x4xbf16> to vector<8x10x4xbf16>
    %31 = vector.extract_strided_slice %30 {offsets = [0, 0, 0], sizes = [8, 8, 4], strides = [1, 1, 1]} : vector<8x10x4xbf16> to vector<8x8x4xbf16>
    %32 = vector.extract_strided_slice %30 {offsets = [0, 1, 0], sizes = [8, 8, 4], strides = [1, 1, 1]} : vector<8x10x4xbf16> to vector<8x8x4xbf16>
    %33 = vector.extract_strided_slice %30 {offsets = [0, 2, 0], sizes = [8, 8, 4], strides = [1, 1, 1]} : vector<8x10x4xbf16> to vector<8x8x4xbf16>
    %34 = tpu.concatenate %31, %32, %33 in 2 : vector<8x8x4xbf16>, vector<8x8x4xbf16>, vector<8x8x4xbf16> -> vector<8x8x12xbf16>
    %35 = vector.shape_cast %34 : vector<8x8x12xbf16> to vector<64x12xbf16>
    %c0_15 = arith.constant 0 : index
    %c1_16 = arith.constant 1 : index
    %c0_17 = arith.constant 0 : index
    %c0_18 = arith.constant 0 : index
    %36 = vector.load %arg6[%c0_15, %c1_16, %c0_17, %c0_18] : memref<3x3x12x4xbf16, #tpu.memory_space<vmem>>, vector<1x1x12x4xbf16>
    %37 = vector.shape_cast %36 : vector<1x1x12x4xbf16> to vector<12x4xbf16>
    %cst_19 = arith.constant dense<0.000000e+00> : vector<64x4xf32>
    %38 = tpu.matmul %35, %37, %cst_19 {dimension_numbers = #tpu.dot_dimension_numbers<[1], [0], [0], [1], [0, 0, 1, 1], [], []>} : vector<64x12xbf16>, vector<12x4xbf16>, vector<64x4xf32> -> vector<64x4xf32>
    %39 = arith.addf %27, %38 : vector<64x4xf32>
    %40 = arith.index_cast %1 : i32 to index
    %c2 = arith.constant 2 : index
    %c0_20 = arith.constant 0 : index
    %c0_21 = arith.constant 0 : index
    %41 = vector.load %arg11[%40, %c2, %c0_20, %c0_21] : memref<3x10x10x4xbf16, #tpu.memory_space<vmem>>, vector<1x8x10x4xbf16>
    %42 = vector.shape_cast %41 : vector<1x8x10x4xbf16> to vector<8x10x4xbf16>
    %43 = vector.extract_strided_slice %42 {offsets = [0, 0, 0], sizes = [8, 8, 4], strides = [1, 1, 1]} : vector<8x10x4xbf16> to vector<8x8x4xbf16>
    %44 = vector.extract_strided_slice %42 {offsets = [0, 1, 0], sizes = [8, 8, 4], strides = [1, 1, 1]} : vector<8x10x4xbf16> to vector<8x8x4xbf16>
    %45 = vector.extract_strided_slice %42 {offsets = [0, 2, 0], sizes = [8, 8, 4], strides = [1, 1, 1]} : vector<8x10x4xbf16> to vector<8x8x4xbf16>
    %46 = tpu.concatenate %43, %44, %45 in 2 : vector<8x8x4xbf16>, vector<8x8x4xbf16>, vector<8x8x4xbf16> -> vector<8x8x12xbf16>
    %47 = vector.shape_cast %46 : vector<8x8x12xbf16> to vector<64x12xbf16>
    %c0_22 = arith.constant 0 : index
    %c2_23 = arith.constant 2 : index
    %c0_24 = arith.constant 0 : index
    %c0_25 = arith.constant 0 : index
    %48 = vector.load %arg6[%c0_22, %c2_23, %c0_24, %c0_25] : memref<3x3x12x4xbf16, #tpu.memory_space<vmem>>, vector<1x1x12x4xbf16>
    %49 = vector.shape_cast %48 : vector<1x1x12x4xbf16> to vector<12x4xbf16>
    %cst_26 = arith.constant dense<0.000000e+00> : vector<64x4xf32>
    %50 = tpu.matmul %47, %49, %cst_26 {dimension_numbers = #tpu.dot_dimension_numbers<[1], [0], [0], [1], [0, 0, 1, 1], [], []>} : vector<64x12xbf16>, vector<12x4xbf16>, vector<64x4xf32> -> vector<64x4xf32>
    %51 = arith.addf %39, %50 : vector<64x4xf32>
    %52 = arith.index_cast %2 : i32 to index
    %c0_27 = arith.constant 0 : index
    %c0_28 = arith.constant 0 : index
    %c0_29 = arith.constant 0 : index
    %53 = vector.load %arg11[%52, %c0_27, %c0_28, %c0_29] : memref<3x10x10x4xbf16, #tpu.memory_space<vmem>>, vector<1x8x10x4xbf16>
    %54 = vector.shape_cast %53 : vector<1x8x10x4xbf16> to vector<8x10x4xbf16>
    %55 = vector.extract_strided_slice %54 {offsets = [0, 0, 0], sizes = [8, 8, 4], strides = [1, 1, 1]} : vector<8x10x4xbf16> to vector<8x8x4xbf16>
    %56 = vector.extract_strided_slice %54 {offsets = [0, 1, 0], sizes = [8, 8, 4], strides = [1, 1, 1]} : vector<8x10x4xbf16> to vector<8x8x4xbf16>
    %57 = vector.extract_strided_slice %54 {offsets = [0, 2, 0], sizes = [8, 8, 4], strides = [1, 1, 1]} : vector<8x10x4xbf16> to vector<8x8x4xbf16>
    %58 = tpu.concatenate %55, %56, %57 in 2 : vector<8x8x4xbf16>, vector<8x8x4xbf16>, vector<8x8x4xbf16> -> vector<8x8x12xbf16>
    %59 = vector.shape_cast %58 : vector<8x8x12xbf16> to vector<64x12xbf16>
    %c1_30 = arith.constant 1 : index
    %c0_31 = arith.constant 0 : index
    %c0_32 = arith.constant 0 : index
    %c0_33 = arith.constant 0 : index
    %60 = vector.load %arg6[%c1_30, %c0_31, %c0_32, %c0_33] : memref<3x3x12x4xbf16, #tpu.memory_space<vmem>>, vector<1x1x12x4xbf16>
    %61 = vector.shape_cast %60 : vector<1x1x12x4xbf16> to vector<12x4xbf16>
    %cst_34 = arith.constant dense<0.000000e+00> : vector<64x4xf32>
    %62 = tpu.matmul %59, %61, %cst_34 {dimension_numbers = #tpu.dot_dimension_numbers<[1], [0], [0], [1], [0, 0, 1, 1], [], []>} : vector<64x12xbf16>, vector<12x4xbf16>, vector<64x4xf32> -> vector<64x4xf32>
    %63 = arith.addf %51, %62 : vector<64x4xf32>
    %64 = arith.index_cast %2 : i32 to index
    %c1_35 = arith.constant 1 : index
    %c0_36 = arith.constant 0 : index
    %c0_37 = arith.constant 0 : index
    %65 = vector.load %arg11[%64, %c1_35, %c0_36, %c0_37] : memref<3x10x10x4xbf16, #tpu.memory_space<vmem>>, vector<1x8x10x4xbf16>
    %66 = vector.shape_cast %65 : vector<1x8x10x4xbf16> to vector<8x10x4xbf16>
    %67 = vector.extract_strided_slice %66 {offsets = [0, 0, 0], sizes = [8, 8, 4], strides = [1, 1, 1]} : vector<8x10x4xbf16> to vector<8x8x4xbf16>
    %68 = vector.extract_strided_slice %66 {offsets = [0, 1, 0], sizes = [8, 8, 4], strides = [1, 1, 1]} : vector<8x10x4xbf16> to vector<8x8x4xbf16>
    %69 = vector.extract_strided_slice %66 {offsets = [0, 2, 0], sizes = [8, 8, 4], strides = [1, 1, 1]} : vector<8x10x4xbf16> to vector<8x8x4xbf16>
    %70 = tpu.concatenate %67, %68, %69 in 2 : vector<8x8x4xbf16>, vector<8x8x4xbf16>, vector<8x8x4xbf16> -> vector<8x8x12xbf16>
    %71 = vector.shape_cast %70 : vector<8x8x12xbf16> to vector<64x12xbf16>
    %c1_38 = arith.constant 1 : index
    %c1_39 = arith.constant 1 : index
    %c0_40 = arith.constant 0 : index
    %c0_41 = arith.constant 0 : index
    %72 = vector.load %arg6[%c1_38, %c1_39, %c0_40, %c0_41] : memref<3x3x12x4xbf16, #tpu.memory_space<vmem>>, vector<1x1x12x4xbf16>
    %73 = vector.shape_cast %72 : vector<1x1x12x4xbf16> to vector<12x4xbf16>
    %cst_42 = arith.constant dense<0.000000e+00> : vector<64x4xf32>
    %74 = tpu.matmul %71, %73, %cst_42 {dimension_numbers = #tpu.dot_dimension_numbers<[1], [0], [0], [1], [0, 0, 1, 1], [], []>} : vector<64x12xbf16>, vector<12x4xbf16>, vector<64x4xf32> -> vector<64x4xf32>
    %75 = arith.addf %63, %74 : vector<64x4xf32>
    %76 = arith.index_cast %2 : i32 to index
    %c2_43 = arith.constant 2 : index
    %c0_44 = arith.constant 0 : index
    %c0_45 = arith.constant 0 : index
    %77 = vector.load %arg11[%76, %c2_43, %c0_44, %c0_45] : memref<3x10x10x4xbf16, #tpu.memory_space<vmem>>, vector<1x8x10x4xbf16>
    %78 = vector.shape_cast %77 : vector<1x8x10x4xbf16> to vector<8x10x4xbf16>
    %79 = vector.extract_strided_slice %78 {offsets = [0, 0, 0], sizes = [8, 8, 4], strides = [1, 1, 1]} : vector<8x10x4xbf16> to vector<8x8x4xbf16>
    %80 = vector.extract_strided_slice %78 {offsets = [0, 1, 0], sizes = [8, 8, 4], strides = [1, 1, 1]} : vector<8x10x4xbf16> to vector<8x8x4xbf16>
    %81 = vector.extract_strided_slice %78 {offsets = [0, 2, 0], sizes = [8, 8, 4], strides = [1, 1, 1]} : vector<8x10x4xbf16> to vector<8x8x4xbf16>
    %82 = tpu.concatenate %79, %80, %81 in 2 : vector<8x8x4xbf16>, vector<8x8x4xbf16>, vector<8x8x4xbf16> -> vector<8x8x12xbf16>
    %83 = vector.shape_cast %82 : vector<8x8x12xbf16> to vector<64x12xbf16>
    %c1_46 = arith.constant 1 : index
    %c2_47 = arith.constant 2 : index
    %c0_48 = arith.constant 0 : index
    %c0_49 = arith.constant 0 : index
    %84 = vector.load %arg6[%c1_46, %c2_47, %c0_48, %c0_49] : memref<3x3x12x4xbf16, #tpu.memory_space<vmem>>, vector<1x1x12x4xbf16>
    %85 = vector.shape_cast %84 : vector<1x1x12x4xbf16> to vector<12x4xbf16>
    %cst_50 = arith.constant dense<0.000000e+00> : vector<64x4xf32>
    %86 = tpu.matmul %83, %85, %cst_50 {dimension_numbers = #tpu.dot_dimension_numbers<[1], [0], [0], [1], [0, 0, 1, 1], [], []>} : vector<64x12xbf16>, vector<12x4xbf16>, vector<64x4xf32> -> vector<64x4xf32>
    %87 = arith.addf %75, %86 : vector<64x4xf32>
    %88 = arith.index_cast %4 : i32 to index
    %c0_51 = arith.constant 0 : index
    %c0_52 = arith.constant 0 : index
    %c0_53 = arith.constant 0 : index
    %89 = vector.load %arg11[%88, %c0_51, %c0_52, %c0_53] : memref<3x10x10x4xbf16, #tpu.memory_space<vmem>>, vector<1x8x10x4xbf16>
    %90 = vector.shape_cast %89 : vector<1x8x10x4xbf16> to vector<8x10x4xbf16>
    %91 = vector.extract_strided_slice %90 {offsets = [0, 0, 0], sizes = [8, 8, 4], strides = [1, 1, 1]} : vector<8x10x4xbf16> to vector<8x8x4xbf16>
    %92 = vector.extract_strided_slice %90 {offsets = [0, 1, 0], sizes = [8, 8, 4], strides = [1, 1, 1]} : vector<8x10x4xbf16> to vector<8x8x4xbf16>
    %93 = vector.extract_strided_slice %90 {offsets = [0, 2, 0], sizes = [8, 8, 4], strides = [1, 1, 1]} : vector<8x10x4xbf16> to vector<8x8x4xbf16>
    %94 = tpu.concatenate %91, %92, %93 in 2 : vector<8x8x4xbf16>, vector<8x8x4xbf16>, vector<8x8x4xbf16> -> vector<8x8x12xbf16>
    %95 = vector.shape_cast %94 : vector<8x8x12xbf16> to vector<64x12xbf16>
    %c2_54 = arith.constant 2 : index
    %c0_55 = arith.constant 0 : index
    %c0_56 = arith.constant 0 : index
    %c0_57 = arith.constant 0 : index
    %96 = vector.load %arg6[%c2_54, %c0_55, %c0_56, %c0_57] : memref<3x3x12x4xbf16, #tpu.memory_space<vmem>>, vector<1x1x12x4xbf16>
    %97 = vector.shape_cast %96 : vector<1x1x12x4xbf16> to vector<12x4xbf16>
    %cst_58 = arith.constant dense<0.000000e+00> : vector<64x4xf32>
    %98 = tpu.matmul %95, %97, %cst_58 {dimension_numbers = #tpu.dot_dimension_numbers<[1], [0], [0], [1], [0, 0, 1, 1], [], []>} : vector<64x12xbf16>, vector<12x4xbf16>, vector<64x4xf32> -> vector<64x4xf32>
    %99 = arith.addf %87, %98 : vector<64x4xf32>
    %100 = arith.index_cast %4 : i32 to index
    %c1_59 = arith.constant 1 : index
    %c0_60 = arith.constant 0 : index
    %c0_61 = arith.constant 0 : index
    %101 = vector.load %arg11[%100, %c1_59, %c0_60, %c0_61] : memref<3x10x10x4xbf16, #tpu.memory_space<vmem>>, vector<1x8x10x4xbf16>
    %102 = vector.shape_cast %101 : vector<1x8x10x4xbf16> to vector<8x10x4xbf16>
    %103 = vector.extract_strided_slice %102 {offsets = [0, 0, 0], sizes = [8, 8, 4], strides = [1, 1, 1]} : vector<8x10x4xbf16> to vector<8x8x4xbf16>
    %104 = vector.extract_strided_slice %102 {offsets = [0, 1, 0], sizes = [8, 8, 4], strides = [1, 1, 1]} : vector<8x10x4xbf16> to vector<8x8x4xbf16>
    %105 = vector.extract_strided_slice %102 {offsets = [0, 2, 0], sizes = [8, 8, 4], strides = [1, 1, 1]} : vector<8x10x4xbf16> to vector<8x8x4xbf16>
    %106 = tpu.concatenate %103, %104, %105 in 2 : vector<8x8x4xbf16>, vector<8x8x4xbf16>, vector<8x8x4xbf16> -> vector<8x8x12xbf16>
    %107 = vector.shape_cast %106 : vector<8x8x12xbf16> to vector<64x12xbf16>
    %c2_62 = arith.constant 2 : index
    %c1_63 = arith.constant 1 : index
    %c0_64 = arith.constant 0 : index
    %c0_65 = arith.constant 0 : index
    %108 = vector.load %arg6[%c2_62, %c1_63, %c0_64, %c0_65] : memref<3x3x12x4xbf16, #tpu.memory_space<vmem>>, vector<1x1x12x4xbf16>
    %109 = vector.shape_cast %108 : vector<1x1x12x4xbf16> to vector<12x4xbf16>
    %cst_66 = arith.constant dense<0.000000e+00> : vector<64x4xf32>
    %110 = tpu.matmul %107, %109, %cst_66 {dimension_numbers = #tpu.dot_dimension_numbers<[1], [0], [0], [1], [0, 0, 1, 1], [], []>} : vector<64x12xbf16>, vector<12x4xbf16>, vector<64x4xf32> -> vector<64x4xf32>
    %111 = arith.addf %99, %110 : vector<64x4xf32>
    %112 = arith.index_cast %4 : i32 to index
    %c2_67 = arith.constant 2 : index
    %c0_68 = arith.constant 0 : index
    %c0_69 = arith.constant 0 : index
    %113 = vector.load %arg11[%112, %c2_67, %c0_68, %c0_69] : memref<3x10x10x4xbf16, #tpu.memory_space<vmem>>, vector<1x8x10x4xbf16>
    %114 = vector.shape_cast %113 : vector<1x8x10x4xbf16> to vector<8x10x4xbf16>
    %115 = vector.extract_strided_slice %114 {offsets = [0, 0, 0], sizes = [8, 8, 4], strides = [1, 1, 1]} : vector<8x10x4xbf16> to vector<8x8x4xbf16>
    %116 = vector.extract_strided_slice %114 {offsets = [0, 1, 0], sizes = [8, 8, 4], strides = [1, 1, 1]} : vector<8x10x4xbf16> to vector<8x8x4xbf16>
    %117 = vector.extract_strided_slice %114 {offsets = [0, 2, 0], sizes = [8, 8, 4], strides = [1, 1, 1]} : vector<8x10x4xbf16> to vector<8x8x4xbf16>
    %118 = tpu.concatenate %115, %116, %117 in 2 : vector<8x8x4xbf16>, vector<8x8x4xbf16>, vector<8x8x4xbf16> -> vector<8x8x12xbf16>
    %119 = vector.shape_cast %118 : vector<8x8x12xbf16> to vector<64x12xbf16>
    %c2_70 = arith.constant 2 : index
    %c2_71 = arith.constant 2 : index
    %c0_72 = arith.constant 0 : index
    %c0_73 = arith.constant 0 : index
    %120 = vector.load %arg6[%c2_70, %c2_71, %c0_72, %c0_73] : memref<3x3x12x4xbf16, #tpu.memory_space<vmem>>, vector<1x1x12x4xbf16>
    %121 = vector.shape_cast %120 : vector<1x1x12x4xbf16> to vector<12x4xbf16>
    %cst_74 = arith.constant dense<0.000000e+00> : vector<64x4xf32>
    %122 = tpu.matmul %119, %121, %cst_74 {dimension_numbers = #tpu.dot_dimension_numbers<[1], [0], [0], [1], [0, 0, 1, 1], [], []>} : vector<64x12xbf16>, vector<12x4xbf16>, vector<64x4xf32> -> vector<64x4xf32>
    %123 = arith.addf %111, %122 : vector<64x4xf32>
    %c0_75 = arith.constant 0 : index
    %c0_76 = arith.constant 0 : index
    %124 = vector.load %arg7[%c0_75, %c0_76] : memref<1x4xf32, #tpu.memory_space<vmem>>, vector<1x4xf32>
    %125 = vector.broadcast %124 : vector<1x4xf32> to vector<64x4xf32>
    %126 = arith.addf %123, %125 : vector<64x4xf32>
    %cst_77 = arith.constant 0.000000e+00 : f32
    %127 = vector.broadcast %cst_77 : f32 to vector<64x4xf32>
    %128 = arith.maximumf %126, %127 : vector<64x4xf32>
    %129 = arith.truncf %128 : vector<64x4xf32> to vector<64x4xbf16>
    %c0_78 = arith.constant 0 : index
    %c0_79 = arith.constant 0 : index
    %130 = vector.load %arg8[%c0_78, %c0_79] : memref<4x16xbf16, #tpu.memory_space<vmem>>, vector<4x16xbf16>
    %cst_80 = arith.constant dense<0.000000e+00> : vector<64x16xf32>
    %131 = tpu.matmul %129, %130, %cst_80 {dimension_numbers = #tpu.dot_dimension_numbers<[1], [0], [0], [1], [0, 0, 1, 1], [], []>} : vector<64x4xbf16>, vector<4x16xbf16>, vector<64x16xf32> -> vector<64x16xf32>
    %c2_i32_81 = arith.constant 2 : i32
    %132 = arith.remsi %arg1, %c2_i32_81 : i32
    %133 = arith.index_cast %132 : i32 to index
    %c0_82 = arith.constant 0 : index
    %c0_83 = arith.constant 0 : index
    %c0_84 = arith.constant 0 : index
    %134 = vector.load %arg12[%133, %c0_82, %c0_83, %c0_84] : memref<2x8x8x16xf32, #tpu.memory_space<vmem>>, vector<1x8x8x16xf32>
    %135 = vector.shape_cast %134 : vector<1x8x8x16xf32> to vector<8x8x16xf32>
    %136 = vector.shape_cast %135 : vector<8x8x16xf32> to vector<64x16xf32>
    %c0_85 = arith.constant 0 : index
    %c0_86 = arith.constant 0 : index
    %137 = vector.load %arg9[%c0_85, %c0_86] : memref<1x16xf32, #tpu.memory_space<vmem>>, vector<1x16xf32>
    %138 = vector.broadcast %137 : vector<1x16xf32> to vector<64x16xf32>
    %139 = arith.addf %131, %138 : vector<64x16xf32>
    %140 = arith.addf %139, %136 : vector<64x16xf32>
    %cst_87 = arith.constant 0.000000e+00 : f32
    %141 = vector.broadcast %cst_87 : f32 to vector<64x16xf32>
    %142 = arith.maximumf %140, %141 : vector<64x16xf32>
    %143 = vector.shape_cast %142 : vector<64x16xf32> to vector<8x8x16xf32>
    %c0_88 = arith.constant 0 : index
    %c0_89 = arith.constant 0 : index
    %c0_90 = arith.constant 0 : index
    %c0_91 = arith.constant 0 : index
    %c0_92 = arith.constant 0 : index
    %144 = vector.load %arg10[%c0_88, %c0_89, %c0_90, %c0_91, %c0_92] : memref<1x1x8x8x16xf32, #tpu.memory_space<vmem>>, vector<1x1x8x8x16xf32>
    %145 = vector.shape_cast %144 : vector<1x1x8x8x16xf32> to vector<8x8x16xf32>
    %146 = vector.shape_cast %143 : vector<8x8x16xf32> to vector<1x1x8x8x16xf32>
    tpu.vector_store %arg10[%c0_88, %c0_89, %c0_90, %c0_91, %c0_92], %146 {strides = array<i32>} : memref<1x1x8x8x16xf32, #tpu.memory_space<vmem>>, vector<1x1x8x8x16xf32>,
    return
  }
  func.func @transform_0(%arg0: i32, %arg1: i32) -> (i32, i32, i32, i32, i32) {
    %c0_i32 = arith.constant 0 : i32
    %c0_i32_0 = arith.constant 0 : i32
    %c0_i32_1 = arith.constant 0 : i32
    %c0_i32_2 = arith.constant 0 : i32
    %c0_i32_3 = arith.constant 0 : i32
    return %arg0, %c0_i32, %c0_i32_0, %c0_i32_1, %c0_i32_2 : i32, i32, i32, i32, i32
  }
  func.func @transform_1(%arg0: i32, %arg1: i32) -> (i32, i32, i32, i32, i32) {
    %c1_i32 = arith.constant 1 : i32
    %0 = arith.addi %arg1, %c1_i32 : i32
    %c7_i32 = arith.constant 7 : i32
    %1 = arith.minsi %0, %c7_i32 : i32
    %c0_i32 = arith.constant 0 : i32
    %c0_i32_0 = arith.constant 0 : i32
    %c0_i32_1 = arith.constant 0 : i32
    %c0_i32_2 = arith.constant 0 : i32
    return %arg0, %1, %c0_i32, %c0_i32_0, %c0_i32_1 : i32, i32, i32, i32, i32
  }
  func.func @transform_2(%arg0: i32, %arg1: i32) -> (i32, i32) {
    %c0_i32 = arith.constant 0 : i32
    %c0_i32_0 = arith.constant 0 : i32
    %c0_i32_1 = arith.constant 0 : i32
    return %c0_i32, %c0_i32_0 : i32, i32
  }
  func.func @transform_3(%arg0: i32, %arg1: i32) -> (i32, i32) {
    %c0_i32 = arith.constant 0 : i32
    %c0_i32_0 = arith.constant 0 : i32
    %c0_i32_1 = arith.constant 0 : i32
    return %c0_i32, %c0_i32_0 : i32, i32
  }
  func.func @transform_4(%arg0: i32, %arg1: i32) -> (i32, i32, i32, i32) {
    %c0_i32 = arith.constant 0 : i32
    %c0_i32_0 = arith.constant 0 : i32
    %c0_i32_1 = arith.constant 0 : i32
    %c0_i32_2 = arith.constant 0 : i32
    %c0_i32_3 = arith.constant 0 : i32
    return %c0_i32, %c0_i32_0, %c0_i32_1, %c0_i32_2 : i32, i32, i32, i32
  }
  func.func @transform_5(%arg0: i32, %arg1: i32) -> (i32, i32) {
    %c0_i32 = arith.constant 0 : i32
    %c0_i32_0 = arith.constant 0 : i32
    %c0_i32_1 = arith.constant 0 : i32
    return %c0_i32, %c0_i32_0 : i32, i32
  }
  func.func @transform_6(%arg0: i32, %arg1: i32) -> (i32, i32) {
    %c0_i32 = arith.constant 0 : i32
    %c0_i32_0 = arith.constant 0 : i32
    %c0_i32_1 = arith.constant 0 : i32
    return %c0_i32, %c0_i32_0 : i32, i32
  }
  func.func @transform_7(%arg0: i32, %arg1: i32) -> (i32, i32) {
    %c0_i32 = arith.constant 0 : i32
    %c0_i32_0 = arith.constant 0 : i32
    %c0_i32_1 = arith.constant 0 : i32
    return %c0_i32, %c0_i32_0 : i32, i32
  }
  func.func @transform_8(%arg0: i32, %arg1: i32) -> (i32, i32, i32, i32, i32) {
    %c0_i32 = arith.constant 0 : i32
    %c0_i32_0 = arith.constant 0 : i32
    %c0_i32_1 = arith.constant 0 : i32
    %c0_i32_2 = arith.constant 0 : i32
    return %arg0, %arg1, %c0_i32, %c0_i32_0, %c0_i32_1 : i32, i32, i32, i32, i32
  }
}

</mosaic_0001>

<llo_original>
// kernel: tpu_custom_call.1
$region0: #{tpu_custom_call.1}
  #allocation0 [shape = 'u32[]', space=smem, size = 0x4, offset = 0x4, fixed_abs, tag = 'smem constant byte address 0x4 - core index']
  #allocation1 [shape = 'u32[144,128]{1,0:T(1,128)}', space=vmem, size = 0x12000, scoped, tag = 'internal scratch']
  #allocation2 [shape = 'bf16[3,10,10,4]{3,2,1,0:T(8,128)(2,1)}', space=vmem, size = 0x1e000, scoped, tag = 'scratch operand']
  #allocation3 [shape = 'f32[2,8,8,16]{3,2,1,0:T(8,128)}', space=vmem, size = 0x10000, scoped, tag = 'scratch operand']
  %s0 = inlined_call_operand.hbm [shape: f32[2,8,8,8,16], index: 0, kind: input, shape index: {}]
  %s1 = inlined_call_operand.hbm [shape: f32[2,8,8,8,16], index: 1, kind: input, shape index: {}]
  %s2 = inlined_call_operand.vmem [shape: bf16[16,4], index: 2, kind: input, shape index: {}]
  %s3 = inlined_call_operand.vmem [shape: f32[1,4], index: 3, kind: input, shape index: {}]
  %s4 = inlined_call_operand.vmem [shape: bf16[3,3,12,4], index: 4, kind: input, shape index: {}]
  %s5 = inlined_call_operand.vmem [shape: f32[1,4], index: 5, kind: input, shape index: {}]
  %s6 = inlined_call_operand.vmem [shape: bf16[4,16], index: 6, kind: input, shape index: {}]
  %s7 = inlined_call_operand.vmem [shape: f32[1,16], index: 7, kind: input, shape index: {}]
  %s8 = inlined_call_operand.hbm [shape: f32[2,8,8,8,16], index: 8, kind: output, shape index: {}]
  %s9 = sld [smem:[#allocation0]]
  $region85: #{tpu_custom_call.1} parent=0
    _
  %s11 = ssub.s32 1, %s9
  %s12 = scalar_select 0, %s11, %s9
  $region1: #{tpu_custom_call.1} parent=0
    #allocation4 [shape = 'u8[65536]{0}', space=vmem, size = 0x10000, scoped, tag = 'input window, operand 0']
    #allocation5 [shape = 's32[2]{0}', space=sflag, size = 0x8, scoped, tag = 'scoped memory for tpu_custom_call.1']
    #allocation6 [shape = 's32[2]{0}', space=sflag, size = 0x8, scoped, tag = 'scoped memory for tpu_custom_call.1']
    #allocation7 [shape = 'u8[65536]{0}', space=vmem, size = 0x10000, scoped, tag = 'input window, operand 1']
    #allocation8 [shape = 's32[2]{0}', space=sflag, size = 0x8, scoped, tag = 'scoped memory for tpu_custom_call.1']
    #allocation9 [shape = 'u8[65536]{0}', space=vmem, size = 0x10000, scoped, tag = 'output window, operand 0']
    %13 = vsyncpa [#allocation5], 0
    %s14 = scalar_lea.sflag [#allocation5], 1
    %15 = vsyncpa %s14, 0
    %16 = vsyncpa [#allocation8], 0
    %s17 = scalar_lea.sflag [#allocation8], 1
    %18 = vsyncpa %s17, 0
    %19 = vsyncpa [#allocation6], 0
    %s20 = scalar_lea.sflag [#allocation6], 1
    %21 = vsyncpa %s20, 0
    loop: start=0, step=1, limit=18
    $region2: #{tpu_custom_call.1} parent=1 // loop_pre_header
      _
    $region3: #{tpu_custom_call.1} parent=1 // loop_header
      %s23 = sphi 0, %s27
      %p24 = scmp.ge.s32.totalorder %s23, 18
      %s30 = sphi 0, %s42
      %s31 = sphi 0, %s38
      %s32 = sphi 0, %s30
      %s33 = sphi 0, %s31
      %s34 = sphi 0, %s32
      %s35 = sphi 0, %s33
      %s45 = sphi 0, %s47
      %s48 = sphi 0, %s45
      %s49 = sphi 0, %s48
      %s65 = sphi 0, %s49
      %s79 = sphi 0, %s81
      %s82 = sphi 0, %s79
      %s83 = sphi 0, %s82
      %s99 = sphi 0, %s83
      %s103 = sphi 0, %s103
      %s105 = sphi 0, %s103
      %s106 = sphi 0, %s105
      %s120 = sphi 0, %s106
      %s124 = sphi 0, %s124
      %s126 = sphi 0, %s124
      %s127 = sphi 0, %s126
      %s141 = sphi 0, %s127
      %s145 = sphi 0, %s145
      %s147 = sphi 0, %s145
      %s148 = sphi 0, %s147
      %s162 = sphi 0, %s148
      %s166 = sphi 0, %s166
      %s168 = sphi 0, %s166
      %s169 = sphi 0, %s168
      %s183 = sphi 0, %s169
      %s187 = sphi 0, %s187
      %s189 = sphi 0, %s187
      %s190 = sphi 0, %s189
      %s204 = sphi 0, %s190
      %s208 = sphi 0, %s208
      %s210 = sphi 0, %s208
      %s211 = sphi 0, %s210
      %s225 = sphi 0, %s211
      %s233 = sphi 0, %s235
      %s236 = sphi 0, %s233
      %s237 = sphi 0, %s236
      %s253 = sphi 0, %s237
    $region4: #{tpu_custom_call.1} parent=1 // loop_header_branch
      %26 = sbr.rel (%p24) target = $region8
    $region5: #{tpu_custom_call.1} parent=1 // loop_body
      %s28 = ssub.s32 %s23, 1
      %s29 = ssub.s32 %s23, 2
      %s36 = sadd.s32 1, %s31
      %p37 = scmp.ge.s32.totalorder %s36, 8
      %s38 = scalar_select %p37, 0, %s36
      %s39 = sadd.s32 1, %s30
      %s40 = scalar_select %p37, %s39, %s30
      %p41 = scmp.ge.s32.totalorder %s40, 2
      %s42 = scalar_select %p41, 0, %s40
      %s43 = ssub.s32 %s30, %s42
      %p44 = scmp.eq.s32.totalorder %s43, 0
      %s46 = sadd.s32 %s45, 1
      %s47 = scalar_select %p44, %s45, %s46
      %p50 = pneg %p44
      %p51 = scmp.eq.s32.totalorder %s23, 15
      %p52 = por %p50, %p51
      %p53 = scmp.ne.s32.totalorder %s45, %s48
      %p54 = scmp.eq.s32.totalorder %s23, 0
      %p55 = por %p53, %p54
      %p56 = scmp.ne.s32.totalorder %s45, %s48
      %p57 = scmp.eq.s32.totalorder %s28, 15
      %p58 = por %p56, %p57
      %p59 = scmp.ne.s32.totalorder %s48, %s49
      %p60 = scmp.eq.s32.totalorder %s28, 0
      %p61 = por %p59, %p60
      %p62 = scmp.ne.s32.totalorder %s48, %s49
      %p63 = scmp.eq.s32.totalorder %s29, 15
      %p64 = por %p62, %p63
      %p66 = scmp.ne.s32.totalorder %s49, %s65
      %p67 = scmp.eq.s32.totalorder %s29, 0
      %p68 = por %p66, %p67
      %s69 = sadd.s32 %s31, 1
      %p70 = scmp.lt.s32.totalorder %s69, 7
      %s71 = scalar_select %p70, %s69, 7
      %s72 = sadd.s32 %s38, 1
      %p73 = scmp.lt.s32.totalorder %s72, 7
      %s74 = scalar_select %p73, %s72, 7
      %s75 = ssub.s32 %s30, %s42
      %s76 = ssub.s32 %s71, %s74
      %s77 = sor.u32 %s75, %s76
      %p78 = scmp.eq.s32.totalorder %s77, 0
      %s80 = sadd.s32 %s79, 1
      %s81 = scalar_select %p78, %s79, %s80
      %p84 = pneg %p78
      %p85 = scmp.eq.s32.totalorder %s23, 15
      %p86 = por %p84, %p85
      %p87 = scmp.ne.s32.totalorder %s79, %s82
      %p88 = scmp.eq.s32.totalorder %s23, 0
      %p89 = por %p87, %p88
      %p90 = scmp.ne.s32.totalorder %s79, %s82
      %p91 = scmp.eq.s32.totalorder %s28, 15
      %p92 = por %p90, %p91
      %p93 = scmp.ne.s32.totalorder %s82, %s83
      %p94 = scmp.eq.s32.totalorder %s28, 0
      %p95 = por %p93, %p94
      %p96 = scmp.ne.s32.totalorder %s82, %s83
      %p97 = scmp.eq.s32.totalorder %s29, 15
      %p98 = por %p96, %p97
      %p100 = scmp.ne.s32.totalorder %s83, %s99
      %p101 = scmp.eq.s32.totalorder %s29, 0
      %p102 = por %p100, %p101
      %s104 = sadd.s32 %s103, 1
      %p107 = scmp.eq.s32.totalorder %s23, 15
      %p108 = scmp.ne.s32.totalorder %s103, %s105
      %p109 = scmp.eq.s32.totalorder %s23, 0
      %p110 = por %p108, %p109
      %p111 = scmp.ne.s32.totalorder %s103, %s105
      %p112 = scmp.eq.s32.totalorder %s28, 15
      %p113 = por %p111, %p112
      %p114 = scmp.ne.s32.totalorder %s105, %s106
      %p115 = scmp.eq.s32.totalorder %s28, 0
      %p116 = por %p114, %p115
      %p117 = scmp.ne.s32.totalorder %s105, %s106
      %p118 = scmp.eq.s32.totalorder %s29, 15
      %p119 = por %p117, %p118
      %p121 = scmp.ne.s32.totalorder %s106, %s120
      %p122 = scmp.eq.s32.totalorder %s29, 0
      %p123 = por %p121, %p122
      %s125 = sadd.s32 %s124, 1
      %p128 = scmp.eq.s32.totalorder %s23, 15
      %p129 = scmp.ne.s32.totalorder %s124, %s126
      %p130 = scmp.eq.s32.totalorder %s23, 0
      %p131 = por %p129, %p130
      %p132 = scmp.ne.s32.totalorder %s124, %s126
      %p133 = scmp.eq.s32.totalorder %s28, 15
      %p134 = por %p132, %p133
      %p135 = scmp.ne.s32.totalorder %s126, %s127
      %p136 = scmp.eq.s32.totalorder %s28, 0
      %p137 = por %p135, %p136
      %p138 = scmp.ne.s32.totalorder %s126, %s127
      %p139 = scmp.eq.s32.totalorder %s29, 15
      %p140 = por %p138, %p139
      %p142 = scmp.ne.s32.totalorder %s127, %s141
      %p143 = scmp.eq.s32.totalorder %s29, 0
      %p144 = por %p142, %p143
      %s146 = sadd.s32 %s145, 1
      %p149 = scmp.eq.s32.totalorder %s23, 15
      %p150 = scmp.ne.s32.totalorder %s145, %s147
      %p151 = scmp.eq.s32.totalorder %s23, 0
      %p152 = por %p150, %p151
      %p153 = scmp.ne.s32.totalorder %s145, %s147
      %p154 = scmp.eq.s32.totalorder %s28, 15
      %p155 = por %p153, %p154
      %p156 = scmp.ne.s32.totalorder %s147, %s148
      %p157 = scmp.eq.s32.totalorder %s28, 0
      %p158 = por %p156, %p157
      %p159 = scmp.ne.s32.totalorder %s147, %s148
      %p160 = scmp.eq.s32.totalorder %s29, 15
      %p161 = por %p159, %p160
      %p163 = scmp.ne.s32.totalorder %s148, %s162
      %p164 = scmp.eq.s32.totalorder %s29, 0
      %p165 = por %p163, %p164
      %s167 = sadd.s32 %s166, 1
      %p170 = scmp.eq.s32.totalorder %s23, 15
      %p171 = scmp.ne.s32.totalorder %s166, %s168
      %p172 = scmp.eq.s32.totalorder %s23, 0
      %p173 = por %p171, %p172
      %p174 = scmp.ne.s32.totalorder %s166, %s168
      %p175 = scmp.eq.s32.totalorder %s28, 15
      %p176 = por %p174, %p175
      %p177 = scmp.ne.s32.totalorder %s168, %s169
      %p178 = scmp.eq.s32.totalorder %s28, 0
      %p179 = por %p177, %p178
      %p180 = scmp.ne.s32.totalorder %s168, %s169
      %p181 = scmp.eq.s32.totalorder %s29, 15
      %p182 = por %p180, %p181
      %p184 = scmp.ne.s32.totalorder %s169, %s183
      %p185 = scmp.eq.s32.totalorder %s29, 0
      %p186 = por %p184, %p185
      %s188 = sadd.s32 %s187, 1
      %p191 = scmp.eq.s32.totalorder %s23, 15
      %p192 = scmp.ne.s32.totalorder %s187, %s189
      %p193 = scmp.eq.s32.totalorder %s23, 0
      %p194 = por %p192, %p193
      %p195 = scmp.ne.s32.totalorder %s187, %s189
      %p196 = scmp.eq.s32.totalorder %s28, 15
      %p197 = por %p195, %p196
      %p198 = scmp.ne.s32.totalorder %s189, %s190
      %p199 = scmp.eq.s32.totalorder %s28, 0
      %p200 = por %p198, %p199
      %p201 = scmp.ne.s32.totalorder %s189, %s190
      %p202 = scmp.eq.s32.totalorder %s29, 15
      %p203 = por %p201, %p202
      %p205 = scmp.ne.s32.totalorder %s190, %s204
      %p206 = scmp.eq.s32.totalorder %s29, 0
      %p207 = por %p205, %p206
      %s209 = sadd.s32 %s208, 1
      %p212 = scmp.eq.s32.totalorder %s23, 15
      %p213 = scmp.ne.s32.totalorder %s208, %s210
      %p214 = scmp.eq.s32.totalorder %s23, 0
      %p215 = por %p213, %p214
      %p216 = scmp.ne.s32.totalorder %s208, %s210
      %p217 = scmp.eq.s32.totalorder %s28, 15
      %p218 = por %p216, %p217
      %p219 = scmp.ne.s32.totalorder %s210, %s211
      %p220 = scmp.eq.s32.totalorder %s28, 0
      %p221 = por %p219, %p220
      %p222 = scmp.ne.s32.totalorder %s210, %s211
      %p223 = scmp.eq.s32.totalorder %s29, 15
      %p224 = por %p222, %p223
      %p226 = scmp.ne.s32.totalorder %s211, %s225
      %p227 = scmp.eq.s32.totalorder %s29, 0
      %p228 = por %p226, %p227
      %s229 = ssub.s32 %s30, %s42
      %s230 = ssub.s32 %s31, %s38
      %s231 = sor.u32 %s229, %s230
      %p232 = scmp.eq.s32.totalorder %s231, 0
      %s234 = sadd.s32 %s233, 1
      %s235 = scalar_select %p232, %s233, %s234
      %p238 = pneg %p232
      %p239 = scmp.eq.s32.totalorder %s23, 15
      %p240 = por %p238, %p239
      %p241 = scmp.ne.s32.totalorder %s233, %s236
      %p242 = scmp.eq.s32.totalorder %s23, 0
      %p243 = por %p241, %p242
      %p244 = scmp.ne.s32.totalorder %s233, %s236
      %p245 = scmp.eq.s32.totalorder %s28, 15
      %p246 = por %p244, %p245
      %p247 = scmp.ne.s32.totalorder %s236, %s237
      %p248 = scmp.eq.s32.totalorder %s28, 0
      %p249 = por %p247, %p248
      %p250 = scmp.ne.s32.totalorder %s236, %s237
      %p251 = scmp.eq.s32.totalorder %s29, 15
      %p252 = por %p250, %p251
      %p254 = scmp.ne.s32.totalorder %s237, %s253
      %p255 = scmp.eq.s32.totalorder %s29, 0
      %p256 = por %p254, %p255
      %p257 = scmp.le.s32.totalorder 1, %s23
      %p258 = scmp.lt.s32.totalorder %s23, 17
      %p259 = pnand %p257, %p258
      %p260 = pneg %p259
      // Predicated region
      $region9: #{tpu_custom_call.1} parent=5 // pred_check
        _
      $region10: #{tpu_custom_call.1} parent=5 // pred_check_branch
        %262 = sbr.rel (%p259) target = $region12
      $region11: #{tpu_custom_call.1} parent=5 // pred_region
        %s263 = ssub.s32 %s23, 1
        // Predicated region
        $region13: #{tpu_custom_call.1} parent=11 // pred_check
          %p264 = pneg %p116
        $region14: #{tpu_custom_call.1} parent=11 // pred_check_branch
          %266 = sbr.rel (%p264) target = $region16
        $region15: #{tpu_custom_call.1} parent=11 // pred_region
          _
        $region16: #{tpu_custom_call.1} parent=11 // pred_fallthru
          _
        // Predicated region
        $region17: #{tpu_custom_call.1} parent=11 // pred_check
          %p267 = pneg %p137
        $region18: #{tpu_custom_call.1} parent=11 // pred_check_branch
          %269 = sbr.rel (%p267) target = $region20
        $region19: #{tpu_custom_call.1} parent=11 // pred_region
          _
        $region20: #{tpu_custom_call.1} parent=11 // pred_fallthru
          _
        // Predicated region
        $region21: #{tpu_custom_call.1} parent=11 // pred_check
          %p270 = pneg %p158
        $region22: #{tpu_custom_call.1} parent=11 // pred_check_branch
          %272 = sbr.rel (%p270) target = $region24
        $region23: #{tpu_custom_call.1} parent=11 // pred_region
          _
        $region24: #{tpu_custom_call.1} parent=11 // pred_fallthru
          _
        // Predicated region
        $region25: #{tpu_custom_call.1} parent=11 // pred_check
          %p273 = pneg %p179
        $region26: #{tpu_custom_call.1} parent=11 // pred_check_branch
          %275 = sbr.rel (%p273) target = $region28
        $region27: #{tpu_custom_call.1} parent=11 // pred_region
          _
        $region28: #{tpu_custom_call.1} parent=11 // pred_fallthru
          _
        // Predicated region
        $region29: #{tpu_custom_call.1} parent=11 // pred_check
          %p276 = pneg %p200
        $region30: #{tpu_custom_call.1} parent=11 // pred_check_branch
          %278 = sbr.rel (%p276) target = $region32
        $region31: #{tpu_custom_call.1} parent=11 // pred_region
          _
        $region32: #{tpu_custom_call.1} parent=11 // pred_fallthru
          _
        // Predicated region
        $region33: #{tpu_custom_call.1} parent=11 // pred_check
          %p279 = pneg %p221
        $region34: #{tpu_custom_call.1} parent=11 // pred_check_branch
          %281 = sbr.rel (%p279) target = $region36
        $region35: #{tpu_custom_call.1} parent=11 // pred_region
          _
        $region36: #{tpu_custom_call.1} parent=11 // pred_fallthru
          _
      $region12: #{tpu_custom_call.1} parent=5 // pred_fallthru
        _
      %p282 = scmp.lt.s32.totalorder %s23, 16
      // Predicated region
      $region37: #{tpu_custom_call.1} parent=5 // pred_check
        %p283 = pneg %p282
      $region38: #{tpu_custom_call.1} parent=5 // pred_check_branch
        %285 = sbr.rel (%p283) target = $region40
      $region39: #{tpu_custom_call.1} parent=5 // pred_region
        // Predicated region
        $region41: #{tpu_custom_call.1} parent=39 // pred_check
          %p286 = pneg %p55
        $region42: #{tpu_custom_call.1} parent=39 // pred_check_branch
          %288 = sbr.rel (%p286) target = $region44
        $region43: #{tpu_custom_call.1} parent=39 // pred_region
          %s289 = sand.u32 %s45, 1
          %s290 = scalar_lea.sflag [#allocation5], %s289
          %s291 = sand.u32 %s45, 1
          %s292 = smul.addr %s291, 64
          %s293 = scalar_lea.vmem [#allocation4], %s292
          %s295 = ssub.s32 1024, 1024
          %296 = vsyncadd %s290, %s295
          %s297 = smul.addr %s30, 64
          %s298 = smul.addr %s297, 128
          %s299 = scalar_lea.hbm %s0, %s298
          %s300 = sshll.u32 %s293, 4
          %s301 = int_to_ptr.vmem [resolvable:$true] %s300
          %306 = dma.hbm_to_vmem [thread:$0]  %s299, 1024, %s301, %s290, 128, 128, 8
        $region44: #{tpu_custom_call.1} parent=39 // pred_fallthru
          _
        // Predicated region
        $region45: #{tpu_custom_call.1} parent=39 // pred_check
          %p307 = pneg %p89
        $region46: #{tpu_custom_call.1} parent=39 // pred_check_branch
          %309 = sbr.rel (%p307) target = $region48
        $region47: #{tpu_custom_call.1} parent=39 // pred_region
          %s310 = sand.u32 %s79, 1
          %s311 = scalar_lea.sflag [#allocation8], %s310
          %s312 = sand.u32 %s79, 1
          %s313 = smul.addr %s312, 64
          %s314 = scalar_lea.vmem [#allocation7], %s313
          %s315 = sadd.s32 %s31, 1
          %p316 = scmp.lt.s32.totalorder %s315, 7
          %s317 = scalar_select %p316, %s315, 7
          %s319 = ssub.s32 1024, 1024
          %320 = vsyncadd %s311, %s319
          %s321 = smul.addr %s317, 8
          %s322 = smul.addr %s30, 64
          %s323 = sadd.s32 %s321, %s322
          %s324 = smul.addr %s323, 128
          %s325 = scalar_lea.hbm %s1, %s324
          %s326 = sshll.u32 %s314, 4
          %s327 = int_to_ptr.vmem [resolvable:$true] %s326
          %332 = dma.hbm_to_vmem [thread:$0]  %s325, 1024, %s327, %s311, 128, 128, 8
        $region48: #{tpu_custom_call.1} parent=39 // pred_fallthru
          _
      $region40: #{tpu_custom_call.1} parent=5 // pred_fallthru
        _
      %p333 = scmp.le.s32.totalorder 1, %s23
      %p334 = scmp.lt.s32.totalorder %s23, 17
      %p335 = pnand %p333, %p334
      %p336 = pneg %p335
      // Predicated region
      $region49: #{tpu_custom_call.1} parent=5 // pred_check
        _
      $region50: #{tpu_custom_call.1} parent=5 // pred_check_branch
        %338 = sbr.rel (%p335) target = $region52
      $region51: #{tpu_custom_call.1} parent=5 // pred_region
        %s339 = ssub.s32 %s23, 1
        %s340 = sand.u32 %s48, 1
        %s341 = scalar_lea.sflag [#allocation5], %s340
        %s342 = sand.u32 %s48, 1
        %s343 = smul.addr %s342, 64
        %s344 = scalar_lea.vmem [#allocation4], %s343
        // Predicated region
        $region53: #{tpu_custom_call.1} parent=51 // pred_check
          %p345 = pneg %p61
        $region54: #{tpu_custom_call.1} parent=51 // pred_check_branch
          %347 = sbr.rel (%p345) target = $region56
        $region55: #{tpu_custom_call.1} parent=51 // pred_region
          %348 = dma.done %s341, 1024
        $region56: #{tpu_custom_call.1} parent=51 // pred_fallthru
          _
        %s349 = sand.u32 %s82, 1
        %s350 = scalar_lea.sflag [#allocation8], %s349
        %s351 = sand.u32 %s82, 1
        %s352 = smul.addr %s351, 64
        %s353 = scalar_lea.vmem [#allocation7], %s352
        // Predicated region
        $region57: #{tpu_custom_call.1} parent=51 // pred_check
          %p354 = pneg %p95
        $region58: #{tpu_custom_call.1} parent=51 // pred_check_branch
          %356 = sbr.rel (%p354) target = $region60
        $region59: #{tpu_custom_call.1} parent=51 // pred_region
          %357 = dma.done %s350, 1024
        $region60: #{tpu_custom_call.1} parent=51 // pred_fallthru
          _
        %s358 = sand.u32 %s48, 1
        %s359 = scalar_lea.sflag [#allocation5], %s358
        %s360 = sand.u32 %s48, 1
        %s361 = smul.addr %s360, 64
        %s362 = scalar_lea.vmem [#allocation4], %s361
        %p363 = pneg %p61
        %p364 = pneg %p58
        %s365 = sand.u32 %s82, 1
        %s366 = scalar_lea.sflag [#allocation8], %s365
        %s367 = sand.u32 %s82, 1
        %s368 = smul.addr %s367, 64
        %s369 = scalar_lea.vmem [#allocation7], %s368
        %p370 = pneg %p95
        %p371 = pneg %p92
        %p372 = pneg %p116
        %p373 = pneg %p113
        %p374 = pneg %p137
        %p375 = pneg %p134
        %p376 = pneg %p158
        %p377 = pneg %p155
        %p378 = pneg %p179
        %p379 = pneg %p176
        %p380 = pneg %p200
        %p381 = pneg %p197
        %p382 = pneg %p221
        %p383 = pneg %p218
        %p384 = pneg %p249
        %p385 = pneg %p246
        %s386 = sand.u32 %s236, 1
        %s387 = scalar_lea.sflag [#allocation6], %s386
        %s388 = sand.u32 %s236, 1
        %s389 = smul.addr %s388, 64
        %s390 = scalar_lea.vmem [#allocation9], %s389
        %s391 = sadd.s32 %s33, 1
        %p392 = scmp.lt.s32.totalorder %s391, 7
        %s393 = scalar_select %p392, %s391, 7
        %s395 = sadd.s32 %s33, 2
        %p396 = scmp.lt.s32.totalorder %s395, 0
        %s397 = ssub.s32 0, %s395
        %s398 = scalar_select %p396, %s397, %s395
        %s399 = sdiv.u32.pop %s398, 3
        %s400 = srem.u32.pop %s398, 3
        %s401 = ssub.s32 0, %s400
        %s402 = scalar_select %p396, %s401, %s400
        %p403 = scmp.lt.s32.totalorder %s33, 0
        %s404 = ssub.s32 0, %s33
        %s405 = scalar_select %p403, %s404, %s33
        %s406 = sdiv.u32.pop %s405, 3
        %s407 = srem.u32.pop %s405, 3
        %s408 = ssub.s32 0, %s407
        %s409 = scalar_select %p403, %s408, %s407
        %s410 = sadd.s32 %s33, 1
        %p411 = scmp.lt.s32.totalorder %s410, 0
        %s412 = ssub.s32 0, %s410
        %s413 = scalar_select %p411, %s412, %s410
        %s414 = sdiv.u32.pop %s413, 3
        %s415 = srem.u32.pop %s413, 3
        %s416 = ssub.s32 0, %s415
        %s417 = scalar_select %p411, %s416, %s415
        %p418 = scmp.eq.s32.totalorder %s33, 0
        // Predicated region
        $region61: #{tpu_custom_call.1} parent=51 // pred_check
          %p419 = pneg %p418
        $region62: #{tpu_custom_call.1} parent=51 // pred_check_branch
          %421 = sbr.rel (%p419) target = $region64
        $region63: #{tpu_custom_call.1} parent=51 // pred_region
          %vm422 = vcmask 27648
          %423 = vst.msk [vmem:[#allocation2] sm:$0xf] %vm422, 0
          %vm424 = vcmask 24576
          %425 = vst.msk [vmem:[#allocation2 + $0x4] sm:$0x1] %vm424, 0
          %426 = vst.msk [vmem:[#allocation2 + $0x8] sm:$0xf] %vm422, 0
          %427 = vst.msk [vmem:[#allocation2 + $0xc] sm:$0x1] %vm424, 0
          %428 = vst.msk [vmem:[#allocation2 + $0x10] sm:$0xf] %vm422, 0
          %429 = vst.msk [vmem:[#allocation2 + $0x14] sm:$0x1] %vm424, 0
          %430 = vst.msk [vmem:[#allocation2 + $0x18] sm:$0xf] %vm422, 0
          %431 = vst.msk [vmem:[#allocation2 + $0x1c] sm:$0x1] %vm424, 0
          %432 = vst.msk [vmem:[#allocation2 + $0x20] sm:$0xf] %vm422, 0
          %433 = vst.msk [vmem:[#allocation2 + $0x24] sm:$0x1] %vm424, 0
          %434 = vst.msk [vmem:[#allocation2 + $0x28] sm:$0xf] %vm422, 0
          %435 = vst.msk [vmem:[#allocation2 + $0x2c] sm:$0x1] %vm424, 0
          %436 = vst.msk [vmem:[#allocation2 + $0x30] sm:$0xf] %vm422, 0
          %437 = vst.msk [vmem:[#allocation2 + $0x34] sm:$0x1] %vm424, 0
          %438 = vst.msk [vmem:[#allocation2 + $0x38] sm:$0xf] %vm422, 0
          %439 = vst.msk [vmem:[#allocation2 + $0x3c] sm:$0x1] %vm424, 0
          %440 = vst.msk [vmem:[#allocation2 + $0x40] sm:$0xf] %vm422, 0
          %441 = vst.msk [vmem:[#allocation2 + $0x44] sm:$0x1] %vm424, 0
          %442 = vst.msk [vmem:[#allocation2 + $0x48] sm:$0xf] %vm422, 0
          %443 = vst.msk [vmem:[#allocation2 + $0x4c] sm:$0x1] %vm424, 0
          %444 = vst.msk [vmem:[#allocation2 + $0x50] sm:$0xf] %vm422, 0
          %445 = vst.msk [vmem:[#allocation2 + $0x54] sm:$0x1] %vm424, 0
          %446 = vst.msk [vmem:[#allocation2 + $0x58] sm:$0xf] %vm422, 0
          %447 = vst.msk [vmem:[#allocation2 + $0x5c] sm:$0x1] %vm424, 0
          %448 = vst.msk [vmem:[#allocation2 + $0x60] sm:$0xf] %vm422, 0
          %449 = vst.msk [vmem:[#allocation2 + $0x64] sm:$0x1] %vm424, 0
          %450 = vst.msk [vmem:[#allocation2 + $0x68] sm:$0xf] %vm422, 0
          %451 = vst.msk [vmem:[#allocation2 + $0x6c] sm:$0x1] %vm424, 0
          %452 = vst.msk [vmem:[#allocation2 + $0x70] sm:$0xf] %vm422, 0
          %453 = vst.msk [vmem:[#allocation2 + $0x74] sm:$0x1] %vm424, 0
          %454 = vst.msk [vmem:[#allocation2 + $0x78] sm:$0xf] %vm422, 0
          %455 = vst.msk [vmem:[#allocation2 + $0x7c] sm:$0x1] %vm424, 0
          %456 = vst.msk [vmem:[#allocation2 + $0x80] sm:$0xf] %vm422, 0
          %457 = vst.msk [vmem:[#allocation2 + $0x84] sm:$0x1] %vm424, 0
          %458 = vst.msk [vmem:[#allocation2 + $0x88] sm:$0xf] %vm422, 0
          %459 = vst.msk [vmem:[#allocation2 + $0x8c] sm:$0x1] %vm424, 0
          %460 = vst.msk [vmem:[#allocation2 + $0x90] sm:$0xf] %vm422, 0
          %461 = vst.msk [vmem:[#allocation2 + $0x94] sm:$0x1] %vm424, 0
          %462 = vst.msk [vmem:[#allocation2 + $0x98] sm:$0xf] %vm422, 0
          %463 = vst.msk [vmem:[#allocation2 + $0x9c] sm:$0x1] %vm424, 0
          %464 = vst.msk [vmem:[#allocation2 + $0xa0] sm:$0xf] %vm422, 0
          %465 = vst.msk [vmem:[#allocation2 + $0xa4] sm:$0x1] %vm424, 0
          %466 = vst.msk [vmem:[#allocation2 + $0xa8] sm:$0xf] %vm422, 0
          %467 = vst.msk [vmem:[#allocation2 + $0xac] sm:$0x1] %vm424, 0
          %468 = vst.msk [vmem:[#allocation2 + $0xb0] sm:$0xf] %vm422, 0
          %469 = vst.msk [vmem:[#allocation2 + $0xb4] sm:$0x1] %vm424, 0
          %470 = vst.msk [vmem:[#allocation2 + $0xb8] sm:$0xf] %vm422, 0
          %471 = vst.msk [vmem:[#allocation2 + $0xbc] sm:$0x1] %vm424, 0
          %472 = vst.msk [vmem:[#allocation2 + $0xc0] sm:$0xf] %vm422, 0
          %473 = vst.msk [vmem:[#allocation2 + $0xc4] sm:$0x1] %vm424, 0
          %474 = vst.msk [vmem:[#allocation2 + $0xc8] sm:$0xf] %vm422, 0
          %475 = vst.msk [vmem:[#allocation2 + $0xcc] sm:$0x1] %vm424, 0
          %476 = vst.msk [vmem:[#allocation2 + $0xd0] sm:$0xf] %vm422, 0
          %477 = vst.msk [vmem:[#allocation2 + $0xd4] sm:$0x1] %vm424, 0
          %478 = vst.msk [vmem:[#allocation2 + $0xd8] sm:$0xf] %vm422, 0
          %479 = vst.msk [vmem:[#allocation2 + $0xdc] sm:$0x1] %vm424, 0
          %480 = vst.msk [vmem:[#allocation2 + $0xe0] sm:$0xf] %vm422, 0
          %481 = vst.msk [vmem:[#allocation2 + $0xe4] sm:$0x1] %vm424, 0
          %482 = vst.msk [vmem:[#allocation2 + $0xe8] sm:$0xf] %vm422, 0
          %483 = vst.msk [vmem:[#allocation2 + $0xec] sm:$0x1] %vm424, 0
          %v484 = vld [vmem:[%s344] sm:$0xff]
          %v485 = vld [vmem:[%s344 + $0x8] sm:$0xff]
          %v486 = vld [vmem:[%s344 + $0x10] sm:$0xff]
          %v487 = vld [vmem:[%s344 + $0x18] sm:$0xff]
          %v488 = vld [vmem:[%s344 + $0x20] sm:$0xff]
          %v489 = vld [vmem:[%s344 + $0x28] sm:$0xff]
          %v490 = vld [vmem:[%s344 + $0x30] sm:$0xff]
          %v491 = vld [vmem:[%s344 + $0x38] sm:$0xff]
          %v492 = vpack.c.bf16 %v485, %v484
          %v493 = vpack.c.bf16 %v487, %v486
          %v494 = vpack.c.bf16 %v489, %v488
          %v495 = vpack.c.bf16 %v491, %v490
          %v496 = vld [vmem:[%s2] sm:$0xf]
          %v497 = vld [vmem:[%s2 + $0x4] sm:$0xf]
          %v498 = vld [vmem:[%s3] sm:$0x1]
          %v500 = vlaneseq
          %v501 = vshrl.u32 %v500, 7
          %v502 = vsub.s32 0, %v501
          %v503 = vrot.slane %v498, %v502
          %v507 = vunpack.c.l.b16 %v496
          %v508 = vunpack.c.l.b16 %v497
          %v509 = vpack.c.b16 %v508, %v507
          %vm511 = vcmask 130048
          %v513 = vsel %vm511, %v492, 0
          %v516 = vsel %vm511, %v493, 0
          %v519 = vsel %vm511, %v494, 0
          %v522 = vsel %vm511, %v495, 0
          %524 = vmatprep.subr.bf16.mxu0 0
          %525 = vmatpush1.bf16.msra.mxu0 %v509
          %526 = vmatprep.subr.bf16.mxu0 0
          %527 = vmatpush1.bf16.msra.mxu0 0
          %528 = vmatprep.subr.bf16.mxu0 0
          %529 = vmatpush1.bf16.msra.mxu0 0
          %530 = vmatprep.subr.bf16.mxu0 0
          %531 = vmatpush1.bf16.msra.mxu0 0
          %532 = vmatprep.subr.bf16.mxu0 0
          %533 = vmatpush1.bf16.msra.mxu0 0
          %534 = vmatprep.subr.bf16.mxu0 0
          %535 = vmatpush1.bf16.msra.mxu0 0
          %536 = vmatprep.subr.bf16.mxu0 0
          %537 = vmatpush1.bf16.msra.mxu0 0
          %538 = vmatprep.subr.bf16.mxu0 0
          %539 = vmatpush1.bf16.msra.mxu0 0
          %540 = vmatprep.subr.bf16.mxu0 0
          %541 = vmatpush1.bf16.msra.mxu0 0
          %542 = vmatprep.subr.bf16.mxu0 0
          %543 = vmatpush1.bf16.msra.mxu0 0
          %544 = vmatprep.subr.bf16.mxu0 0
          %545 = vmatpush1.bf16.msra.mxu0 0
          %546 = vmatprep.subr.bf16.mxu0 0
          %547 = vmatpush1.bf16.msra.mxu0 0
          %548 = vmatprep.subr.bf16.mxu0 0
          %549 = vmatpush1.bf16.msra.mxu0 0
          %550 = vmatprep.subr.bf16.mxu0 0
          %551 = vmatpush1.bf16.msra.mxu0 0
          %552 = vmatprep.subr.bf16.mxu0 0
          %553 = vmatpush1.bf16.msra.mxu0 0
          %554 = vmatprep.subr.bf16.mxu0 0
          %555 = vmatpush1.bf16.msra.mxu0 0
          %556 = vmatprep.mubr.bf16.mxu0 0
          %557 = vmatmul.mubr.bf16.gmra.mrb[0].mxu0 %v513
          %v558 = vpop.f32.mrb[0].mxu0
          %v559 = vadd.f32 %v503, %v558
          %v560 = vpop.f32.mrb[0].mxu0
          %v561 = vpop.f32.mrb[0].mxu0
          %v562 = vadd.f32 %v503, %v561
          %v563 = vpop.f32.mrb[0].mxu0
          %564 = vmatprep.mubr.bf16.mxu0 0
          %565 = vmatmul.mubr.bf16.gmra.mrb[0].mxu0 %v516
          %v566 = vpop.f32.mrb[0].mxu0
          %v567 = vadd.f32 %v503, %v566
          %v568 = vpop.f32.mrb[0].mxu0
          %v569 = vpop.f32.mrb[0].mxu0
          %v570 = vadd.f32 %v503, %v569
          %v571 = vpop.f32.mrb[0].mxu0
          %572 = vmatprep.mubr.bf16.mxu0 0
          %573 = vmatmul.mubr.bf16.gmra.mrb[0].mxu0 %v519
          %v574 = vpop.f32.mrb[0].mxu0
          %v575 = vadd.f32 %v503, %v574
          %v576 = vpop.f32.mrb[0].mxu0
          %v577 = vpop.f32.mrb[0].mxu0
          %v578 = vadd.f32 %v503, %v577
          %v579 = vpop.f32.mrb[0].mxu0
          %580 = vmatprep.mubr.bf16.mxu0 0
          %581 = vmatmul.mubr.bf16.gmra.mrb[0].mxu0 %v522
          %v582 = vpop.f32.mrb[0].mxu0
          %v583 = vadd.f32 %v503, %v582
          %v584 = vpop.f32.mrb[0].mxu0
          %v585 = vpop.f32.mrb[0].mxu0
          %v586 = vadd.f32 %v503, %v585
          %v587 = vpop.f32.mrb[0].mxu0
          %588 = vdwg.mxu0
          %v589 = vmax.f32 %v559, 0.0
          %v590 = vmax.f32 %v562, 0.0
          %v591 = vmax.f32 %v567, 0.0
          %v592 = vmax.f32 %v570, 0.0
          %v593 = vmax.f32 %v575, 0.0
          %v594 = vmax.f32 %v578, 0.0
          %v595 = vmax.f32 %v583, 0.0
          %v596 = vmax.f32 %v586, 0.0
          %v597 = vpack.c.bf16 %v589, %v589
          %v598 = vpack.c.bf16 %v590, %v590
          %v599 = vpack.c.bf16 %v591, %v591
          %v600 = vpack.c.bf16 %v592, %v592
          %v601 = vpack.c.bf16 %v593, %v593
          %v602 = vpack.c.bf16 %v594, %v594
          %v603 = vpack.c.bf16 %v595, %v595
          %v604 = vpack.c.bf16 %v596, %v596
          %v613 = vunpack.c.l.b16 %v597
          %v614 = vunpack.c.l.b16 %v598
          %v615 = vunpack.c.l.b16 %v599
          %v616 = vunpack.c.l.b16 %v600
          %v617 = vunpack.c.l.b16 %v601
          %v618 = vunpack.c.l.b16 %v602
          %v619 = vunpack.c.l.b16 %v603
          %v620 = vunpack.c.l.b16 %v604
          %v621 = vpack.c.b16 %v613, %v613
          %v622 = vpack.c.b16 %v614, %v614
          %v623 = vpack.c.b16 %v615, %v615
          %v624 = vpack.c.b16 %v616, %v616
          %v625 = vpack.c.b16 %v617, %v617
          %v626 = vpack.c.b16 %v618, %v618
          %v627 = vpack.c.b16 %v619, %v619
          %v628 = vpack.c.b16 %v620, %v620
          %v630 = vshrl.u32 %v621, 16
          %v632 = vrot.slane %v630, 7
          %v633 = vshll.u32 %v621, 16
          %v635 = vor.u32 %v632, %v633
          %v636 = vrot.slane %v632, 4
          %v638 = vshrl.u32 %v622, 16
          %v640 = vrot.slane %v638, 7
          %v641 = vshll.u32 %v622, 16
          %v643 = vor.u32 %v640, %v641
          %v644 = vrot.slane %v640, 4
          %v646 = vshrl.u32 %v623, 16
          %v648 = vrot.slane %v646, 7
          %v649 = vshll.u32 %v623, 16
          %v651 = vor.u32 %v648, %v649
          %v652 = vrot.slane %v648, 4
          %v654 = vshrl.u32 %v624, 16
          %v656 = vrot.slane %v654, 7
          %v657 = vshll.u32 %v624, 16
          %v659 = vor.u32 %v656, %v657
          %v660 = vrot.slane %v656, 4
          %v662 = vshrl.u32 %v625, 16
          %v664 = vrot.slane %v662, 7
          %v665 = vshll.u32 %v625, 16
          %v667 = vor.u32 %v664, %v665
          %v668 = vrot.slane %v664, 4
          %v670 = vshrl.u32 %v626, 16
          %v672 = vrot.slane %v670, 7
          %v673 = vshll.u32 %v626, 16
          %v675 = vor.u32 %v672, %v673
          %v676 = vrot.slane %v672, 4
          %v678 = vshrl.u32 %v627, 16
          %v680 = vrot.slane %v678, 7
          %v681 = vshll.u32 %v627, 16
          %v683 = vor.u32 %v680, %v681
          %v684 = vrot.slane %v680, 4
          %v686 = vshrl.u32 %v628, 16
          %v688 = vrot.slane %v686, 7
          %v689 = vshll.u32 %v628, 16
          %v691 = vor.u32 %v688, %v689
          %v692 = vrot.slane %v688, 4
          %s709 = scalar_lea.vmem [#allocation2], 8
          %vm710 = vcmask 27648
          %vm711 = vsmask.f32 7938
          %vm712 = vmand %vm710, %vm711
          %v713 = vld [vmem:[%s709] sm:$0xf]
          %v714 = vsel %vm712, %v635, %v713
          %715 = vst [vmem:[%s709] sm:$0xf] %v714
          %vm716 = vcmask 24576
          %vm717 = vsmask.f32 256
          %vm718 = vmand %vm716, %vm717
          %v719 = vld [vmem:[%s709 + $0x4] sm:$0x1]
          %v720 = vsel %vm718, %v636, %v719
          %721 = vst [vmem:[%s709 + $0x4] sm:$0x1] %v720
          %v722 = vld [vmem:[%s709 + $0x8] sm:$0xf]
          %v723 = vsel %vm712, %v643, %v722
          %724 = vst [vmem:[%s709 + $0x8] sm:$0xf] %v723
          %v725 = vld [vmem:[%s709 + $0xc] sm:$0x1]
          %v726 = vsel %vm718, %v644, %v725
          %727 = vst [vmem:[%s709 + $0xc] sm:$0x1] %v726
          %v728 = vld [vmem:[%s709 + $0x10] sm:$0xf]
          %v729 = vsel %vm712, %v651, %v728
          %730 = vst [vmem:[%s709 + $0x10] sm:$0xf] %v729
          %v731 = vld [vmem:[%s709 + $0x14] sm:$0x1]
          %v732 = vsel %vm718, %v652, %v731
          %733 = vst [vmem:[%s709 + $0x14] sm:$0x1] %v732
          %v734 = vld [vmem:[%s709 + $0x18] sm:$0xf]
          %v735 = vsel %vm712, %v659, %v734
          %736 = vst [vmem:[%s709 + $0x18] sm:$0xf] %v735
          %v737 = vld [vmem:[%s709 + $0x1c] sm:$0x1]
          %v738 = vsel %vm718, %v660, %v737
          %739 = vst [vmem:[%s709 + $0x1c] sm:$0x1] %v738
          %v740 = vld [vmem:[%s709 + $0x20] sm:$0xf]
          %v741 = vsel %vm712, %v667, %v740
          %742 = vst [vmem:[%s709 + $0x20] sm:$0xf] %v741
          %v743 = vld [vmem:[%s709 + $0x24] sm:$0x1]
          %v744 = vsel %vm718, %v668, %v743
          %745 = vst [vmem:[%s709 + $0x24] sm:$0x1] %v744
          %v746 = vld [vmem:[%s709 + $0x28] sm:$0xf]
          %v747 = vsel %vm712, %v675, %v746
          %748 = vst [vmem:[%s709 + $0x28] sm:$0xf] %v747
          %v749 = vld [vmem:[%s709 + $0x2c] sm:$0x1]
          %v750 = vsel %vm718, %v676, %v749
          %751 = vst [vmem:[%s709 + $0x2c] sm:$0x1] %v750
          %v752 = vld [vmem:[%s709 + $0x30] sm:$0xf]
          %v753 = vsel %vm712, %v683, %v752
          %754 = vst [vmem:[%s709 + $0x30] sm:$0xf] %v753
          %v755 = vld [vmem:[%s709 + $0x34] sm:$0x1]
          %v756 = vsel %vm718, %v684, %v755
          %757 = vst [vmem:[%s709 + $0x34] sm:$0x1] %v756
          %v758 = vld [vmem:[%s709 + $0x38] sm:$0xf]
          %v759 = vsel %vm712, %v691, %v758
          %760 = vst [vmem:[%s709 + $0x38] sm:$0xf] %v759
          %v761 = vld [vmem:[%s709 + $0x3c] sm:$0x1]
          %v762 = vsel %vm718, %v692, %v761
          %763 = vst [vmem:[%s709 + $0x3c] sm:$0x1] %v762
          %764 = vst.msk [vmem:[#allocation3] sm:$0xff] %vm511, %v484
          %765 = vst.msk [vmem:[#allocation3 + $0x8] sm:$0xff] %vm511, %v485
          %766 = vst.msk [vmem:[#allocation3 + $0x10] sm:$0xff] %vm511, %v486
          %767 = vst.msk [vmem:[#allocation3 + $0x18] sm:$0xff] %vm511, %v487
          %768 = vst.msk [vmem:[#allocation3 + $0x20] sm:$0xff] %vm511, %v488
          %769 = vst.msk [vmem:[#allocation3 + $0x28] sm:$0xff] %vm511, %v489
          %770 = vst.msk [vmem:[#allocation3 + $0x30] sm:$0xff] %vm511, %v490
          %771 = vst.msk [vmem:[#allocation3 + $0x38] sm:$0xff] %vm511, %v491
        $region64: #{tpu_custom_call.1} parent=51 // pred_fallthru
          _
        %p772 = scmp.lt.s32.totalorder %s410, 8
        // Predicated region
        $region65: #{tpu_custom_call.1} parent=51 // pred_check
          %p773 = pneg %p772
        $region66: #{tpu_custom_call.1} parent=51 // pred_check_branch
          %775 = sbr.rel (%p773) target = $region68
        $region67: #{tpu_custom_call.1} parent=51 // pred_region
          %v776 = vld [vmem:[%s353] sm:$0xff]
          %v777 = vld [vmem:[%s353 + $0x8] sm:$0xff]
          %v778 = vld [vmem:[%s353 + $0x10] sm:$0xff]
          %v779 = vld [vmem:[%s353 + $0x18] sm:$0xff]
          %v780 = vld [vmem:[%s353 + $0x20] sm:$0xff]
          %v781 = vld [vmem:[%s353 + $0x28] sm:$0xff]
          %v782 = vld [vmem:[%s353 + $0x30] sm:$0xff]
          %v783 = vld [vmem:[%s353 + $0x38] sm:$0xff]
          %v784 = vpack.c.bf16 %v777, %v776
          %v785 = vpack.c.bf16 %v779, %v778
          %v786 = vpack.c.bf16 %v781, %v780
          %v787 = vpack.c.bf16 %v783, %v782
          %v788 = vld [vmem:[%s2] sm:$0xf]
          %v789 = vld [vmem:[%s2 + $0x4] sm:$0xf]
          %v790 = vld [vmem:[%s3] sm:$0x1]
          %v792 = vlaneseq
          %v793 = vshrl.u32 %v792, 7
          %v794 = vsub.s32 0, %v793
          %v795 = vrot.slane %v790, %v794
          %v799 = vunpack.c.l.b16 %v788
          %v800 = vunpack.c.l.b16 %v789
          %v801 = vpack.c.b16 %v800, %v799
          %vm803 = vcmask 130048
          %v805 = vsel %vm803, %v784, 0
          %v808 = vsel %vm803, %v785, 0
          %v811 = vsel %vm803, %v786, 0
          %v814 = vsel %vm803, %v787, 0
          %816 = vmatprep.subr.bf16.mxu0 0
          %817 = vmatpush1.bf16.msra.mxu0 %v801
          %818 = vmatprep.subr.bf16.mxu0 0
          %819 = vmatpush1.bf16.msra.mxu0 0
          %820 = vmatprep.subr.bf16.mxu0 0
          %821 = vmatpush1.bf16.msra.mxu0 0
          %822 = vmatprep.subr.bf16.mxu0 0
          %823 = vmatpush1.bf16.msra.mxu0 0
          %824 = vmatprep.subr.bf16.mxu0 0
          %825 = vmatpush1.bf16.msra.mxu0 0
          %826 = vmatprep.subr.bf16.mxu0 0
          %827 = vmatpush1.bf16.msra.mxu0 0
          %828 = vmatprep.subr.bf16.mxu0 0
          %829 = vmatpush1.bf16.msra.mxu0 0
          %830 = vmatprep.subr.bf16.mxu0 0
          %831 = vmatpush1.bf16.msra.mxu0 0
          %832 = vmatprep.subr.bf16.mxu0 0
          %833 = vmatpush1.bf16.msra.mxu0 0
          %834 = vmatprep.subr.bf16.mxu0 0
          %835 = vmatpush1.bf16.msra.mxu0 0
          %836 = vmatprep.subr.bf16.mxu0 0
          %837 = vmatpush1.bf16.msra.mxu0 0
          %838 = vmatprep.subr.bf16.mxu0 0
          %839 = vmatpush1.bf16.msra.mxu0 0
          %840 = vmatprep.subr.bf16.mxu0 0
          %841 = vmatpush1.bf16.msra.mxu0 0
          %842 = vmatprep.subr.bf16.mxu0 0
          %843 = vmatpush1.bf16.msra.mxu0 0
          %844 = vmatprep.subr.bf16.mxu0 0
          %845 = vmatpush1.bf16.msra.mxu0 0
          %846 = vmatprep.subr.bf16.mxu0 0
          %847 = vmatpush1.bf16.msra.mxu0 0
          %848 = vmatprep.mubr.bf16.mxu0 0
          %849 = vmatmul.mubr.bf16.gmra.mrb[0].mxu0 %v805
          %v850 = vpop.f32.mrb[0].mxu0
          %v851 = vadd.f32 %v795, %v850
          %v852 = vpop.f32.mrb[0].mxu0
          %v853 = vpop.f32.mrb[0].mxu0
          %v854 = vadd.f32 %v795, %v853
          %v855 = vpop.f32.mrb[0].mxu0
          %856 = vmatprep.mubr.bf16.mxu0 0
          %857 = vmatmul.mubr.bf16.gmra.mrb[0].mxu0 %v808
          %v858 = vpop.f32.mrb[0].mxu0
          %v859 = vadd.f32 %v795, %v858
          %v860 = vpop.f32.mrb[0].mxu0
          %v861 = vpop.f32.mrb[0].mxu0
          %v862 = vadd.f32 %v795, %v861
          %v863 = vpop.f32.mrb[0].mxu0
          %864 = vmatprep.mubr.bf16.mxu0 0
          %865 = vmatmul.mubr.bf16.gmra.mrb[0].mxu0 %v811
          %v866 = vpop.f32.mrb[0].mxu0
          %v867 = vadd.f32 %v795, %v866
          %v868 = vpop.f32.mrb[0].mxu0
          %v869 = vpop.f32.mrb[0].mxu0
          %v870 = vadd.f32 %v795, %v869
          %v871 = vpop.f32.mrb[0].mxu0
          %872 = vmatprep.mubr.bf16.mxu0 0
          %873 = vmatmul.mubr.bf16.gmra.mrb[0].mxu0 %v814
          %v874 = vpop.f32.mrb[0].mxu0
          %v875 = vadd.f32 %v795, %v874
          %v876 = vpop.f32.mrb[0].mxu0
          %v877 = vpop.f32.mrb[0].mxu0
          %v878 = vadd.f32 %v795, %v877
          %v879 = vpop.f32.mrb[0].mxu0
          %880 = vdwg.mxu0
          %v881 = vmax.f32 %v851, 0.0
          %v882 = vmax.f32 %v854, 0.0
          %v883 = vmax.f32 %v859, 0.0
          %v884 = vmax.f32 %v862, 0.0
          %v885 = vmax.f32 %v867, 0.0
          %v886 = vmax.f32 %v870, 0.0
          %v887 = vmax.f32 %v875, 0.0
          %v888 = vmax.f32 %v878, 0.0
          %v889 = vpack.c.bf16 %v881, %v881
          %v890 = vpack.c.bf16 %v882, %v882
          %v891 = vpack.c.bf16 %v883, %v883
          %v892 = vpack.c.bf16 %v884, %v884
          %v893 = vpack.c.bf16 %v885, %v885
          %v894 = vpack.c.bf16 %v886, %v886
          %v895 = vpack.c.bf16 %v887, %v887
          %v896 = vpack.c.bf16 %v888, %v888
          %v905 = vunpack.c.l.b16 %v889
          %v906 = vunpack.c.l.b16 %v890
          %v907 = vunpack.c.l.b16 %v891
          %v908 = vunpack.c.l.b16 %v892
          %v909 = vunpack.c.l.b16 %v893
          %v910 = vunpack.c.l.b16 %v894
          %v911 = vunpack.c.l.b16 %v895
          %v912 = vunpack.c.l.b16 %v896
          %v913 = vpack.c.b16 %v905, %v905
          %v914 = vpack.c.b16 %v906, %v906
          %v915 = vpack.c.b16 %v907, %v907
          %v916 = vpack.c.b16 %v908, %v908
          %v917 = vpack.c.b16 %v909, %v909
          %v918 = vpack.c.b16 %v910, %v910
          %v919 = vpack.c.b16 %v911, %v911
          %v920 = vpack.c.b16 %v912, %v912
          %v922 = vshrl.u32 %v913, 16
          %v924 = vrot.slane %v922, 7
          %v925 = vshll.u32 %v913, 16
          %v927 = vor.u32 %v924, %v925
          %v928 = vrot.slane %v924, 4
          %v930 = vshrl.u32 %v914, 16
          %v932 = vrot.slane %v930, 7
          %v933 = vshll.u32 %v914, 16
          %v935 = vor.u32 %v932, %v933
          %v936 = vrot.slane %v932, 4
          %v938 = vshrl.u32 %v915, 16
          %v940 = vrot.slane %v938, 7
          %v941 = vshll.u32 %v915, 16
          %v943 = vor.u32 %v940, %v941
          %v944 = vrot.slane %v940, 4
          %v946 = vshrl.u32 %v916, 16
          %v948 = vrot.slane %v946, 7
          %v949 = vshll.u32 %v916, 16
          %v951 = vor.u32 %v948, %v949
          %v952 = vrot.slane %v948, 4
          %v954 = vshrl.u32 %v917, 16
          %v956 = vrot.slane %v954, 7
          %v957 = vshll.u32 %v917, 16
          %v959 = vor.u32 %v956, %v957
          %v960 = vrot.slane %v956, 4
          %v962 = vshrl.u32 %v918, 16
          %v964 = vrot.slane %v962, 7
          %v965 = vshll.u32 %v918, 16
          %v967 = vor.u32 %v964, %v965
          %v968 = vrot.slane %v964, 4
          %v970 = vshrl.u32 %v919, 16
          %v972 = vrot.slane %v970, 7
          %v973 = vshll.u32 %v919, 16
          %v975 = vor.u32 %v972, %v973
          %v976 = vrot.slane %v972, 4
          %v978 = vshrl.u32 %v920, 16
          %v980 = vrot.slane %v978, 7
          %v981 = vshll.u32 %v920, 16
          %v983 = vor.u32 %v980, %v981
          %v984 = vrot.slane %v980, 4
          %s1001 = smul.u32 %s417, 20
          %s1002 = sadd.s32 2, %s1001
          %s1003 = smul.addr %s1002, 4
          %s1004 = scalar_lea.vmem [#allocation2], %s1003
          %vm1005 = vcmask 27648
          %vm1006 = vsmask.f32 7938
          %vm1007 = vmand %vm1005, %vm1006
          %v1008 = vld [vmem:[%s1004] sm:$0xf]
          %v1009 = vsel %vm1007, %v927, %v1008
          %1010 = vst [vmem:[%s1004] sm:$0xf] %v1009
          %vm1011 = vcmask 24576
          %vm1012 = vsmask.f32 256
          %vm1013 = vmand %vm1011, %vm1012
          %v1014 = vld [vmem:[%s1004 + $0x4] sm:$0x1]
          %v1015 = vsel %vm1013, %v928, %v1014
          %1016 = vst [vmem:[%s1004 + $0x4] sm:$0x1] %v1015
          %v1017 = vld [vmem:[%s1004 + $0x8] sm:$0xf]
          %v1018 = vsel %vm1007, %v935, %v1017
          %1019 = vst [vmem:[%s1004 + $0x8] sm:$0xf] %v1018
          %v1020 = vld [vmem:[%s1004 + $0xc] sm:$0x1]
          %v1021 = vsel %vm1013, %v936, %v1020
          %1022 = vst [vmem:[%s1004 + $0xc] sm:$0x1] %v1021
          %v1023 = vld [vmem:[%s1004 + $0x10] sm:$0xf]
          %v1024 = vsel %vm1007, %v943, %v1023
          %1025 = vst [vmem:[%s1004 + $0x10] sm:$0xf] %v1024
          %v1026 = vld [vmem:[%s1004 + $0x14] sm:$0x1]
          %v1027 = vsel %vm1013, %v944, %v1026
          %1028 = vst [vmem:[%s1004 + $0x14] sm:$0x1] %v1027
          %v1029 = vld [vmem:[%s1004 + $0x18] sm:$0xf]
          %v1030 = vsel %vm1007, %v951, %v1029
          %1031 = vst [vmem:[%s1004 + $0x18] sm:$0xf] %v1030
          %v1032 = vld [vmem:[%s1004 + $0x1c] sm:$0x1]
          %v1033 = vsel %vm1013, %v952, %v1032
          %1034 = vst [vmem:[%s1004 + $0x1c] sm:$0x1] %v1033
          %v1035 = vld [vmem:[%s1004 + $0x20] sm:$0xf]
          %v1036 = vsel %vm1007, %v959, %v1035
          %1037 = vst [vmem:[%s1004 + $0x20] sm:$0xf] %v1036
          %v1038 = vld [vmem:[%s1004 + $0x24] sm:$0x1]
          %v1039 = vsel %vm1013, %v960, %v1038
          %1040 = vst [vmem:[%s1004 + $0x24] sm:$0x1] %v1039
          %v1041 = vld [vmem:[%s1004 + $0x28] sm:$0xf]
          %v1042 = vsel %vm1007, %v967, %v1041
          %1043 = vst [vmem:[%s1004 + $0x28] sm:$0xf] %v1042
          %v1044 = vld [vmem:[%s1004 + $0x2c] sm:$0x1]
          %v1045 = vsel %vm1013, %v968, %v1044
          %1046 = vst [vmem:[%s1004 + $0x2c] sm:$0x1] %v1045
          %v1047 = vld [vmem:[%s1004 + $0x30] sm:$0xf]
          %v1048 = vsel %vm1007, %v975, %v1047
          %1049 = vst [vmem:[%s1004 + $0x30] sm:$0xf] %v1048
          %v1050 = vld [vmem:[%s1004 + $0x34] sm:$0x1]
          %v1051 = vsel %vm1013, %v976, %v1050
          %1052 = vst [vmem:[%s1004 + $0x34] sm:$0x1] %v1051
          %v1053 = vld [vmem:[%s1004 + $0x38] sm:$0xf]
          %v1054 = vsel %vm1007, %v983, %v1053
          %1055 = vst [vmem:[%s1004 + $0x38] sm:$0xf] %v1054
          %v1056 = vld [vmem:[%s1004 + $0x3c] sm:$0x1]
          %v1057 = vsel %vm1013, %v984, %v1056
          %1058 = vst [vmem:[%s1004 + $0x3c] sm:$0x1] %v1057
          %p1059 = scmp.lt.s32.totalorder %s410, 0
          %s1060 = ssub.s32 0, %s410
          %s1061 = scalar_select %p1059, %s1060, %s410
          %s1062 = sand.u32 %s1061, 1
          %s1063 = ssub.s32 0, %s1062
          %s1064 = scalar_select %p1059, %s1063, %s1062
          %s1065 = smul.u32 %s1064, 64
          %s1066 = scalar_lea.vmem [#allocation3], %s1065
          %1067 = vst.msk [vmem:[%s1066] sm:$0xff] %vm803, %v776
          %1068 = vst.msk [vmem:[%s1066 + $0x8] sm:$0xff] %vm803, %v777
          %1069 = vst.msk [vmem:[%s1066 + $0x10] sm:$0xff] %vm803, %v778
          %1070 = vst.msk [vmem:[%s1066 + $0x18] sm:$0xff] %vm803, %v779
          %1071 = vst.msk [vmem:[%s1066 + $0x20] sm:$0xff] %vm803, %v780
          %1072 = vst.msk [vmem:[%s1066 + $0x28] sm:$0xff] %vm803, %v781
          %1073 = vst.msk [vmem:[%s1066 + $0x30] sm:$0xff] %vm803, %v782
          %1074 = vst.msk [vmem:[%s1066 + $0x38] sm:$0xff] %vm803, %v783
        $region68: #{tpu_custom_call.1} parent=51 // pred_fallthru
          _
        %p1075 = scmp.eq.s32.totalorder %s33, 7
        // Predicated region
        $region69: #{tpu_custom_call.1} parent=51 // pred_check
          %p1076 = pneg %p1075
        $region70: #{tpu_custom_call.1} parent=51 // pred_check_branch
          %1078 = sbr.rel (%p1076) target = $region72
        $region71: #{tpu_custom_call.1} parent=51 // pred_region
          %s1079 = smul.u32 %s417, 20
          %s1080 = sadd.s32 2, %s1079
          %s1081 = smul.addr %s1080, 4
          %s1082 = scalar_lea.vmem [#allocation2], %s1081
          %vm1083 = vcmask 27648
          %vm1084 = vsmask.f32 7938
          %vm1085 = vmand %vm1083, %vm1084
          %v1086 = vld [vmem:[%s1082] sm:$0xf]
          %v1087 = vsel %vm1085, 0, %v1086
          %1088 = vst [vmem:[%s1082] sm:$0xf] %v1087
          %vm1089 = vcmask 24576
          %vm1090 = vsmask.f32 256
          %vm1091 = vmand %vm1089, %vm1090
          %v1092 = vld [vmem:[%s1082 + $0x4] sm:$0x1]
          %v1093 = vsel %vm1091, 0, %v1092
          %1094 = vst [vmem:[%s1082 + $0x4] sm:$0x1] %v1093
          %v1095 = vld [vmem:[%s1082 + $0x8] sm:$0xf]
          %v1096 = vsel %vm1085, 0, %v1095
          %1097 = vst [vmem:[%s1082 + $0x8] sm:$0xf] %v1096
          %v1098 = vld [vmem:[%s1082 + $0xc] sm:$0x1]
          %v1099 = vsel %vm1091, 0, %v1098
          %1100 = vst [vmem:[%s1082 + $0xc] sm:$0x1] %v1099
          %v1101 = vld [vmem:[%s1082 + $0x10] sm:$0xf]
          %v1102 = vsel %vm1085, 0, %v1101
          %1103 = vst [vmem:[%s1082 + $0x10] sm:$0xf] %v1102
          %v1104 = vld [vmem:[%s1082 + $0x14] sm:$0x1]
          %v1105 = vsel %vm1091, 0, %v1104
          %1106 = vst [vmem:[%s1082 + $0x14] sm:$0x1] %v1105
          %v1107 = vld [vmem:[%s1082 + $0x18] sm:$0xf]
          %v1108 = vsel %vm1085, 0, %v1107
          %1109 = vst [vmem:[%s1082 + $0x18] sm:$0xf] %v1108
          %v1110 = vld [vmem:[%s1082 + $0x1c] sm:$0x1]
          %v1111 = vsel %vm1091, 0, %v1110
          %1112 = vst [vmem:[%s1082 + $0x1c] sm:$0x1] %v1111
          %v1113 = vld [vmem:[%s1082 + $0x20] sm:$0xf]
          %v1114 = vsel %vm1085, 0, %v1113
          %1115 = vst [vmem:[%s1082 + $0x20] sm:$0xf] %v1114
          %v1116 = vld [vmem:[%s1082 + $0x24] sm:$0x1]
          %v1117 = vsel %vm1091, 0, %v1116
          %1118 = vst [vmem:[%s1082 + $0x24] sm:$0x1] %v1117
          %v1119 = vld [vmem:[%s1082 + $0x28] sm:$0xf]
          %v1120 = vsel %vm1085, 0, %v1119
          %1121 = vst [vmem:[%s1082 + $0x28] sm:$0xf] %v1120
          %v1122 = vld [vmem:[%s1082 + $0x2c] sm:$0x1]
          %v1123 = vsel %vm1091, 0, %v1122
          %1124 = vst [vmem:[%s1082 + $0x2c] sm:$0x1] %v1123
          %v1125 = vld [vmem:[%s1082 + $0x30] sm:$0xf]
          %v1126 = vsel %vm1085, 0, %v1125
          %1127 = vst [vmem:[%s1082 + $0x30] sm:$0xf] %v1126
          %v1128 = vld [vmem:[%s1082 + $0x34] sm:$0x1]
          %v1129 = vsel %vm1091, 0, %v1128
          %1130 = vst [vmem:[%s1082 + $0x34] sm:$0x1] %v1129
          %v1131 = vld [vmem:[%s1082 + $0x38] sm:$0xf]
          %v1132 = vsel %vm1085, 0, %v1131
          %1133 = vst [vmem:[%s1082 + $0x38] sm:$0xf] %v1132
          %v1134 = vld [vmem:[%s1082 + $0x3c] sm:$0x1]
          %v1135 = vsel %vm1091, 0, %v1134
          %1136 = vst [vmem:[%s1082 + $0x3c] sm:$0x1] %v1135
        $region72: #{tpu_custom_call.1} parent=51 // pred_fallthru
          _
        %s1137 = smul.u32 %s402, 20
        %s1138 = smul.addr %s1137, 4
        %s1139 = scalar_lea.vmem [#allocation2], %s1138
        %v1140 = vld [vmem:[%s1139] sm:$0xf]
        %v1141 = vld [vmem:[%s1139 + $0x4] sm:$0x1]
        %v1142 = vld [vmem:[%s1139 + $0x8] sm:$0xf]
        %v1143 = vld [vmem:[%s1139 + $0xc] sm:$0x1]
        %v1144 = vld [vmem:[%s1139 + $0x10] sm:$0xf]
        %v1145 = vld [vmem:[%s1139 + $0x14] sm:$0x1]
        %v1146 = vld [vmem:[%s1139 + $0x18] sm:$0xf]
        %v1147 = vld [vmem:[%s1139 + $0x1c] sm:$0x1]
        %v1148 = vld [vmem:[%s1139 + $0x20] sm:$0xf]
        %v1149 = vld [vmem:[%s1139 + $0x24] sm:$0x1]
        %v1150 = vld [vmem:[%s1139 + $0x28] sm:$0xf]
        %v1151 = vld [vmem:[%s1139 + $0x2c] sm:$0x1]
        %v1152 = vld [vmem:[%s1139 + $0x30] sm:$0xf]
        %v1153 = vld [vmem:[%s1139 + $0x34] sm:$0x1]
        %v1154 = vld [vmem:[%s1139 + $0x38] sm:$0xf]
        %v1155 = vld [vmem:[%s1139 + $0x3c] sm:$0x1]
        %v1172 = vunpack.c.l.b16 %v1140
        %v1173 = vunpack.c.l.b16 %v1141
        %v1174 = vunpack.c.l.b16 %v1142
        %v1175 = vunpack.c.l.b16 %v1143
        %v1176 = vunpack.c.l.b16 %v1144
        %v1177 = vunpack.c.l.b16 %v1145
        %v1178 = vunpack.c.l.b16 %v1146
        %v1179 = vunpack.c.l.b16 %v1147
        %v1180 = vunpack.c.l.b16 %v1148
        %v1181 = vunpack.c.l.b16 %v1149
        %v1182 = vunpack.c.l.b16 %v1150
        %v1183 = vunpack.c.l.b16 %v1151
        %v1184 = vunpack.c.l.b16 %v1152
        %v1185 = vunpack.c.l.b16 %v1153
        %v1186 = vunpack.c.l.b16 %v1154
        %v1187 = vunpack.c.l.b16 %v1155
        %v1188 = vpack.c.b16 %v1173, %v1172
        %v1189 = vpack.c.b16 %v1175, %v1174
        %v1190 = vpack.c.b16 %v1177, %v1176
        %v1191 = vpack.c.b16 %v1179, %v1178
        %v1192 = vpack.c.b16 %v1181, %v1180
        %v1193 = vpack.c.b16 %v1183, %v1182
        %v1194 = vpack.c.b16 %v1185, %v1184
        %v1195 = vpack.c.b16 %v1187, %v1186
        %v1197 = vshrl.u32 %v1188, 16
        %v1199 = vshll.u32 %v1188, 16
        %v1201 = vrot.slane %v1199, 1
        %v1202 = vor.u32 %v1197, %v1201
        %v1204 = vshrl.u32 %v1189, 16
        %v1206 = vshll.u32 %v1189, 16
        %v1208 = vrot.slane %v1206, 1
        %v1209 = vor.u32 %v1204, %v1208
        %v1211 = vshrl.u32 %v1190, 16
        %v1213 = vshll.u32 %v1190, 16
        %v1215 = vrot.slane %v1213, 1
        %v1216 = vor.u32 %v1211, %v1215
        %v1218 = vshrl.u32 %v1191, 16
        %v1220 = vshll.u32 %v1191, 16
        %v1222 = vrot.slane %v1220, 1
        %v1223 = vor.u32 %v1218, %v1222
        %v1225 = vshrl.u32 %v1192, 16
        %v1227 = vshll.u32 %v1192, 16
        %v1229 = vrot.slane %v1227, 1
        %v1230 = vor.u32 %v1225, %v1229
        %v1232 = vshrl.u32 %v1193, 16
        %v1234 = vshll.u32 %v1193, 16
        %v1236 = vrot.slane %v1234, 1
        %v1237 = vor.u32 %v1232, %v1236
        %v1239 = vshrl.u32 %v1194, 16
        %v1241 = vshll.u32 %v1194, 16
        %v1243 = vrot.slane %v1241, 1
        %v1244 = vor.u32 %v1239, %v1243
        %v1246 = vshrl.u32 %v1195, 16
        %v1248 = vshll.u32 %v1195, 16
        %v1250 = vrot.slane %v1248, 1
        %v1251 = vor.u32 %v1246, %v1250
        %1252 = vrot.lane.b32.xlu0 %v1202, 4
        %v1253 = vpop.permute.xlu0 %1252
        %1254 = vrot.lane.b32.xlu0 %v1209, 4
        %v1255 = vpop.permute.xlu0 %1254
        %1256 = vrot.lane.b32.xlu0 %v1216, 4
        %v1257 = vpop.permute.xlu0 %1256
        %1258 = vrot.lane.b32.xlu0 %v1223, 4
        %v1259 = vpop.permute.xlu0 %1258
        %1260 = vrot.lane.b32.xlu0 %v1230, 4
        %v1261 = vpop.permute.xlu0 %1260
        %1262 = vrot.lane.b32.xlu0 %v1237, 4
        %v1263 = vpop.permute.xlu0 %1262
        %1264 = vrot.lane.b32.xlu0 %v1244, 4
        %v1265 = vpop.permute.xlu0 %1264
        %1266 = vrot.lane.b32.xlu0 %v1251, 4
        %v1267 = vpop.permute.xlu0 %1266
        %v1268 = vrot.slane %v1188, 1
        %v1269 = vrot.slane %v1189, 1
        %v1270 = vrot.slane %v1190, 1
        %v1271 = vrot.slane %v1191, 1
        %v1272 = vrot.slane %v1192, 1
        %v1273 = vrot.slane %v1193, 1
        %v1274 = vrot.slane %v1194, 1
        %v1275 = vrot.slane %v1195, 1
        %1276 = vrot.lane.b32.xlu0 %v1268, 8
        %v1277 = vpop.permute.xlu0 %1276
        %1278 = vrot.lane.b32.xlu0 %v1269, 8
        %v1279 = vpop.permute.xlu0 %1278
        %1280 = vrot.lane.b32.xlu0 %v1270, 8
        %v1281 = vpop.permute.xlu0 %1280
        %1282 = vrot.lane.b32.xlu0 %v1271, 8
        %v1283 = vpop.permute.xlu0 %1282
        %1284 = vrot.lane.b32.xlu0 %v1272, 8
        %v1285 = vpop.permute.xlu0 %1284
        %1286 = vrot.lane.b32.xlu0 %v1273, 8
        %v1287 = vpop.permute.xlu0 %1286
        %1288 = vrot.lane.b32.xlu0 %v1274, 8
        %v1289 = vpop.permute.xlu0 %1288
        %1290 = vrot.lane.b32.xlu0 %v1275, 8
        %v1291 = vpop.permute.xlu0 %1290
        %vm1292 = vcmask 31744
        %v1295 = vsel %vm1292, %v1140, %v1253
        %v1298 = vsel %vm1292, %v1142, %v1255
        %v1301 = vsel %vm1292, %v1144, %v1257
        %v1304 = vsel %vm1292, %v1146, %v1259
        %v1307 = vsel %vm1292, %v1148, %v1261
        %v1310 = vsel %vm1292, %v1150, %v1263
        %v1313 = vsel %vm1292, %v1152, %v1265
        %v1316 = vsel %vm1292, %v1154, %v1267
        %vm1317 = vcmask 64512
        %v1319 = vsel %vm1317, %v1295, %v1277
        %v1321 = vsel %vm1317, %v1298, %v1279
        %v1323 = vsel %vm1317, %v1301, %v1281
        %v1325 = vsel %vm1317, %v1304, %v1283
        %v1327 = vsel %vm1317, %v1307, %v1285
        %v1329 = vsel %vm1317, %v1310, %v1287
        %v1331 = vsel %vm1317, %v1313, %v1289
        %v1333 = vsel %vm1317, %v1316, %v1291
        %v1334 = vld [vmem:[%s4] sm:$0xf]
        %v1335 = vld [vmem:[%s4 + $0x4] sm:$0x3]
        %s1336 = sadd.s32 2, %s1137
        %s1337 = smul.addr %s1336, 4
        %s1338 = scalar_lea.vmem [#allocation2], %s1337
        %v1339 = vld [vmem:[%s1338] sm:$0xf]
        %v1340 = vld [vmem:[%s1338 + $0x4] sm:$0x1]
        %v1341 = vld [vmem:[%s1338 + $0x8] sm:$0xf]
        %v1342 = vld [vmem:[%s1338 + $0xc] sm:$0x1]
        %v1343 = vld [vmem:[%s1338 + $0x10] sm:$0xf]
        %v1344 = vld [vmem:[%s1338 + $0x14] sm:$0x1]
        %v1345 = vld [vmem:[%s1338 + $0x18] sm:$0xf]
        %v1346 = vld [vmem:[%s1338 + $0x1c] sm:$0x1]
        %v1347 = vld [vmem:[%s1338 + $0x20] sm:$0xf]
        %v1348 = vld [vmem:[%s1338 + $0x24] sm:$0x1]
        %v1349 = vld [vmem:[%s1338 + $0x28] sm:$0xf]
        %v1350 = vld [vmem:[%s1338 + $0x2c] sm:$0x1]
        %v1351 = vld [vmem:[%s1338 + $0x30] sm:$0xf]
        %v1352 = vld [vmem:[%s1338 + $0x34] sm:$0x1]
        %v1353 = vld [vmem:[%s1338 + $0x38] sm:$0xf]
        %v1354 = vld [vmem:[%s1338 + $0x3c] sm:$0x1]
        %v1371 = vunpack.c.l.b16 %v1339
        %v1372 = vunpack.c.l.b16 %v1340
        %v1373 = vunpack.c.l.b16 %v1341
        %v1374 = vunpack.c.l.b16 %v1342
        %v1375 = vunpack.c.l.b16 %v1343
        %v1376 = vunpack.c.l.b16 %v1344
        %v1377 = vunpack.c.l.b16 %v1345
        %v1378 = vunpack.c.l.b16 %v1346
        %v1379 = vunpack.c.l.b16 %v1347
        %v1380 = vunpack.c.l.b16 %v1348
        %v1381 = vunpack.c.l.b16 %v1349
        %v1382 = vunpack.c.l.b16 %v1350
        %v1383 = vunpack.c.l.b16 %v1351
        %v1384 = vunpack.c.l.b16 %v1352
        %v1385 = vunpack.c.l.b16 %v1353
        %v1386 = vunpack.c.l.b16 %v1354
        %v1387 = vpack.c.b16 %v1372, %v1371
        %v1388 = vpack.c.b16 %v1374, %v1373
        %v1389 = vpack.c.b16 %v1376, %v1375
        %v1390 = vpack.c.b16 %v1378, %v1377
        %v1391 = vpack.c.b16 %v1380, %v1379
        %v1392 = vpack.c.b16 %v1382, %v1381
        %v1393 = vpack.c.b16 %v1384, %v1383
        %v1394 = vpack.c.b16 %v1386, %v1385
        %v1396 = vshrl.u32 %v1387, 16
        %v1398 = vshll.u32 %v1387, 16
        %v1400 = vrot.slane %v1398, 1
        %v1401 = vor.u32 %v1396, %v1400
        %v1403 = vshrl.u32 %v1388, 16
        %v1405 = vshll.u32 %v1388, 16
        %v1407 = vrot.slane %v1405, 1
        %v1408 = vor.u32 %v1403, %v1407
        %v1410 = vshrl.u32 %v1389, 16
        %v1412 = vshll.u32 %v1389, 16
        %v1414 = vrot.slane %v1412, 1
        %v1415 = vor.u32 %v1410, %v1414
        %v1417 = vshrl.u32 %v1390, 16
        %v1419 = vshll.u32 %v1390, 16
        %v1421 = vrot.slane %v1419, 1
        %v1422 = vor.u32 %v1417, %v1421
        %v1424 = vshrl.u32 %v1391, 16
        %v1426 = vshll.u32 %v1391, 16
        %v1428 = vrot.slane %v1426, 1
        %v1429 = vor.u32 %v1424, %v1428
        %v1431 = vshrl.u32 %v1392, 16
        %v1433 = vshll.u32 %v1392, 16
        %v1435 = vrot.slane %v1433, 1
        %v1436 = vor.u32 %v1431, %v1435
        %v1438 = vshrl.u32 %v1393, 16
        %v1440 = vshll.u32 %v1393, 16
        %v1442 = vrot.slane %v1440, 1
        %v1443 = vor.u32 %v1438, %v1442
        %v1445 = vshrl.u32 %v1394, 16
        %v1447 = vshll.u32 %v1394, 16
        %v1449 = vrot.slane %v1447, 1
        %v1450 = vor.u32 %v1445, %v1449
        %1451 = vrot.lane.b32.xlu0 %v1401, 4
        %v1452 = vpop.permute.xlu0 %1451
        %1453 = vrot.lane.b32.xlu0 %v1408, 4
        %v1454 = vpop.permute.xlu0 %1453
        %1455 = vrot.lane.b32.xlu0 %v1415, 4
        %v1456 = vpop.permute.xlu0 %1455
        %1457 = vrot.lane.b32.xlu0 %v1422, 4
        %v1458 = vpop.permute.xlu0 %1457
        %1459 = vrot.lane.b32.xlu0 %v1429, 4
        %v1460 = vpop.permute.xlu0 %1459
        %1461 = vrot.lane.b32.xlu0 %v1436, 4
        %v1462 = vpop.permute.xlu0 %1461
        %1463 = vrot.lane.b32.xlu0 %v1443, 4
        %v1464 = vpop.permute.xlu0 %1463
        %1465 = vrot.lane.b32.xlu0 %v1450, 4
        %v1466 = vpop.permute.xlu0 %1465
        %v1467 = vrot.slane %v1387, 1
        %v1468 = vrot.slane %v1388, 1
        %v1469 = vrot.slane %v1389, 1
        %v1470 = vrot.slane %v1390, 1
        %v1471 = vrot.slane %v1391, 1
        %v1472 = vrot.slane %v1392, 1
        %v1473 = vrot.slane %v1393, 1
        %v1474 = vrot.slane %v1394, 1
        %1475 = vrot.lane.b32.xlu0 %v1467, 8
        %v1476 = vpop.permute.xlu0 %1475
        %1477 = vrot.lane.b32.xlu0 %v1468, 8
        %v1478 = vpop.permute.xlu0 %1477
        %1479 = vrot.lane.b32.xlu0 %v1469, 8
        %v1480 = vpop.permute.xlu0 %1479
        %1481 = vrot.lane.b32.xlu0 %v1470, 8
        %v1482 = vpop.permute.xlu0 %1481
        %1483 = vrot.lane.b32.xlu0 %v1471, 8
        %v1484 = vpop.permute.xlu0 %1483
        %1485 = vrot.lane.b32.xlu0 %v1472, 8
        %v1486 = vpop.permute.xlu0 %1485
        %1487 = vrot.lane.b32.xlu0 %v1473, 8
        %v1488 = vpop.permute.xlu0 %1487
        %1489 = vrot.lane.b32.xlu0 %v1474, 8
        %v1490 = vpop.permute.xlu0 %1489
        %v1493 = vsel %vm1292, %v1339, %v1452
        %v1496 = vsel %vm1292, %v1341, %v1454
        %v1499 = vsel %vm1292, %v1343, %v1456
        %v1502 = vsel %vm1292, %v1345, %v1458
        %v1505 = vsel %vm1292, %v1347, %v1460
        %v1508 = vsel %vm1292, %v1349, %v1462
        %v1511 = vsel %vm1292, %v1351, %v1464
        %v1514 = vsel %vm1292, %v1353, %v1466
        %v1516 = vsel %vm1317, %v1493, %v1476
        %v1518 = vsel %vm1317, %v1496, %v1478
        %v1520 = vsel %vm1317, %v1499, %v1480
        %v1522 = vsel %vm1317, %v1502, %v1482
        %v1524 = vsel %vm1317, %v1505, %v1484
        %v1526 = vsel %vm1317, %v1508, %v1486
        %v1528 = vsel %vm1317, %v1511, %v1488
        %v1530 = vsel %vm1317, %v1514, %v1490
        %s1531 = scalar_lea.vmem %s4, 8
        %v1532 = vld [vmem:[%s1531] sm:$0xf]
        %v1533 = vld [vmem:[%s1531 + $0x4] sm:$0x3]
        %v1542 = vunpack.c.l.b16 %v1516
        %v1543 = vunpack.c.l.b16 %v1518
        %v1544 = vunpack.c.l.b16 %v1520
        %v1545 = vunpack.c.l.b16 %v1522
        %v1546 = vunpack.c.l.b16 %v1524
        %v1547 = vunpack.c.l.b16 %v1526
        %v1548 = vunpack.c.l.b16 %v1528
        %v1549 = vunpack.c.l.b16 %v1530
        %v1550 = vpack.c.b16 %v1543, %v1542
        %v1551 = vpack.c.b16 %v1545, %v1544
        %v1552 = vpack.c.b16 %v1547, %v1546
        %v1553 = vpack.c.b16 %v1549, %v1548
        %v1556 = vunpack.c.l.b16 %v1532
        %v1557 = vunpack.c.l.b16 %v1533
        %v1558 = vpack.c.b16 %v1557, %v1556
        %vm1559 = vcmask 97280
        %v1561 = vsel %vm1559, %v1550, 0
        %v1564 = vsel %vm1559, %v1551, 0
        %v1567 = vsel %vm1559, %v1552, 0
        %v1570 = vsel %vm1559, %v1553, 0
        %vm1572 = vcmask 1045504
        %v1574 = vsel %vm1572, %v1558, 0
        %1576 = vmatprep.subr.bf16.mxu0 0
        %1577 = vmatpush1.bf16.msra.mxu0 %v1574
        %1578 = vmatprep.subr.bf16.mxu0 0
        %1579 = vmatpush1.bf16.msra.mxu0 0
        %1580 = vmatprep.subr.bf16.mxu0 0
        %1581 = vmatpush1.bf16.msra.mxu0 0
        %1582 = vmatprep.subr.bf16.mxu0 0
        %1583 = vmatpush1.bf16.msra.mxu0 0
        %1584 = vmatprep.subr.bf16.mxu0 0
        %1585 = vmatpush1.bf16.msra.mxu0 0
        %1586 = vmatprep.subr.bf16.mxu0 0
        %1587 = vmatpush1.bf16.msra.mxu0 0
        %1588 = vmatprep.subr.bf16.mxu0 0
        %1589 = vmatpush1.bf16.msra.mxu0 0
        %1590 = vmatprep.subr.bf16.mxu0 0
        %1591 = vmatpush1.bf16.msra.mxu0 0
        %1592 = vmatprep.subr.bf16.mxu0 0
        %1593 = vmatpush1.bf16.msra.mxu0 0
        %1594 = vmatprep.subr.bf16.mxu0 0
        %1595 = vmatpush1.bf16.msra.mxu0 0
        %1596 = vmatprep.subr.bf16.mxu0 0
        %1597 = vmatpush1.bf16.msra.mxu0 0
        %1598 = vmatprep.subr.bf16.mxu0 0
        %1599 = vmatpush1.bf16.msra.mxu0 0
        %1600 = vmatprep.subr.bf16.mxu0 0
        %1601 = vmatpush1.bf16.msra.mxu0 0
        %1602 = vmatprep.subr.bf16.mxu0 0
        %1603 = vmatpush1.bf16.msra.mxu0 0
        %1604 = vmatprep.subr.bf16.mxu0 0
        %1605 = vmatpush1.bf16.msra.mxu0 0
        %1606 = vmatprep.subr.bf16.mxu0 0
        %1607 = vmatpush1.bf16.msra.mxu0 0
        %1608 = vmatprep.mubr.bf16.mxu0 0
        %1609 = vmatmul.mubr.bf16.gmra.mrb[0].mxu0 %v1561
        %v1610 = vpop.f32.mrb[0].mxu0
        %v1611 = vadd.f32 0.0, %v1610
        %v1612 = vpop.f32.mrb[0].mxu0
        %v1613 = vpop.f32.mrb[0].mxu0
        %v1614 = vadd.f32 0.0, %v1613
        %v1615 = vpop.f32.mrb[0].mxu0
        %1616 = vmatprep.mubr.bf16.mxu0 0
        %1617 = vmatmul.mubr.bf16.gmra.mrb[0].mxu0 %v1564
        %v1618 = vpop.f32.mrb[0].mxu0
        %v1619 = vadd.f32 0.0, %v1618
        %v1620 = vpop.f32.mrb[0].mxu0
        %v1621 = vpop.f32.mrb[0].mxu0
        %v1622 = vadd.f32 0.0, %v1621
        %v1623 = vpop.f32.mrb[0].mxu0
        %1624 = vmatprep.mubr.bf16.mxu0 0
        %1625 = vmatmul.mubr.bf16.gmra.mrb[0].mxu0 %v1567
        %v1626 = vpop.f32.mrb[0].mxu0
        %v1627 = vadd.f32 0.0, %v1626
        %v1628 = vpop.f32.mrb[0].mxu0
        %v1629 = vpop.f32.mrb[0].mxu0
        %v1630 = vadd.f32 0.0, %v1629
        %v1631 = vpop.f32.mrb[0].mxu0
        %1632 = vmatprep.mubr.bf16.mxu0 0
        %1633 = vmatmul.mubr.bf16.gmra.mrb[0].mxu0 %v1570
        %v1634 = vpop.f32.mrb[0].mxu0
        %v1635 = vadd.f32 0.0, %v1634
        %v1636 = vpop.f32.mrb[0].mxu0
        %v1637 = vpop.f32.mrb[0].mxu0
        %v1638 = vadd.f32 0.0, %v1637
        %v1639 = vpop.f32.mrb[0].mxu0
        %1640 = vdwg.mxu0
        %v1649 = vunpack.c.l.b16 %v1319
        %v1650 = vunpack.c.l.b16 %v1321
        %v1651 = vunpack.c.l.b16 %v1323
        %v1652 = vunpack.c.l.b16 %v1325
        %v1653 = vunpack.c.l.b16 %v1327
        %v1654 = vunpack.c.l.b16 %v1329
        %v1655 = vunpack.c.l.b16 %v1331
        %v1656 = vunpack.c.l.b16 %v1333
        %v1657 = vpack.c.b16 %v1650, %v1649
        %v1658 = vpack.c.b16 %v1652, %v1651
        %v1659 = vpack.c.b16 %v1654, %v1653
        %v1660 = vpack.c.b16 %v1656, %v1655
        %v1663 = vunpack.c.l.b16 %v1334
        %v1664 = vunpack.c.l.b16 %v1335
        %v1665 = vpack.c.b16 %v1664, %v1663
        %v1667 = vsel %vm1559, %v1657, 0
        %v1670 = vsel %vm1559, %v1658, 0
        %v1673 = vsel %vm1559, %v1659, 0
        %v1676 = vsel %vm1559, %v1660, 0
        %v1679 = vsel %vm1572, %v1665, 0
        %1681 = vmatprep.subr.bf16.mxu0 0
        %1682 = vmatpush1.bf16.msra.mxu0 %v1679
        %1683 = vmatprep.subr.bf16.mxu0 0
        %1684 = vmatpush1.bf16.msra.mxu0 0
        %1685 = vmatprep.subr.bf16.mxu0 0
        %1686 = vmatpush1.bf16.msra.mxu0 0
        %1687 = vmatprep.subr.bf16.mxu0 0
        %1688 = vmatpush1.bf16.msra.mxu0 0
        %1689 = vmatprep.subr.bf16.mxu0 0
        %1690 = vmatpush1.bf16.msra.mxu0 0
        %1691 = vmatprep.subr.bf16.mxu0 0
        %1692 = vmatpush1.bf16.msra.mxu0 0
        %1693 = vmatprep.subr.bf16.mxu0 0
        %1694 = vmatpush1.bf16.msra.mxu0 0
        %1695 = vmatprep.subr.bf16.mxu0 0
        %1696 = vmatpush1.bf16.msra.mxu0 0
        %1697 = vmatprep.subr.bf16.mxu0 0
        %1698 = vmatpush1.bf16.msra.mxu0 0
        %1699 = vmatprep.subr.bf16.mxu0 0
        %1700 = vmatpush1.bf16.msra.mxu0 0
        %1701 = vmatprep.subr.bf16.mxu0 0
        %1702 = vmatpush1.bf16.msra.mxu0 0
        %1703 = vmatprep.subr.bf16.mxu0 0
        %1704 = vmatpush1.bf16.msra.mxu0 0
        %1705 = vmatprep.subr.bf16.mxu0 0
        %1706 = vmatpush1.bf16.msra.mxu0 0
        %1707 = vmatprep.subr.bf16.mxu0 0
        %1708 = vmatpush1.bf16.msra.mxu0 0
        %1709 = vmatprep.subr.bf16.mxu0 0
        %1710 = vmatpush1.bf16.msra.mxu0 0
        %1711 = vmatprep.subr.bf16.mxu0 0
        %1712 = vmatpush1.bf16.msra.mxu0 0
        %1713 = vmatprep.mubr.bf16.mxu0 0
        %1714 = vmatmul.mubr.bf16.gmra.mrb[0].mxu0 %v1667
        %v1715 = vpop.f32.mrb[0].mxu0
        %v1716 = vadd.f32 %v1611, %v1715
        %v1717 = vpop.f32.mrb[0].mxu0
        %v1718 = vpop.f32.mrb[0].mxu0
        %v1719 = vadd.f32 %v1614, %v1718
        %v1720 = vpop.f32.mrb[0].mxu0
        %1721 = vmatprep.mubr.bf16.mxu0 0
        %1722 = vmatmul.mubr.bf16.gmra.mrb[0].mxu0 %v1670
        %v1723 = vpop.f32.mrb[0].mxu0
        %v1724 = vadd.f32 %v1619, %v1723
        %v1725 = vpop.f32.mrb[0].mxu0
        %v1726 = vpop.f32.mrb[0].mxu0
        %v1727 = vadd.f32 %v1622, %v1726
        %v1728 = vpop.f32.mrb[0].mxu0
        %1729 = vmatprep.mubr.bf16.mxu0 0
        %1730 = vmatmul.mubr.bf16.gmra.mrb[0].mxu0 %v1673
        %v1731 = vpop.f32.mrb[0].mxu0
        %v1732 = vadd.f32 %v1627, %v1731
        %v1733 = vpop.f32.mrb[0].mxu0
        %v1734 = vpop.f32.mrb[0].mxu0
        %v1735 = vadd.f32 %v1630, %v1734
        %v1736 = vpop.f32.mrb[0].mxu0
        %1737 = vmatprep.mubr.bf16.mxu0 0
        %1738 = vmatmul.mubr.bf16.gmra.mrb[0].mxu0 %v1676
        %v1739 = vpop.f32.mrb[0].mxu0
        %v1740 = vadd.f32 %v1635, %v1739
        %v1741 = vpop.f32.mrb[0].mxu0
        %v1742 = vpop.f32.mrb[0].mxu0
        %v1743 = vadd.f32 %v1638, %v1742
        %v1744 = vpop.f32.mrb[0].mxu0
        %1745 = vdwg.mxu0
        %s1746 = sadd.s32 4, %s1137
        %s1747 = smul.addr %s1746, 4
        %s1748 = scalar_lea.vmem [#allocation2], %s1747
        %v1749 = vld [vmem:[%s1748] sm:$0xf]
        %v1750 = vld [vmem:[%s1748 + $0x4] sm:$0x1]
        %v1751 = vld [vmem:[%s1748 + $0x8] sm:$0xf]
        %v1752 = vld [vmem:[%s1748 + $0xc] sm:$0x1]
        %v1753 = vld [vmem:[%s1748 + $0x10] sm:$0xf]
        %v1754 = vld [vmem:[%s1748 + $0x14] sm:$0x1]
        %v1755 = vld [vmem:[%s1748 + $0x18] sm:$0xf]
        %v1756 = vld [vmem:[%s1748 + $0x1c] sm:$0x1]
        %v1757 = vld [vmem:[%s1748 + $0x20] sm:$0xf]
        %v1758 = vld [vmem:[%s1748 + $0x24] sm:$0x1]
        %v1759 = vld [vmem:[%s1748 + $0x28] sm:$0xf]
        %v1760 = vld [vmem:[%s1748 + $0x2c] sm:$0x1]
        %v1761 = vld [vmem:[%s1748 + $0x30] sm:$0xf]
        %v1762 = vld [vmem:[%s1748 + $0x34] sm:$0x1]
        %v1763 = vld [vmem:[%s1748 + $0x38] sm:$0xf]
        %v1764 = vld [vmem:[%s1748 + $0x3c] sm:$0x1]
        %v1781 = vunpack.c.l.b16 %v1749
        %v1782 = vunpack.c.l.b16 %v1750
        %v1783 = vunpack.c.l.b16 %v1751
        %v1784 = vunpack.c.l.b16 %v1752
        %v1785 = vunpack.c.l.b16 %v1753
        %v1786 = vunpack.c.l.b16 %v1754
        %v1787 = vunpack.c.l.b16 %v1755
        %v1788 = vunpack.c.l.b16 %v1756
        %v1789 = vunpack.c.l.b16 %v1757
        %v1790 = vunpack.c.l.b16 %v1758
        %v1791 = vunpack.c.l.b16 %v1759
        %v1792 = vunpack.c.l.b16 %v1760
        %v1793 = vunpack.c.l.b16 %v1761
        %v1794 = vunpack.c.l.b16 %v1762
        %v1795 = vunpack.c.l.b16 %v1763
        %v1796 = vunpack.c.l.b16 %v1764
        %v1797 = vpack.c.b16 %v1782, %v1781
        %v1798 = vpack.c.b16 %v1784, %v1783
        %v1799 = vpack.c.b16 %v1786, %v1785
        %v1800 = vpack.c.b16 %v1788, %v1787
        %v1801 = vpack.c.b16 %v1790, %v1789
        %v1802 = vpack.c.b16 %v1792, %v1791
        %v1803 = vpack.c.b16 %v1794, %v1793
        %v1804 = vpack.c.b16 %v1796, %v1795
        %v1806 = vshrl.u32 %v1797, 16
        %v1808 = vshll.u32 %v1797, 16
        %v1810 = vrot.slane %v1808, 1
        %v1811 = vor.u32 %v1806, %v1810
        %v1813 = vshrl.u32 %v1798, 16
        %v1815 = vshll.u32 %v1798, 16
        %v1817 = vrot.slane %v1815, 1
        %v1818 = vor.u32 %v1813, %v1817
        %v1820 = vshrl.u32 %v1799, 16
        %v1822 = vshll.u32 %v1799, 16
        %v1824 = vrot.slane %v1822, 1
        %v1825 = vor.u32 %v1820, %v1824
        %v1827 = vshrl.u32 %v1800, 16
        %v1829 = vshll.u32 %v1800, 16
        %v1831 = vrot.slane %v1829, 1
        %v1832 = vor.u32 %v1827, %v1831
        %v1834 = vshrl.u32 %v1801, 16
        %v1836 = vshll.u32 %v1801, 16
        %v1838 = vrot.slane %v1836, 1
        %v1839 = vor.u32 %v1834, %v1838
        %v1841 = vshrl.u32 %v1802, 16
        %v1843 = vshll.u32 %v1802, 16
        %v1845 = vrot.slane %v1843, 1
        %v1846 = vor.u32 %v1841, %v1845
        %v1848 = vshrl.u32 %v1803, 16
        %v1850 = vshll.u32 %v1803, 16
        %v1852 = vrot.slane %v1850, 1
        %v1853 = vor.u32 %v1848, %v1852
        %v1855 = vshrl.u32 %v1804, 16
        %v1857 = vshll.u32 %v1804, 16
        %v1859 = vrot.slane %v1857, 1
        %v1860 = vor.u32 %v1855, %v1859
        %1861 = vrot.lane.b32.xlu0 %v1811, 4
        %v1862 = vpop.permute.xlu0 %1861
        %1863 = vrot.lane.b32.xlu0 %v1818, 4
        %v1864 = vpop.permute.xlu0 %1863
        %1865 = vrot.lane.b32.xlu0 %v1825, 4
        %v1866 = vpop.permute.xlu0 %1865
        %1867 = vrot.lane.b32.xlu0 %v1832, 4
        %v1868 = vpop.permute.xlu0 %1867
        %1869 = vrot.lane.b32.xlu0 %v1839, 4
        %v1870 = vpop.permute.xlu0 %1869
        %1871 = vrot.lane.b32.xlu0 %v1846, 4
        %v1872 = vpop.permute.xlu0 %1871
        %1873 = vrot.lane.b32.xlu0 %v1853, 4
        %v1874 = vpop.permute.xlu0 %1873
        %1875 = vrot.lane.b32.xlu0 %v1860, 4
        %v1876 = vpop.permute.xlu0 %1875
        %v1877 = vrot.slane %v1797, 1
        %v1878 = vrot.slane %v1798, 1
        %v1879 = vrot.slane %v1799, 1
        %v1880 = vrot.slane %v1800, 1
        %v1881 = vrot.slane %v1801, 1
        %v1882 = vrot.slane %v1802, 1
        %v1883 = vrot.slane %v1803, 1
        %v1884 = vrot.slane %v1804, 1
        %1885 = vrot.lane.b32.xlu0 %v1877, 8
        %v1886 = vpop.permute.xlu0 %1885
        %1887 = vrot.lane.b32.xlu0 %v1878, 8
        %v1888 = vpop.permute.xlu0 %1887
        %1889 = vrot.lane.b32.xlu0 %v1879, 8
        %v1890 = vpop.permute.xlu0 %1889
        %1891 = vrot.lane.b32.xlu0 %v1880, 8
        %v1892 = vpop.permute.xlu0 %1891
        %1893 = vrot.lane.b32.xlu0 %v1881, 8
        %v1894 = vpop.permute.xlu0 %1893
        %1895 = vrot.lane.b32.xlu0 %v1882, 8
        %v1896 = vpop.permute.xlu0 %1895
        %1897 = vrot.lane.b32.xlu0 %v1883, 8
        %v1898 = vpop.permute.xlu0 %1897
        %1899 = vrot.lane.b32.xlu0 %v1884, 8
        %v1900 = vpop.permute.xlu0 %1899
        %v1903 = vsel %vm1292, %v1749, %v1862
        %v1906 = vsel %vm1292, %v1751, %v1864
        %v1909 = vsel %vm1292, %v1753, %v1866
        %v1912 = vsel %vm1292, %v1755, %v1868
        %v1915 = vsel %vm1292, %v1757, %v1870
        %v1918 = vsel %vm1292, %v1759, %v1872
        %v1921 = vsel %vm1292, %v1761, %v1874
        %v1924 = vsel %vm1292, %v1763, %v1876
        %v1926 = vsel %vm1317, %v1903, %v1886
        %v1928 = vsel %vm1317, %v1906, %v1888
        %v1930 = vsel %vm1317, %v1909, %v1890
        %v1932 = vsel %vm1317, %v1912, %v1892
        %v1934 = vsel %vm1317, %v1915, %v1894
        %v1936 = vsel %vm1317, %v1918, %v1896
        %v1938 = vsel %vm1317, %v1921, %v1898
        %v1940 = vsel %vm1317, %v1924, %v1900
        %s1941 = scalar_lea.vmem %s4, 16
        %v1942 = vld [vmem:[%s1941] sm:$0xf]
        %v1943 = vld [vmem:[%s1941 + $0x4] sm:$0x3]
        %v1952 = vunpack.c.l.b16 %v1926
        %v1953 = vunpack.c.l.b16 %v1928
        %v1954 = vunpack.c.l.b16 %v1930
        %v1955 = vunpack.c.l.b16 %v1932
        %v1956 = vunpack.c.l.b16 %v1934
        %v1957 = vunpack.c.l.b16 %v1936
        %v1958 = vunpack.c.l.b16 %v1938
        %v1959 = vunpack.c.l.b16 %v1940
        %v1960 = vpack.c.b16 %v1953, %v1952
        %v1961 = vpack.c.b16 %v1955, %v1954
        %v1962 = vpack.c.b16 %v1957, %v1956
        %v1963 = vpack.c.b16 %v1959, %v1958
        %v1966 = vunpack.c.l.b16 %v1942
        %v1967 = vunpack.c.l.b16 %v1943
        %v1968 = vpack.c.b16 %v1967, %v1966
        %v1970 = vsel %vm1559, %v1960, 0
        %v1973 = vsel %vm1559, %v1961, 0
        %v1976 = vsel %vm1559, %v1962, 0
        %v1979 = vsel %vm1559, %v1963, 0
        %v1982 = vsel %vm1572, %v1968, 0
        %1984 = vmatprep.subr.bf16.mxu0 0
        %1985 = vmatpush1.bf16.msra.mxu0 %v1982
        %1986 = vmatprep.subr.bf16.mxu0 0
        %1987 = vmatpush1.bf16.msra.mxu0 0
        %1988 = vmatprep.subr.bf16.mxu0 0
        %1989 = vmatpush1.bf16.msra.mxu0 0
        %1990 = vmatprep.subr.bf16.mxu0 0
        %1991 = vmatpush1.bf16.msra.mxu0 0
        %1992 = vmatprep.subr.bf16.mxu0 0
        %1993 = vmatpush1.bf16.msra.mxu0 0
        %1994 = vmatprep.subr.bf16.mxu0 0
        %1995 = vmatpush1.bf16.msra.mxu0 0
        %1996 = vmatprep.subr.bf16.mxu0 0
        %1997 = vmatpush1.bf16.msra.mxu0 0
        %1998 = vmatprep.subr.bf16.mxu0 0
        %1999 = vmatpush1.bf16.msra.mxu0 0
        %2000 = vmatprep.subr.bf16.mxu0 0
        %2001 = vmatpush1.bf16.msra.mxu0 0
        %2002 = vmatprep.subr.bf16.mxu0 0
        %2003 = vmatpush1.bf16.msra.mxu0 0
        %2004 = vmatprep.subr.bf16.mxu0 0
        %2005 = vmatpush1.bf16.msra.mxu0 0
        %2006 = vmatprep.subr.bf16.mxu0 0
        %2007 = vmatpush1.bf16.msra.mxu0 0
        %2008 = vmatprep.subr.bf16.mxu0 0
        %2009 = vmatpush1.bf16.msra.mxu0 0
        %2010 = vmatprep.subr.bf16.mxu0 0
        %2011 = vmatpush1.bf16.msra.mxu0 0
        %2012 = vmatprep.subr.bf16.mxu0 0
        %2013 = vmatpush1.bf16.msra.mxu0 0
        %2014 = vmatprep.subr.bf16.mxu0 0
        %2015 = vmatpush1.bf16.msra.mxu0 0
        %2016 = vmatprep.mubr.bf16.mxu0 0
        %2017 = vmatmul.mubr.bf16.gmra.mrb[0].mxu0 %v1970
        %v2018 = vpop.f32.mrb[0].mxu0
        %v2019 = vadd.f32 0.0, %v2018
        %v2020 = vpop.f32.mrb[0].mxu0
        %v2021 = vpop.f32.mrb[0].mxu0
        %v2022 = vadd.f32 0.0, %v2021
        %v2023 = vpop.f32.mrb[0].mxu0
        %2024 = vmatprep.mubr.bf16.mxu0 0
        %2025 = vmatmul.mubr.bf16.gmra.mrb[0].mxu0 %v1973
        %v2026 = vpop.f32.mrb[0].mxu0
        %v2027 = vadd.f32 0.0, %v2026
        %v2028 = vpop.f32.mrb[0].mxu0
        %v2029 = vpop.f32.mrb[0].mxu0
        %v2030 = vadd.f32 0.0, %v2029
        %v2031 = vpop.f32.mrb[0].mxu0
        %2032 = vmatprep.mubr.bf16.mxu0 0
        %2033 = vmatmul.mubr.bf16.gmra.mrb[0].mxu0 %v1976
        %v2034 = vpop.f32.mrb[0].mxu0
        %v2035 = vadd.f32 0.0, %v2034
        %v2036 = vpop.f32.mrb[0].mxu0
        %v2037 = vpop.f32.mrb[0].mxu0
        %v2038 = vadd.f32 0.0, %v2037
        %v2039 = vpop.f32.mrb[0].mxu0
        %2040 = vmatprep.mubr.bf16.mxu0 0
        %2041 = vmatmul.mubr.bf16.gmra.mrb[0].mxu0 %v1979
        %v2042 = vpop.f32.mrb[0].mxu0
        %v2043 = vadd.f32 0.0, %v2042
        %v2044 = vpop.f32.mrb[0].mxu0
        %v2045 = vpop.f32.mrb[0].mxu0
        %v2046 = vadd.f32 0.0, %v2045
        %v2047 = vpop.f32.mrb[0].mxu0
        %2048 = vdwg.mxu0
        %v2049 = vadd.f32 %v1716, %v2019
        %v2050 = vadd.f32 %v1719, %v2022
        %v2051 = vadd.f32 %v1724, %v2027
        %v2052 = vadd.f32 %v1727, %v2030
        %v2053 = vadd.f32 %v1732, %v2035
        %v2054 = vadd.f32 %v1735, %v2038
        %v2055 = vadd.f32 %v1740, %v2043
        %v2056 = vadd.f32 %v1743, %v2046
        %s2057 = smul.u32 %s409, 20
        %s2058 = smul.addr %s2057, 4
        %s2059 = scalar_lea.vmem [#allocation2], %s2058
        %v2060 = vld [vmem:[%s2059] sm:$0xf]
        %v2061 = vld [vmem:[%s2059 + $0x4] sm:$0x1]
        %v2062 = vld [vmem:[%s2059 + $0x8] sm:$0xf]
        %v2063 = vld [vmem:[%s2059 + $0xc] sm:$0x1]
        %v2064 = vld [vmem:[%s2059 + $0x10] sm:$0xf]
        %v2065 = vld [vmem:[%s2059 + $0x14] sm:$0x1]
        %v2066 = vld [vmem:[%s2059 + $0x18] sm:$0xf]
        %v2067 = vld [vmem:[%s2059 + $0x1c] sm:$0x1]
        %v2068 = vld [vmem:[%s2059 + $0x20] sm:$0xf]
        %v2069 = vld [vmem:[%s2059 + $0x24] sm:$0x1]
        %v2070 = vld [vmem:[%s2059 + $0x28] sm:$0xf]
        %v2071 = vld [vmem:[%s2059 + $0x2c] sm:$0x1]
        %v2072 = vld [vmem:[%s2059 + $0x30] sm:$0xf]
        %v2073 = vld [vmem:[%s2059 + $0x34] sm:$0x1]
        %v2074 = vld [vmem:[%s2059 + $0x38] sm:$0xf]
        %v2075 = vld [vmem:[%s2059 + $0x3c] sm:$0x1]
        %v2092 = vunpack.c.l.b16 %v2060
        %v2093 = vunpack.c.l.b16 %v2061
        %v2094 = vunpack.c.l.b16 %v2062
        %v2095 = vunpack.c.l.b16 %v2063
        %v2096 = vunpack.c.l.b16 %v2064
        %v2097 = vunpack.c.l.b16 %v2065
        %v2098 = vunpack.c.l.b16 %v2066
        %v2099 = vunpack.c.l.b16 %v2067
        %v2100 = vunpack.c.l.b16 %v2068
        %v2101 = vunpack.c.l.b16 %v2069
        %v2102 = vunpack.c.l.b16 %v2070
        %v2103 = vunpack.c.l.b16 %v2071
        %v2104 = vunpack.c.l.b16 %v2072
        %v2105 = vunpack.c.l.b16 %v2073
        %v2106 = vunpack.c.l.b16 %v2074
        %v2107 = vunpack.c.l.b16 %v2075
        %v2108 = vpack.c.b16 %v2093, %v2092
        %v2109 = vpack.c.b16 %v2095, %v2094
        %v2110 = vpack.c.b16 %v2097, %v2096
        %v2111 = vpack.c.b16 %v2099, %v2098
        %v2112 = vpack.c.b16 %v2101, %v2100
        %v2113 = vpack.c.b16 %v2103, %v2102
        %v2114 = vpack.c.b16 %v2105, %v2104
        %v2115 = vpack.c.b16 %v2107, %v2106
        %v2117 = vshrl.u32 %v2108, 16
        %v2119 = vshll.u32 %v2108, 16
        %v2121 = vrot.slane %v2119, 1
        %v2122 = vor.u32 %v2117, %v2121
        %v2124 = vshrl.u32 %v2109, 16
        %v2126 = vshll.u32 %v2109, 16
        %v2128 = vrot.slane %v2126, 1
        %v2129 = vor.u32 %v2124, %v2128
        %v2131 = vshrl.u32 %v2110, 16
        %v2133 = vshll.u32 %v2110, 16
        %v2135 = vrot.slane %v2133, 1
        %v2136 = vor.u32 %v2131, %v2135
        %v2138 = vshrl.u32 %v2111, 16
        %v2140 = vshll.u32 %v2111, 16
        %v2142 = vrot.slane %v2140, 1
        %v2143 = vor.u32 %v2138, %v2142
        %v2145 = vshrl.u32 %v2112, 16
        %v2147 = vshll.u32 %v2112, 16
        %v2149 = vrot.slane %v2147, 1
        %v2150 = vor.u32 %v2145, %v2149
        %v2152 = vshrl.u32 %v2113, 16
        %v2154 = vshll.u32 %v2113, 16
        %v2156 = vrot.slane %v2154, 1
        %v2157 = vor.u32 %v2152, %v2156
        %v2159 = vshrl.u32 %v2114, 16
        %v2161 = vshll.u32 %v2114, 16
        %v2163 = vrot.slane %v2161, 1
        %v2164 = vor.u32 %v2159, %v2163
        %v2166 = vshrl.u32 %v2115, 16
        %v2168 = vshll.u32 %v2115, 16
        %v2170 = vrot.slane %v2168, 1
        %v2171 = vor.u32 %v2166, %v2170
        %2172 = vrot.lane.b32.xlu0 %v2122, 4
        %v2173 = vpop.permute.xlu0 %2172
        %2174 = vrot.lane.b32.xlu0 %v2129, 4
        %v2175 = vpop.permute.xlu0 %2174
        %2176 = vrot.lane.b32.xlu0 %v2136, 4
        %v2177 = vpop.permute.xlu0 %2176
        %2178 = vrot.lane.b32.xlu0 %v2143, 4
        %v2179 = vpop.permute.xlu0 %2178
        %2180 = vrot.lane.b32.xlu0 %v2150, 4
        %v2181 = vpop.permute.xlu0 %2180
        %2182 = vrot.lane.b32.xlu0 %v2157, 4
        %v2183 = vpop.permute.xlu0 %2182
        %2184 = vrot.lane.b32.xlu0 %v2164, 4
        %v2185 = vpop.permute.xlu0 %2184
        %2186 = vrot.lane.b32.xlu0 %v2171, 4
        %v2187 = vpop.permute.xlu0 %2186
        %v2188 = vrot.slane %v2108, 1
        %v2189 = vrot.slane %v2109, 1
        %v2190 = vrot.slane %v2110, 1
        %v2191 = vrot.slane %v2111, 1
        %v2192 = vrot.slane %v2112, 1
        %v2193 = vrot.slane %v2113, 1
        %v2194 = vrot.slane %v2114, 1
        %v2195 = vrot.slane %v2115, 1
        %2196 = vrot.lane.b32.xlu0 %v2188, 8
        %v2197 = vpop.permute.xlu0 %2196
        %2198 = vrot.lane.b32.xlu0 %v2189, 8
        %v2199 = vpop.permute.xlu0 %2198
        %2200 = vrot.lane.b32.xlu0 %v2190, 8
        %v2201 = vpop.permute.xlu0 %2200
        %2202 = vrot.lane.b32.xlu0 %v2191, 8
        %v2203 = vpop.permute.xlu0 %2202
        %2204 = vrot.lane.b32.xlu0 %v2192, 8
        %v2205 = vpop.permute.xlu0 %2204
        %2206 = vrot.lane.b32.xlu0 %v2193, 8
        %v2207 = vpop.permute.xlu0 %2206
        %2208 = vrot.lane.b32.xlu0 %v2194, 8
        %v2209 = vpop.permute.xlu0 %2208
        %2210 = vrot.lane.b32.xlu0 %v2195, 8
        %v2211 = vpop.permute.xlu0 %2210
        %v2214 = vsel %vm1292, %v2060, %v2173
        %v2217 = vsel %vm1292, %v2062, %v2175
        %v2220 = vsel %vm1292, %v2064, %v2177
        %v2223 = vsel %vm1292, %v2066, %v2179
        %v2226 = vsel %vm1292, %v2068, %v2181
        %v2229 = vsel %vm1292, %v2070, %v2183
        %v2232 = vsel %vm1292, %v2072, %v2185
        %v2235 = vsel %vm1292, %v2074, %v2187
        %v2237 = vsel %vm1317, %v2214, %v2197
        %v2239 = vsel %vm1317, %v2217, %v2199
        %v2241 = vsel %vm1317, %v2220, %v2201
        %v2243 = vsel %vm1317, %v2223, %v2203
        %v2245 = vsel %vm1317, %v2226, %v2205
        %v2247 = vsel %vm1317, %v2229, %v2207
        %v2249 = vsel %vm1317, %v2232, %v2209
        %v2251 = vsel %vm1317, %v2235, %v2211
        %s2252 = scalar_lea.vmem %s4, 24
        %v2253 = vld [vmem:[%s2252] sm:$0xf]
        %v2254 = vld [vmem:[%s2252 + $0x4] sm:$0x3]
        %v2263 = vunpack.c.l.b16 %v2237
        %v2264 = vunpack.c.l.b16 %v2239
        %v2265 = vunpack.c.l.b16 %v2241
        %v2266 = vunpack.c.l.b16 %v2243
        %v2267 = vunpack.c.l.b16 %v2245
        %v2268 = vunpack.c.l.b16 %v2247
        %v2269 = vunpack.c.l.b16 %v2249
        %v2270 = vunpack.c.l.b16 %v2251
        %v2271 = vpack.c.b16 %v2264, %v2263
        %v2272 = vpack.c.b16 %v2266, %v2265
        %v2273 = vpack.c.b16 %v2268, %v2267
        %v2274 = vpack.c.b16 %v2270, %v2269
        %v2277 = vunpack.c.l.b16 %v2253
        %v2278 = vunpack.c.l.b16 %v2254
        %v2279 = vpack.c.b16 %v2278, %v2277
        %v2281 = vsel %vm1559, %v2271, 0
        %v2284 = vsel %vm1559, %v2272, 0
        %v2287 = vsel %vm1559, %v2273, 0
        %v2290 = vsel %vm1559, %v2274, 0
        %v2293 = vsel %vm1572, %v2279, 0
        %2295 = vmatprep.subr.bf16.mxu0 0
        %2296 = vmatpush1.bf16.msra.mxu0 %v2293
        %2297 = vmatprep.subr.bf16.mxu0 0
        %2298 = vmatpush1.bf16.msra.mxu0 0
        %2299 = vmatprep.subr.bf16.mxu0 0
        %2300 = vmatpush1.bf16.msra.mxu0 0
        %2301 = vmatprep.subr.bf16.mxu0 0
        %2302 = vmatpush1.bf16.msra.mxu0 0
        %2303 = vmatprep.subr.bf16.mxu0 0
        %2304 = vmatpush1.bf16.msra.mxu0 0
        %2305 = vmatprep.subr.bf16.mxu0 0
        %2306 = vmatpush1.bf16.msra.mxu0 0
        %2307 = vmatprep.subr.bf16.mxu0 0
        %2308 = vmatpush1.bf16.msra.mxu0 0
        %2309 = vmatprep.subr.bf16.mxu0 0
        %2310 = vmatpush1.bf16.msra.mxu0 0
        %2311 = vmatprep.subr.bf16.mxu0 0
        %2312 = vmatpush1.bf16.msra.mxu0 0
        %2313 = vmatprep.subr.bf16.mxu0 0
        %2314 = vmatpush1.bf16.msra.mxu0 0
        %2315 = vmatprep.subr.bf16.mxu0 0
        %2316 = vmatpush1.bf16.msra.mxu0 0
        %2317 = vmatprep.subr.bf16.mxu0 0
        %2318 = vmatpush1.bf16.msra.mxu0 0
        %2319 = vmatprep.subr.bf16.mxu0 0
        %2320 = vmatpush1.bf16.msra.mxu0 0
        %2321 = vmatprep.subr.bf16.mxu0 0
        %2322 = vmatpush1.bf16.msra.mxu0 0
        %2323 = vmatprep.subr.bf16.mxu0 0
        %2324 = vmatpush1.bf16.msra.mxu0 0
        %2325 = vmatprep.subr.bf16.mxu0 0
        %2326 = vmatpush1.bf16.msra.mxu0 0
        %2327 = vmatprep.mubr.bf16.mxu0 0
        %2328 = vmatmul.mubr.bf16.gmra.mrb[0].mxu0 %v2281
        %v2329 = vpop.f32.mrb[0].mxu0
        %v2330 = vadd.f32 0.0, %v2329
        %v2331 = vpop.f32.mrb[0].mxu0
        %v2332 = vpop.f32.mrb[0].mxu0
        %v2333 = vadd.f32 0.0, %v2332
        %v2334 = vpop.f32.mrb[0].mxu0
        %2335 = vmatprep.mubr.bf16.mxu0 0
        %2336 = vmatmul.mubr.bf16.gmra.mrb[0].mxu0 %v2284
        %v2337 = vpop.f32.mrb[0].mxu0
        %v2338 = vadd.f32 0.0, %v2337
        %v2339 = vpop.f32.mrb[0].mxu0
        %v2340 = vpop.f32.mrb[0].mxu0
        %v2341 = vadd.f32 0.0, %v2340
        %v2342 = vpop.f32.mrb[0].mxu0
        %2343 = vmatprep.mubr.bf16.mxu0 0
        %2344 = vmatmul.mubr.bf16.gmra.mrb[0].mxu0 %v2287
        %v2345 = vpop.f32.mrb[0].mxu0
        %v2346 = vadd.f32 0.0, %v2345
        %v2347 = vpop.f32.mrb[0].mxu0
        %v2348 = vpop.f32.mrb[0].mxu0
        %v2349 = vadd.f32 0.0, %v2348
        %v2350 = vpop.f32.mrb[0].mxu0
        %2351 = vmatprep.mubr.bf16.mxu0 0
        %2352 = vmatmul.mubr.bf16.gmra.mrb[0].mxu0 %v2290
        %v2353 = vpop.f32.mrb[0].mxu0
        %v2354 = vadd.f32 0.0, %v2353
        %v2355 = vpop.f32.mrb[0].mxu0
        %v2356 = vpop.f32.mrb[0].mxu0
        %v2357 = vadd.f32 0.0, %v2356
        %v2358 = vpop.f32.mrb[0].mxu0
        %2359 = vdwg.mxu0
        %v2360 = vadd.f32 %v2049, %v2330
        %v2361 = vadd.f32 %v2050, %v2333
        %v2362 = vadd.f32 %v2051, %v2338
        %v2363 = vadd.f32 %v2052, %v2341
        %v2364 = vadd.f32 %v2053, %v2346
        %v2365 = vadd.f32 %v2054, %v2349
        %v2366 = vadd.f32 %v2055, %v2354
        %v2367 = vadd.f32 %v2056, %v2357
        %s2368 = sadd.s32 2, %s2057
        %s2369 = smul.addr %s2368, 4
        %s2370 = scalar_lea.vmem [#allocation2], %s2369
        %v2371 = vld [vmem:[%s2370] sm:$0xf]
        %v2372 = vld [vmem:[%s2370 + $0x4] sm:$0x1]
        %v2373 = vld [vmem:[%s2370 + $0x8] sm:$0xf]
        %v2374 = vld [vmem:[%s2370 + $0xc] sm:$0x1]
        %v2375 = vld [vmem:[%s2370 + $0x10] sm:$0xf]
        %v2376 = vld [vmem:[%s2370 + $0x14] sm:$0x1]
        %v2377 = vld [vmem:[%s2370 + $0x18] sm:$0xf]
        %v2378 = vld [vmem:[%s2370 + $0x1c] sm:$0x1]
        %v2379 = vld [vmem:[%s2370 + $0x20] sm:$0xf]
        %v2380 = vld [vmem:[%s2370 + $0x24] sm:$0x1]
        %v2381 = vld [vmem:[%s2370 + $0x28] sm:$0xf]
        %v2382 = vld [vmem:[%s2370 + $0x2c] sm:$0x1]
        %v2383 = vld [vmem:[%s2370 + $0x30] sm:$0xf]
        %v2384 = vld [vmem:[%s2370 + $0x34] sm:$0x1]
        %v2385 = vld [vmem:[%s2370 + $0x38] sm:$0xf]
        %v2386 = vld [vmem:[%s2370 + $0x3c] sm:$0x1]
        %v2403 = vunpack.c.l.b16 %v2371
        %v2404 = vunpack.c.l.b16 %v2372
        %v2405 = vunpack.c.l.b16 %v2373
        %v2406 = vunpack.c.l.b16 %v2374
        %v2407 = vunpack.c.l.b16 %v2375
        %v2408 = vunpack.c.l.b16 %v2376
        %v2409 = vunpack.c.l.b16 %v2377
        %v2410 = vunpack.c.l.b16 %v2378
        %v2411 = vunpack.c.l.b16 %v2379
        %v2412 = vunpack.c.l.b16 %v2380
        %v2413 = vunpack.c.l.b16 %v2381
        %v2414 = vunpack.c.l.b16 %v2382
        %v2415 = vunpack.c.l.b16 %v2383
        %v2416 = vunpack.c.l.b16 %v2384
        %v2417 = vunpack.c.l.b16 %v2385
        %v2418 = vunpack.c.l.b16 %v2386
        %v2419 = vpack.c.b16 %v2404, %v2403
        %v2420 = vpack.c.b16 %v2406, %v2405
        %v2421 = vpack.c.b16 %v2408, %v2407
        %v2422 = vpack.c.b16 %v2410, %v2409
        %v2423 = vpack.c.b16 %v2412, %v2411
        %v2424 = vpack.c.b16 %v2414, %v2413
        %v2425 = vpack.c.b16 %v2416, %v2415
        %v2426 = vpack.c.b16 %v2418, %v2417
        %v2428 = vshrl.u32 %v2419, 16
        %v2430 = vshll.u32 %v2419, 16
        %v2432 = vrot.slane %v2430, 1
        %v2433 = vor.u32 %v2428, %v2432
        %v2435 = vshrl.u32 %v2420, 16
        %v2437 = vshll.u32 %v2420, 16
        %v2439 = vrot.slane %v2437, 1
        %v2440 = vor.u32 %v2435, %v2439
        %v2442 = vshrl.u32 %v2421, 16
        %v2444 = vshll.u32 %v2421, 16
        %v2446 = vrot.slane %v2444, 1
        %v2447 = vor.u32 %v2442, %v2446
        %v2449 = vshrl.u32 %v2422, 16
        %v2451 = vshll.u32 %v2422, 16
        %v2453 = vrot.slane %v2451, 1
        %v2454 = vor.u32 %v2449, %v2453
        %v2456 = vshrl.u32 %v2423, 16
        %v2458 = vshll.u32 %v2423, 16
        %v2460 = vrot.slane %v2458, 1
        %v2461 = vor.u32 %v2456, %v2460
        %v2463 = vshrl.u32 %v2424, 16
        %v2465 = vshll.u32 %v2424, 16
        %v2467 = vrot.slane %v2465, 1
        %v2468 = vor.u32 %v2463, %v2467
        %v2470 = vshrl.u32 %v2425, 16
        %v2472 = vshll.u32 %v2425, 16
        %v2474 = vrot.slane %v2472, 1
        %v2475 = vor.u32 %v2470, %v2474
        %v2477 = vshrl.u32 %v2426, 16
        %v2479 = vshll.u32 %v2426, 16
        %v2481 = vrot.slane %v2479, 1
        %v2482 = vor.u32 %v2477, %v2481
        %2483 = vrot.lane.b32.xlu0 %v2433, 4
        %v2484 = vpop.permute.xlu0 %2483
        %2485 = vrot.lane.b32.xlu0 %v2440, 4
        %v2486 = vpop.permute.xlu0 %2485
        %2487 = vrot.lane.b32.xlu0 %v2447, 4
        %v2488 = vpop.permute.xlu0 %2487
        %2489 = vrot.lane.b32.xlu0 %v2454, 4
        %v2490 = vpop.permute.xlu0 %2489
        %2491 = vrot.lane.b32.xlu0 %v2461, 4
        %v2492 = vpop.permute.xlu0 %2491
        %2493 = vrot.lane.b32.xlu0 %v2468, 4
        %v2494 = vpop.permute.xlu0 %2493
        %2495 = vrot.lane.b32.xlu0 %v2475, 4
        %v2496 = vpop.permute.xlu0 %2495
        %2497 = vrot.lane.b32.xlu0 %v2482, 4
        %v2498 = vpop.permute.xlu0 %2497
        %v2499 = vrot.slane %v2419, 1
        %v2500 = vrot.slane %v2420, 1
        %v2501 = vrot.slane %v2421, 1
        %v2502 = vrot.slane %v2422, 1
        %v2503 = vrot.slane %v2423, 1
        %v2504 = vrot.slane %v2424, 1
        %v2505 = vrot.slane %v2425, 1
        %v2506 = vrot.slane %v2426, 1
        %2507 = vrot.lane.b32.xlu0 %v2499, 8
        %v2508 = vpop.permute.xlu0 %2507
        %2509 = vrot.lane.b32.xlu0 %v2500, 8
        %v2510 = vpop.permute.xlu0 %2509
        %2511 = vrot.lane.b32.xlu0 %v2501, 8
        %v2512 = vpop.permute.xlu0 %2511
        %2513 = vrot.lane.b32.xlu0 %v2502, 8
        %v2514 = vpop.permute.xlu0 %2513
        %2515 = vrot.lane.b32.xlu0 %v2503, 8
        %v2516 = vpop.permute.xlu0 %2515
        %2517 = vrot.lane.b32.xlu0 %v2504, 8
        %v2518 = vpop.permute.xlu0 %2517
        %2519 = vrot.lane.b32.xlu0 %v2505, 8
        %v2520 = vpop.permute.xlu0 %2519
        %2521 = vrot.lane.b32.xlu0 %v2506, 8
        %v2522 = vpop.permute.xlu0 %2521
        %v2525 = vsel %vm1292, %v2371, %v2484
        %v2528 = vsel %vm1292, %v2373, %v2486
        %v2531 = vsel %vm1292, %v2375, %v2488
        %v2534 = vsel %vm1292, %v2377, %v2490
        %v2537 = vsel %vm1292, %v2379, %v2492
        %v2540 = vsel %vm1292, %v2381, %v2494
        %v2543 = vsel %vm1292, %v2383, %v2496
        %v2546 = vsel %vm1292, %v2385, %v2498
        %v2548 = vsel %vm1317, %v2525, %v2508
        %v2550 = vsel %vm1317, %v2528, %v2510
        %v2552 = vsel %vm1317, %v2531, %v2512
        %v2554 = vsel %vm1317, %v2534, %v2514
        %v2556 = vsel %vm1317, %v2537, %v2516
        %v2558 = vsel %vm1317, %v2540, %v2518
        %v2560 = vsel %vm1317, %v2543, %v2520
        %v2562 = vsel %vm1317, %v2546, %v2522
        %s2563 = scalar_lea.vmem %s4, 32
        %v2564 = vld [vmem:[%s2563] sm:$0xf]
        %v2565 = vld [vmem:[%s2563 + $0x4] sm:$0x3]
        %v2574 = vunpack.c.l.b16 %v2548
        %v2575 = vunpack.c.l.b16 %v2550
        %v2576 = vunpack.c.l.b16 %v2552
        %v2577 = vunpack.c.l.b16 %v2554
        %v2578 = vunpack.c.l.b16 %v2556
        %v2579 = vunpack.c.l.b16 %v2558
        %v2580 = vunpack.c.l.b16 %v2560
        %v2581 = vunpack.c.l.b16 %v2562
        %v2582 = vpack.c.b16 %v2575, %v2574
        %v2583 = vpack.c.b16 %v2577, %v2576
        %v2584 = vpack.c.b16 %v2579, %v2578
        %v2585 = vpack.c.b16 %v2581, %v2580
        %v2588 = vunpack.c.l.b16 %v2564
        %v2589 = vunpack.c.l.b16 %v2565
        %v2590 = vpack.c.b16 %v2589, %v2588
        %v2592 = vsel %vm1559, %v2582, 0
        %v2595 = vsel %vm1559, %v2583, 0
        %v2598 = vsel %vm1559, %v2584, 0
        %v2601 = vsel %vm1559, %v2585, 0
        %v2604 = vsel %vm1572, %v2590, 0
        %2606 = vmatprep.subr.bf16.mxu0 0
        %2607 = vmatpush1.bf16.msra.mxu0 %v2604
        %2608 = vmatprep.subr.bf16.mxu0 0
        %2609 = vmatpush1.bf16.msra.mxu0 0
        %2610 = vmatprep.subr.bf16.mxu0 0
        %2611 = vmatpush1.bf16.msra.mxu0 0
        %2612 = vmatprep.subr.bf16.mxu0 0
        %2613 = vmatpush1.bf16.msra.mxu0 0
        %2614 = vmatprep.subr.bf16.mxu0 0
        %2615 = vmatpush1.bf16.msra.mxu0 0
        %2616 = vmatprep.subr.bf16.mxu0 0
        %2617 = vmatpush1.bf16.msra.mxu0 0
        %2618 = vmatprep.subr.bf16.mxu0 0
        %2619 = vmatpush1.bf16.msra.mxu0 0
        %2620 = vmatprep.subr.bf16.mxu0 0
        %2621 = vmatpush1.bf16.msra.mxu0 0
        %2622 = vmatprep.subr.bf16.mxu0 0
        %2623 = vmatpush1.bf16.msra.mxu0 0
        %2624 = vmatprep.subr.bf16.mxu0 0
        %2625 = vmatpush1.bf16.msra.mxu0 0
        %2626 = vmatprep.subr.bf16.mxu0 0
        %2627 = vmatpush1.bf16.msra.mxu0 0
        %2628 = vmatprep.subr.bf16.mxu0 0
        %2629 = vmatpush1.bf16.msra.mxu0 0
        %2630 = vmatprep.subr.bf16.mxu0 0
        %2631 = vmatpush1.bf16.msra.mxu0 0
        %2632 = vmatprep.subr.bf16.mxu0 0
        %2633 = vmatpush1.bf16.msra.mxu0 0
        %2634 = vmatprep.subr.bf16.mxu0 0
        %2635 = vmatpush1.bf16.msra.mxu0 0
        %2636 = vmatprep.subr.bf16.mxu0 0
        %2637 = vmatpush1.bf16.msra.mxu0 0
        %2638 = vmatprep.mubr.bf16.mxu0 0
        %2639 = vmatmul.mubr.bf16.gmra.mrb[0].mxu0 %v2592
        %v2640 = vpop.f32.mrb[0].mxu0
        %v2641 = vadd.f32 0.0, %v2640
        %v2642 = vpop.f32.mrb[0].mxu0
        %v2643 = vpop.f32.mrb[0].mxu0
        %v2644 = vadd.f32 0.0, %v2643
        %v2645 = vpop.f32.mrb[0].mxu0
        %2646 = vmatprep.mubr.bf16.mxu0 0
        %2647 = vmatmul.mubr.bf16.gmra.mrb[0].mxu0 %v2595
        %v2648 = vpop.f32.mrb[0].mxu0
        %v2649 = vadd.f32 0.0, %v2648
        %v2650 = vpop.f32.mrb[0].mxu0
        %v2651 = vpop.f32.mrb[0].mxu0
        %v2652 = vadd.f32 0.0, %v2651
        %v2653 = vpop.f32.mrb[0].mxu0
        %2654 = vmatprep.mubr.bf16.mxu0 0
        %2655 = vmatmul.mubr.bf16.gmra.mrb[0].mxu0 %v2598
        %v2656 = vpop.f32.mrb[0].mxu0
        %v2657 = vadd.f32 0.0, %v2656
        %v2658 = vpop.f32.mrb[0].mxu0
        %v2659 = vpop.f32.mrb[0].mxu0
        %v2660 = vadd.f32 0.0, %v2659
        %v2661 = vpop.f32.mrb[0].mxu0
        %2662 = vmatprep.mubr.bf16.mxu0 0
        %2663 = vmatmul.mubr.bf16.gmra.mrb[0].mxu0 %v2601
        %v2664 = vpop.f32.mrb[0].mxu0
        %v2665 = vadd.f32 0.0, %v2664
        %v2666 = vpop.f32.mrb[0].mxu0
        %v2667 = vpop.f32.mrb[0].mxu0
        %v2668 = vadd.f32 0.0, %v2667
        %v2669 = vpop.f32.mrb[0].mxu0
        %2670 = vdwg.mxu0
        %v2671 = vadd.f32 %v2360, %v2641
        %v2672 = vadd.f32 %v2361, %v2644
        %v2673 = vadd.f32 %v2362, %v2649
        %v2674 = vadd.f32 %v2363, %v2652
        %v2675 = vadd.f32 %v2364, %v2657
        %v2676 = vadd.f32 %v2365, %v2660
        %v2677 = vadd.f32 %v2366, %v2665
        %v2678 = vadd.f32 %v2367, %v2668
        %s2679 = sadd.s32 4, %s2057
        %s2680 = smul.addr %s2679, 4
        %s2681 = scalar_lea.vmem [#allocation2], %s2680
        %v2682 = vld [vmem:[%s2681] sm:$0xf]
        %v2683 = vld [vmem:[%s2681 + $0x4] sm:$0x1]
        %v2684 = vld [vmem:[%s2681 + $0x8] sm:$0xf]
        %v2685 = vld [vmem:[%s2681 + $0xc] sm:$0x1]
        %v2686 = vld [vmem:[%s2681 + $0x10] sm:$0xf]
        %v2687 = vld [vmem:[%s2681 + $0x14] sm:$0x1]
        %v2688 = vld [vmem:[%s2681 + $0x18] sm:$0xf]
        %v2689 = vld [vmem:[%s2681 + $0x1c] sm:$0x1]
        %v2690 = vld [vmem:[%s2681 + $0x20] sm:$0xf]
        %v2691 = vld [vmem:[%s2681 + $0x24] sm:$0x1]
        %v2692 = vld [vmem:[%s2681 + $0x28] sm:$0xf]
        %v2693 = vld [vmem:[%s2681 + $0x2c] sm:$0x1]
        %v2694 = vld [vmem:[%s2681 + $0x30] sm:$0xf]
        %v2695 = vld [vmem:[%s2681 + $0x34] sm:$0x1]
        %v2696 = vld [vmem:[%s2681 + $0x38] sm:$0xf]
        %v2697 = vld [vmem:[%s2681 + $0x3c] sm:$0x1]
        %v2714 = vunpack.c.l.b16 %v2682
        %v2715 = vunpack.c.l.b16 %v2683
        %v2716 = vunpack.c.l.b16 %v2684
        %v2717 = vunpack.c.l.b16 %v2685
        %v2718 = vunpack.c.l.b16 %v2686
        %v2719 = vunpack.c.l.b16 %v2687
        %v2720 = vunpack.c.l.b16 %v2688
        %v2721 = vunpack.c.l.b16 %v2689
        %v2722 = vunpack.c.l.b16 %v2690
        %v2723 = vunpack.c.l.b16 %v2691
        %v2724 = vunpack.c.l.b16 %v2692
        %v2725 = vunpack.c.l.b16 %v2693
        %v2726 = vunpack.c.l.b16 %v2694
        %v2727 = vunpack.c.l.b16 %v2695
        %v2728 = vunpack.c.l.b16 %v2696
        %v2729 = vunpack.c.l.b16 %v2697
        %v2730 = vpack.c.b16 %v2715, %v2714
        %v2731 = vpack.c.b16 %v2717, %v2716
        %v2732 = vpack.c.b16 %v2719, %v2718
        %v2733 = vpack.c.b16 %v2721, %v2720
        %v2734 = vpack.c.b16 %v2723, %v2722
        %v2735 = vpack.c.b16 %v2725, %v2724
        %v2736 = vpack.c.b16 %v2727, %v2726
        %v2737 = vpack.c.b16 %v2729, %v2728
        %v2739 = vshrl.u32 %v2730, 16
        %v2741 = vshll.u32 %v2730, 16
        %v2743 = vrot.slane %v2741, 1
        %v2744 = vor.u32 %v2739, %v2743
        %v2746 = vshrl.u32 %v2731, 16
        %v2748 = vshll.u32 %v2731, 16
        %v2750 = vrot.slane %v2748, 1
        %v2751 = vor.u32 %v2746, %v2750
        %v2753 = vshrl.u32 %v2732, 16
        %v2755 = vshll.u32 %v2732, 16
        %v2757 = vrot.slane %v2755, 1
        %v2758 = vor.u32 %v2753, %v2757
        %v2760 = vshrl.u32 %v2733, 16
        %v2762 = vshll.u32 %v2733, 16
        %v2764 = vrot.slane %v2762, 1
        %v2765 = vor.u32 %v2760, %v2764
        %v2767 = vshrl.u32 %v2734, 16
        %v2769 = vshll.u32 %v2734, 16
        %v2771 = vrot.slane %v2769, 1
        %v2772 = vor.u32 %v2767, %v2771
        %v2774 = vshrl.u32 %v2735, 16
        %v2776 = vshll.u32 %v2735, 16
        %v2778 = vrot.slane %v2776, 1
        %v2779 = vor.u32 %v2774, %v2778
        %v2781 = vshrl.u32 %v2736, 16
        %v2783 = vshll.u32 %v2736, 16
        %v2785 = vrot.slane %v2783, 1
        %v2786 = vor.u32 %v2781, %v2785
        %v2788 = vshrl.u32 %v2737, 16
        %v2790 = vshll.u32 %v2737, 16
        %v2792 = vrot.slane %v2790, 1
        %v2793 = vor.u32 %v2788, %v2792
        %2794 = vrot.lane.b32.xlu0 %v2744, 4
        %v2795 = vpop.permute.xlu0 %2794
        %2796 = vrot.lane.b32.xlu0 %v2751, 4
        %v2797 = vpop.permute.xlu0 %2796
        %2798 = vrot.lane.b32.xlu0 %v2758, 4
        %v2799 = vpop.permute.xlu0 %2798
        %2800 = vrot.lane.b32.xlu0 %v2765, 4
        %v2801 = vpop.permute.xlu0 %2800
        %2802 = vrot.lane.b32.xlu0 %v2772, 4
        %v2803 = vpop.permute.xlu0 %2802
        %2804 = vrot.lane.b32.xlu0 %v2779, 4
        %v2805 = vpop.permute.xlu0 %2804
        %2806 = vrot.lane.b32.xlu0 %v2786, 4
        %v2807 = vpop.permute.xlu0 %2806
        %2808 = vrot.lane.b32.xlu0 %v2793, 4
        %v2809 = vpop.permute.xlu0 %2808
        %v2810 = vrot.slane %v2730, 1
        %v2811 = vrot.slane %v2731, 1
        %v2812 = vrot.slane %v2732, 1
        %v2813 = vrot.slane %v2733, 1
        %v2814 = vrot.slane %v2734, 1
        %v2815 = vrot.slane %v2735, 1
        %v2816 = vrot.slane %v2736, 1
        %v2817 = vrot.slane %v2737, 1
        %2818 = vrot.lane.b32.xlu0 %v2810, 8
        %v2819 = vpop.permute.xlu0 %2818
        %2820 = vrot.lane.b32.xlu0 %v2811, 8
        %v2821 = vpop.permute.xlu0 %2820
        %2822 = vrot.lane.b32.xlu0 %v2812, 8
        %v2823 = vpop.permute.xlu0 %2822
        %2824 = vrot.lane.b32.xlu0 %v2813, 8
        %v2825 = vpop.permute.xlu0 %2824
        %2826 = vrot.lane.b32.xlu0 %v2814, 8
        %v2827 = vpop.permute.xlu0 %2826
        %2828 = vrot.lane.b32.xlu0 %v2815, 8
        %v2829 = vpop.permute.xlu0 %2828
        %2830 = vrot.lane.b32.xlu0 %v2816, 8
        %v2831 = vpop.permute.xlu0 %2830
        %2832 = vrot.lane.b32.xlu0 %v2817, 8
        %v2833 = vpop.permute.xlu0 %2832
        %v2836 = vsel %vm1292, %v2682, %v2795
        %v2839 = vsel %vm1292, %v2684, %v2797
        %v2842 = vsel %vm1292, %v2686, %v2799
        %v2845 = vsel %vm1292, %v2688, %v2801
        %v2848 = vsel %vm1292, %v2690, %v2803
        %v2851 = vsel %vm1292, %v2692, %v2805
        %v2854 = vsel %vm1292, %v2694, %v2807
        %v2857 = vsel %vm1292, %v2696, %v2809
        %v2859 = vsel %vm1317, %v2836, %v2819
        %v2861 = vsel %vm1317, %v2839, %v2821
        %v2863 = vsel %vm1317, %v2842, %v2823
        %v2865 = vsel %vm1317, %v2845, %v2825
        %v2867 = vsel %vm1317, %v2848, %v2827
        %v2869 = vsel %vm1317, %v2851, %v2829
        %v2871 = vsel %vm1317, %v2854, %v2831
        %v2873 = vsel %vm1317, %v2857, %v2833
        %s2874 = scalar_lea.vmem %s4, 40
        %v2875 = vld [vmem:[%s2874] sm:$0xf]
        %v2876 = vld [vmem:[%s2874 + $0x4] sm:$0x3]
        %v2885 = vunpack.c.l.b16 %v2859
        %v2886 = vunpack.c.l.b16 %v2861
        %v2887 = vunpack.c.l.b16 %v2863
        %v2888 = vunpack.c.l.b16 %v2865
        %v2889 = vunpack.c.l.b16 %v2867
        %v2890 = vunpack.c.l.b16 %v2869
        %v2891 = vunpack.c.l.b16 %v2871
        %v2892 = vunpack.c.l.b16 %v2873
        %v2893 = vpack.c.b16 %v2886, %v2885
        %v2894 = vpack.c.b16 %v2888, %v2887
        %v2895 = vpack.c.b16 %v2890, %v2889
        %v2896 = vpack.c.b16 %v2892, %v2891
        %v2899 = vunpack.c.l.b16 %v2875
        %v2900 = vunpack.c.l.b16 %v2876
        %v2901 = vpack.c.b16 %v2900, %v2899
        %v2903 = vsel %vm1559, %v2893, 0
        %v2906 = vsel %vm1559, %v2894, 0
        %v2909 = vsel %vm1559, %v2895, 0
        %v2912 = vsel %vm1559, %v2896, 0
        %v2915 = vsel %vm1572, %v2901, 0
        %2917 = vmatprep.subr.bf16.mxu0 0
        %2918 = vmatpush1.bf16.msra.mxu0 %v2915
        %2919 = vmatprep.subr.bf16.mxu0 0
        %2920 = vmatpush1.bf16.msra.mxu0 0
        %2921 = vmatprep.subr.bf16.mxu0 0
        %2922 = vmatpush1.bf16.msra.mxu0 0
        %2923 = vmatprep.subr.bf16.mxu0 0
        %2924 = vmatpush1.bf16.msra.mxu0 0
        %2925 = vmatprep.subr.bf16.mxu0 0
        %2926 = vmatpush1.bf16.msra.mxu0 0
        %2927 = vmatprep.subr.bf16.mxu0 0
        %2928 = vmatpush1.bf16.msra.mxu0 0
        %2929 = vmatprep.subr.bf16.mxu0 0
        %2930 = vmatpush1.bf16.msra.mxu0 0
        %2931 = vmatprep.subr.bf16.mxu0 0
        %2932 = vmatpush1.bf16.msra.mxu0 0
        %2933 = vmatprep.subr.bf16.mxu0 0
        %2934 = vmatpush1.bf16.msra.mxu0 0
        %2935 = vmatprep.subr.bf16.mxu0 0
        %2936 = vmatpush1.bf16.msra.mxu0 0
        %2937 = vmatprep.subr.bf16.mxu0 0
        %2938 = vmatpush1.bf16.msra.mxu0 0
        %2939 = vmatprep.subr.bf16.mxu0 0
        %2940 = vmatpush1.bf16.msra.mxu0 0
        %2941 = vmatprep.subr.bf16.mxu0 0
        %2942 = vmatpush1.bf16.msra.mxu0 0
        %2943 = vmatprep.subr.bf16.mxu0 0
        %2944 = vmatpush1.bf16.msra.mxu0 0
        %2945 = vmatprep.subr.bf16.mxu0 0
        %2946 = vmatpush1.bf16.msra.mxu0 0
        %2947 = vmatprep.subr.bf16.mxu0 0
        %2948 = vmatpush1.bf16.msra.mxu0 0
        %2949 = vmatprep.mubr.bf16.mxu0 0
        %2950 = vmatmul.mubr.bf16.gmra.mrb[0].mxu0 %v2903
        %v2951 = vpop.f32.mrb[0].mxu0
        %v2952 = vadd.f32 0.0, %v2951
        %v2953 = vpop.f32.mrb[0].mxu0
        %v2954 = vpop.f32.mrb[0].mxu0
        %v2955 = vadd.f32 0.0, %v2954
        %v2956 = vpop.f32.mrb[0].mxu0
        %2957 = vmatprep.mubr.bf16.mxu0 0
        %2958 = vmatmul.mubr.bf16.gmra.mrb[0].mxu0 %v2906
        %v2959 = vpop.f32.mrb[0].mxu0
        %v2960 = vadd.f32 0.0, %v2959
        %v2961 = vpop.f32.mrb[0].mxu0
        %v2962 = vpop.f32.mrb[0].mxu0
        %v2963 = vadd.f32 0.0, %v2962
        %v2964 = vpop.f32.mrb[0].mxu0
        %2965 = vmatprep.mubr.bf16.mxu0 0
        %2966 = vmatmul.mubr.bf16.gmra.mrb[0].mxu0 %v2909
        %v2967 = vpop.f32.mrb[0].mxu0
        %v2968 = vadd.f32 0.0, %v2967
        %v2969 = vpop.f32.mrb[0].mxu0
        %v2970 = vpop.f32.mrb[0].mxu0
        %v2971 = vadd.f32 0.0, %v2970
        %v2972 = vpop.f32.mrb[0].mxu0
        %2973 = vmatprep.mubr.bf16.mxu0 0
        %2974 = vmatmul.mubr.bf16.gmra.mrb[0].mxu0 %v2912
        %v2975 = vpop.f32.mrb[0].mxu0
        %v2976 = vadd.f32 0.0, %v2975
        %v2977 = vpop.f32.mrb[0].mxu0
        %v2978 = vpop.f32.mrb[0].mxu0
        %v2979 = vadd.f32 0.0, %v2978
        %v2980 = vpop.f32.mrb[0].mxu0
        %2981 = vdwg.mxu0
        %v2982 = vadd.f32 %v2671, %v2952
        %v2983 = vadd.f32 %v2672, %v2955
        %v2984 = vadd.f32 %v2673, %v2960
        %v2985 = vadd.f32 %v2674, %v2963
        %v2986 = vadd.f32 %v2675, %v2968
        %v2987 = vadd.f32 %v2676, %v2971
        %v2988 = vadd.f32 %v2677, %v2976
        %v2989 = vadd.f32 %v2678, %v2979
        %s2990 = smul.u32 %s417, 20
        %s2991 = smul.addr %s2990, 4
        %s2992 = scalar_lea.vmem [#allocation2], %s2991
        %v2993 = vld [vmem:[%s2992] sm:$0xf]
        %v2994 = vld [vmem:[%s2992 + $0x4] sm:$0x1]
        %v2995 = vld [vmem:[%s2992 + $0x8] sm:$0xf]
        %v2996 = vld [vmem:[%s2992 + $0xc] sm:$0x1]
        %v2997 = vld [vmem:[%s2992 + $0x10] sm:$0xf]
        %v2998 = vld [vmem:[%s2992 + $0x14] sm:$0x1]
        %v2999 = vld [vmem:[%s2992 + $0x18] sm:$0xf]
        %v3000 = vld [vmem:[%s2992 + $0x1c] sm:$0x1]
        %v3001 = vld [vmem:[%s2992 + $0x20] sm:$0xf]
        %v3002 = vld [vmem:[%s2992 + $0x24] sm:$0x1]
        %v3003 = vld [vmem:[%s2992 + $0x28] sm:$0xf]
        %v3004 = vld [vmem:[%s2992 + $0x2c] sm:$0x1]
        %v3005 = vld [vmem:[%s2992 + $0x30] sm:$0xf]
        %v3006 = vld [vmem:[%s2992 + $0x34] sm:$0x1]
        %v3007 = vld [vmem:[%s2992 + $0x38] sm:$0xf]
        %v3008 = vld [vmem:[%s2992 + $0x3c] sm:$0x1]
        %v3025 = vunpack.c.l.b16 %v2993
        %v3026 = vunpack.c.l.b16 %v2994
        %v3027 = vunpack.c.l.b16 %v2995
        %v3028 = vunpack.c.l.b16 %v2996
        %v3029 = vunpack.c.l.b16 %v2997
        %v3030 = vunpack.c.l.b16 %v2998
        %v3031 = vunpack.c.l.b16 %v2999
        %v3032 = vunpack.c.l.b16 %v3000
        %v3033 = vunpack.c.l.b16 %v3001
        %v3034 = vunpack.c.l.b16 %v3002
        %v3035 = vunpack.c.l.b16 %v3003
        %v3036 = vunpack.c.l.b16 %v3004
        %v3037 = vunpack.c.l.b16 %v3005
        %v3038 = vunpack.c.l.b16 %v3006
        %v3039 = vunpack.c.l.b16 %v3007
        %v3040 = vunpack.c.l.b16 %v3008
        %v3041 = vpack.c.b16 %v3026, %v3025
        %v3042 = vpack.c.b16 %v3028, %v3027
        %v3043 = vpack.c.b16 %v3030, %v3029
        %v3044 = vpack.c.b16 %v3032, %v3031
        %v3045 = vpack.c.b16 %v3034, %v3033
        %v3046 = vpack.c.b16 %v3036, %v3035
        %v3047 = vpack.c.b16 %v3038, %v3037
        %v3048 = vpack.c.b16 %v3040, %v3039
        %v3050 = vshrl.u32 %v3041, 16
        %v3052 = vshll.u32 %v3041, 16
        %v3054 = vrot.slane %v3052, 1
        %v3055 = vor.u32 %v3050, %v3054
        %v3057 = vshrl.u32 %v3042, 16
        %v3059 = vshll.u32 %v3042, 16
        %v3061 = vrot.slane %v3059, 1
        %v3062 = vor.u32 %v3057, %v3061
        %v3064 = vshrl.u32 %v3043, 16
        %v3066 = vshll.u32 %v3043, 16
        %v3068 = vrot.slane %v3066, 1
        %v3069 = vor.u32 %v3064, %v3068
        %v3071 = vshrl.u32 %v3044, 16
        %v3073 = vshll.u32 %v3044, 16
        %v3075 = vrot.slane %v3073, 1
        %v3076 = vor.u32 %v3071, %v3075
        %v3078 = vshrl.u32 %v3045, 16
        %v3080 = vshll.u32 %v3045, 16
        %v3082 = vrot.slane %v3080, 1
        %v3083 = vor.u32 %v3078, %v3082
        %v3085 = vshrl.u32 %v3046, 16
        %v3087 = vshll.u32 %v3046, 16
        %v3089 = vrot.slane %v3087, 1
        %v3090 = vor.u32 %v3085, %v3089
        %v3092 = vshrl.u32 %v3047, 16
        %v3094 = vshll.u32 %v3047, 16
        %v3096 = vrot.slane %v3094, 1
        %v3097 = vor.u32 %v3092, %v3096
        %v3099 = vshrl.u32 %v3048, 16
        %v3101 = vshll.u32 %v3048, 16
        %v3103 = vrot.slane %v3101, 1
        %v3104 = vor.u32 %v3099, %v3103
        %3105 = vrot.lane.b32.xlu0 %v3055, 4
        %v3106 = vpop.permute.xlu0 %3105
        %3107 = vrot.lane.b32.xlu0 %v3062, 4
        %v3108 = vpop.permute.xlu0 %3107
        %3109 = vrot.lane.b32.xlu0 %v3069, 4
        %v3110 = vpop.permute.xlu0 %3109
        %3111 = vrot.lane.b32.xlu0 %v3076, 4
        %v3112 = vpop.permute.xlu0 %3111
        %3113 = vrot.lane.b32.xlu0 %v3083, 4
        %v3114 = vpop.permute.xlu0 %3113
        %3115 = vrot.lane.b32.xlu0 %v3090, 4
        %v3116 = vpop.permute.xlu0 %3115
        %3117 = vrot.lane.b32.xlu0 %v3097, 4
        %v3118 = vpop.permute.xlu0 %3117
        %3119 = vrot.lane.b32.xlu0 %v3104, 4
        %v3120 = vpop.permute.xlu0 %3119
        %v3121 = vrot.slane %v3041, 1
        %v3122 = vrot.slane %v3042, 1
        %v3123 = vrot.slane %v3043, 1
        %v3124 = vrot.slane %v3044, 1
        %v3125 = vrot.slane %v3045, 1
        %v3126 = vrot.slane %v3046, 1
        %v3127 = vrot.slane %v3047, 1
        %v3128 = vrot.slane %v3048, 1
        %3129 = vrot.lane.b32.xlu0 %v3121, 8
        %v3130 = vpop.permute.xlu0 %3129
        %3131 = vrot.lane.b32.xlu0 %v3122, 8
        %v3132 = vpop.permute.xlu0 %3131
        %3133 = vrot.lane.b32.xlu0 %v3123, 8
        %v3134 = vpop.permute.xlu0 %3133
        %3135 = vrot.lane.b32.xlu0 %v3124, 8
        %v3136 = vpop.permute.xlu0 %3135
        %3137 = vrot.lane.b32.xlu0 %v3125, 8
        %v3138 = vpop.permute.xlu0 %3137
        %3139 = vrot.lane.b32.xlu0 %v3126, 8
        %v3140 = vpop.permute.xlu0 %3139
        %3141 = vrot.lane.b32.xlu0 %v3127, 8
        %v3142 = vpop.permute.xlu0 %3141
        %3143 = vrot.lane.b32.xlu0 %v3128, 8
        %v3144 = vpop.permute.xlu0 %3143
        %v3147 = vsel %vm1292, %v2993, %v3106
        %v3150 = vsel %vm1292, %v2995, %v3108
        %v3153 = vsel %vm1292, %v2997, %v3110
        %v3156 = vsel %vm1292, %v2999, %v3112
        %v3159 = vsel %vm1292, %v3001, %v3114
        %v3162 = vsel %vm1292, %v3003, %v3116
        %v3165 = vsel %vm1292, %v3005, %v3118
        %v3168 = vsel %vm1292, %v3007, %v3120
        %v3170 = vsel %vm1317, %v3147, %v3130
        %v3172 = vsel %vm1317, %v3150, %v3132
        %v3174 = vsel %vm1317, %v3153, %v3134
        %v3176 = vsel %vm1317, %v3156, %v3136
        %v3178 = vsel %vm1317, %v3159, %v3138
        %v3180 = vsel %vm1317, %v3162, %v3140
        %v3182 = vsel %vm1317, %v3165, %v3142
        %v3184 = vsel %vm1317, %v3168, %v3144
        %s3185 = scalar_lea.vmem %s4, 48
        %v3186 = vld [vmem:[%s3185] sm:$0xf]
        %v3187 = vld [vmem:[%s3185 + $0x4] sm:$0x3]
        %v3196 = vunpack.c.l.b16 %v3170
        %v3197 = vunpack.c.l.b16 %v3172
        %v3198 = vunpack.c.l.b16 %v3174
        %v3199 = vunpack.c.l.b16 %v3176
        %v3200 = vunpack.c.l.b16 %v3178
        %v3201 = vunpack.c.l.b16 %v3180
        %v3202 = vunpack.c.l.b16 %v3182
        %v3203 = vunpack.c.l.b16 %v3184
        %v3204 = vpack.c.b16 %v3197, %v3196
        %v3205 = vpack.c.b16 %v3199, %v3198
        %v3206 = vpack.c.b16 %v3201, %v3200
        %v3207 = vpack.c.b16 %v3203, %v3202
        %v3210 = vunpack.c.l.b16 %v3186
        %v3211 = vunpack.c.l.b16 %v3187
        %v3212 = vpack.c.b16 %v3211, %v3210
        %v3214 = vsel %vm1559, %v3204, 0
        %v3217 = vsel %vm1559, %v3205, 0
        %v3220 = vsel %vm1559, %v3206, 0
        %v3223 = vsel %vm1559, %v3207, 0
        %v3226 = vsel %vm1572, %v3212, 0
        %3228 = vmatprep.subr.bf16.mxu0 0
        %3229 = vmatpush1.bf16.msra.mxu0 %v3226
        %3230 = vmatprep.subr.bf16.mxu0 0
        %3231 = vmatpush1.bf16.msra.mxu0 0
        %3232 = vmatprep.subr.bf16.mxu0 0
        %3233 = vmatpush1.bf16.msra.mxu0 0
        %3234 = vmatprep.subr.bf16.mxu0 0
        %3235 = vmatpush1.bf16.msra.mxu0 0
        %3236 = vmatprep.subr.bf16.mxu0 0
        %3237 = vmatpush1.bf16.msra.mxu0 0
        %3238 = vmatprep.subr.bf16.mxu0 0
        %3239 = vmatpush1.bf16.msra.mxu0 0
        %3240 = vmatprep.subr.bf16.mxu0 0
        %3241 = vmatpush1.bf16.msra.mxu0 0
        %3242 = vmatprep.subr.bf16.mxu0 0
        %3243 = vmatpush1.bf16.msra.mxu0 0
        %3244 = vmatprep.subr.bf16.mxu0 0
        %3245 = vmatpush1.bf16.msra.mxu0 0
        %3246 = vmatprep.subr.bf16.mxu0 0
        %3247 = vmatpush1.bf16.msra.mxu0 0
        %3248 = vmatprep.subr.bf16.mxu0 0
        %3249 = vmatpush1.bf16.msra.mxu0 0
        %3250 = vmatprep.subr.bf16.mxu0 0
        %3251 = vmatpush1.bf16.msra.mxu0 0
        %3252 = vmatprep.subr.bf16.mxu0 0
        %3253 = vmatpush1.bf16.msra.mxu0 0
        %3254 = vmatprep.subr.bf16.mxu0 0
        %3255 = vmatpush1.bf16.msra.mxu0 0
        %3256 = vmatprep.subr.bf16.mxu0 0
        %3257 = vmatpush1.bf16.msra.mxu0 0
        %3258 = vmatprep.subr.bf16.mxu0 0
        %3259 = vmatpush1.bf16.msra.mxu0 0
        %3260 = vmatprep.mubr.bf16.mxu0 0
        %3261 = vmatmul.mubr.bf16.gmra.mrb[0].mxu0 %v3214
        %v3262 = vpop.f32.mrb[0].mxu0
        %v3263 = vadd.f32 0.0, %v3262
        %v3264 = vpop.f32.mrb[0].mxu0
        %v3265 = vpop.f32.mrb[0].mxu0
        %v3266 = vadd.f32 0.0, %v3265
        %v3267 = vpop.f32.mrb[0].mxu0
        %3268 = vmatprep.mubr.bf16.mxu0 0
        %3269 = vmatmul.mubr.bf16.gmra.mrb[0].mxu0 %v3217
        %v3270 = vpop.f32.mrb[0].mxu0
        %v3271 = vadd.f32 0.0, %v3270
        %v3272 = vpop.f32.mrb[0].mxu0
        %v3273 = vpop.f32.mrb[0].mxu0
        %v3274 = vadd.f32 0.0, %v3273
        %v3275 = vpop.f32.mrb[0].mxu0
        %3276 = vmatprep.mubr.bf16.mxu0 0
        %3277 = vmatmul.mubr.bf16.gmra.mrb[0].mxu0 %v3220
        %v3278 = vpop.f32.mrb[0].mxu0
        %v3279 = vadd.f32 0.0, %v3278
        %v3280 = vpop.f32.mrb[0].mxu0
        %v3281 = vpop.f32.mrb[0].mxu0
        %v3282 = vadd.f32 0.0, %v3281
        %v3283 = vpop.f32.mrb[0].mxu0
        %3284 = vmatprep.mubr.bf16.mxu0 0
        %3285 = vmatmul.mubr.bf16.gmra.mrb[0].mxu0 %v3223
        %v3286 = vpop.f32.mrb[0].mxu0
        %v3287 = vadd.f32 0.0, %v3286
        %v3288 = vpop.f32.mrb[0].mxu0
        %v3289 = vpop.f32.mrb[0].mxu0
        %v3290 = vadd.f32 0.0, %v3289
        %v3291 = vpop.f32.mrb[0].mxu0
        %3292 = vdwg.mxu0
        %v3293 = vadd.f32 %v2982, %v3263
        %v3294 = vadd.f32 %v2983, %v3266
        %v3295 = vadd.f32 %v2984, %v3271
        %v3296 = vadd.f32 %v2985, %v3274
        %v3297 = vadd.f32 %v2986, %v3279
        %v3298 = vadd.f32 %v2987, %v3282
        %v3299 = vadd.f32 %v2988, %v3287
        %v3300 = vadd.f32 %v2989, %v3290
        %s3301 = sadd.s32 2, %s2990
        %s3302 = smul.addr %s3301, 4
        %s3303 = scalar_lea.vmem [#allocation2], %s3302
        %v3304 = vld [vmem:[%s3303] sm:$0xf]
        %v3305 = vld [vmem:[%s3303 + $0x4] sm:$0x1]
        %v3306 = vld [vmem:[%s3303 + $0x8] sm:$0xf]
        %v3307 = vld [vmem:[%s3303 + $0xc] sm:$0x1]
        %v3308 = vld [vmem:[%s3303 + $0x10] sm:$0xf]
        %v3309 = vld [vmem:[%s3303 + $0x14] sm:$0x1]
        %v3310 = vld [vmem:[%s3303 + $0x18] sm:$0xf]
        %v3311 = vld [vmem:[%s3303 + $0x1c] sm:$0x1]
        %v3312 = vld [vmem:[%s3303 + $0x20] sm:$0xf]
        %v3313 = vld [vmem:[%s3303 + $0x24] sm:$0x1]
        %v3314 = vld [vmem:[%s3303 + $0x28] sm:$0xf]
        %v3315 = vld [vmem:[%s3303 + $0x2c] sm:$0x1]
        %v3316 = vld [vmem:[%s3303 + $0x30] sm:$0xf]
        %v3317 = vld [vmem:[%s3303 + $0x34] sm:$0x1]
        %v3318 = vld [vmem:[%s3303 + $0x38] sm:$0xf]
        %v3319 = vld [vmem:[%s3303 + $0x3c] sm:$0x1]
        %v3336 = vunpack.c.l.b16 %v3304
        %v3337 = vunpack.c.l.b16 %v3305
        %v3338 = vunpack.c.l.b16 %v3306
        %v3339 = vunpack.c.l.b16 %v3307
        %v3340 = vunpack.c.l.b16 %v3308
        %v3341 = vunpack.c.l.b16 %v3309
        %v3342 = vunpack.c.l.b16 %v3310
        %v3343 = vunpack.c.l.b16 %v3311
        %v3344 = vunpack.c.l.b16 %v3312
        %v3345 = vunpack.c.l.b16 %v3313
        %v3346 = vunpack.c.l.b16 %v3314
        %v3347 = vunpack.c.l.b16 %v3315
        %v3348 = vunpack.c.l.b16 %v3316
        %v3349 = vunpack.c.l.b16 %v3317
        %v3350 = vunpack.c.l.b16 %v3318
        %v3351 = vunpack.c.l.b16 %v3319
        %v3352 = vpack.c.b16 %v3337, %v3336
        %v3353 = vpack.c.b16 %v3339, %v3338
        %v3354 = vpack.c.b16 %v3341, %v3340
        %v3355 = vpack.c.b16 %v3343, %v3342
        %v3356 = vpack.c.b16 %v3345, %v3344
        %v3357 = vpack.c.b16 %v3347, %v3346
        %v3358 = vpack.c.b16 %v3349, %v3348
        %v3359 = vpack.c.b16 %v3351, %v3350
        %v3361 = vshrl.u32 %v3352, 16
        %v3363 = vshll.u32 %v3352, 16
        %v3365 = vrot.slane %v3363, 1
        %v3366 = vor.u32 %v3361, %v3365
        %v3368 = vshrl.u32 %v3353, 16
        %v3370 = vshll.u32 %v3353, 16
        %v3372 = vrot.slane %v3370, 1
        %v3373 = vor.u32 %v3368, %v3372
        %v3375 = vshrl.u32 %v3354, 16
        %v3377 = vshll.u32 %v3354, 16
        %v3379 = vrot.slane %v3377, 1
        %v3380 = vor.u32 %v3375, %v3379
        %v3382 = vshrl.u32 %v3355, 16
        %v3384 = vshll.u32 %v3355, 16
        %v3386 = vrot.slane %v3384, 1
        %v3387 = vor.u32 %v3382, %v3386
        %v3389 = vshrl.u32 %v3356, 16
        %v3391 = vshll.u32 %v3356, 16
        %v3393 = vrot.slane %v3391, 1
        %v3394 = vor.u32 %v3389, %v3393
        %v3396 = vshrl.u32 %v3357, 16
        %v3398 = vshll.u32 %v3357, 16
        %v3400 = vrot.slane %v3398, 1
        %v3401 = vor.u32 %v3396, %v3400
        %v3403 = vshrl.u32 %v3358, 16
        %v3405 = vshll.u32 %v3358, 16
        %v3407 = vrot.slane %v3405, 1
        %v3408 = vor.u32 %v3403, %v3407
        %v3410 = vshrl.u32 %v3359, 16
        %v3412 = vshll.u32 %v3359, 16
        %v3414 = vrot.slane %v3412, 1
        %v3415 = vor.u32 %v3410, %v3414
        %3416 = vrot.lane.b32.xlu0 %v3366, 4
        %v3417 = vpop.permute.xlu0 %3416
        %3418 = vrot.lane.b32.xlu0 %v3373, 4
        %v3419 = vpop.permute.xlu0 %3418
        %3420 = vrot.lane.b32.xlu0 %v3380, 4
        %v3421 = vpop.permute.xlu0 %3420
        %3422 = vrot.lane.b32.xlu0 %v3387, 4
        %v3423 = vpop.permute.xlu0 %3422
        %3424 = vrot.lane.b32.xlu0 %v3394, 4
        %v3425 = vpop.permute.xlu0 %3424
        %3426 = vrot.lane.b32.xlu0 %v3401, 4
        %v3427 = vpop.permute.xlu0 %3426
        %3428 = vrot.lane.b32.xlu0 %v3408, 4
        %v3429 = vpop.permute.xlu0 %3428
        %3430 = vrot.lane.b32.xlu0 %v3415, 4
        %v3431 = vpop.permute.xlu0 %3430
        %v3432 = vrot.slane %v3352, 1
        %v3433 = vrot.slane %v3353, 1
        %v3434 = vrot.slane %v3354, 1
        %v3435 = vrot.slane %v3355, 1
        %v3436 = vrot.slane %v3356, 1
        %v3437 = vrot.slane %v3357, 1
        %v3438 = vrot.slane %v3358, 1
        %v3439 = vrot.slane %v3359, 1
        %3440 = vrot.lane.b32.xlu0 %v3432, 8
        %v3441 = vpop.permute.xlu0 %3440
        %3442 = vrot.lane.b32.xlu0 %v3433, 8
        %v3443 = vpop.permute.xlu0 %3442
        %3444 = vrot.lane.b32.xlu0 %v3434, 8
        %v3445 = vpop.permute.xlu0 %3444
        %3446 = vrot.lane.b32.xlu0 %v3435, 8
        %v3447 = vpop.permute.xlu0 %3446
        %3448 = vrot.lane.b32.xlu0 %v3436, 8
        %v3449 = vpop.permute.xlu0 %3448
        %3450 = vrot.lane.b32.xlu0 %v3437, 8
        %v3451 = vpop.permute.xlu0 %3450
        %3452 = vrot.lane.b32.xlu0 %v3438, 8
        %v3453 = vpop.permute.xlu0 %3452
        %3454 = vrot.lane.b32.xlu0 %v3439, 8
        %v3455 = vpop.permute.xlu0 %3454
        %v3458 = vsel %vm1292, %v3304, %v3417
        %v3461 = vsel %vm1292, %v3306, %v3419
        %v3464 = vsel %vm1292, %v3308, %v3421
        %v3467 = vsel %vm1292, %v3310, %v3423
        %v3470 = vsel %vm1292, %v3312, %v3425
        %v3473 = vsel %vm1292, %v3314, %v3427
        %v3476 = vsel %vm1292, %v3316, %v3429
        %v3479 = vsel %vm1292, %v3318, %v3431
        %v3481 = vsel %vm1317, %v3458, %v3441
        %v3483 = vsel %vm1317, %v3461, %v3443
        %v3485 = vsel %vm1317, %v3464, %v3445
        %v3487 = vsel %vm1317, %v3467, %v3447
        %v3489 = vsel %vm1317, %v3470, %v3449
        %v3491 = vsel %vm1317, %v3473, %v3451
        %v3493 = vsel %vm1317, %v3476, %v3453
        %v3495 = vsel %vm1317, %v3479, %v3455
        %s3496 = scalar_lea.vmem %s4, 56
        %v3497 = vld [vmem:[%s3496] sm:$0xf]
        %v3498 = vld [vmem:[%s3496 + $0x4] sm:$0x3]
        %v3507 = vunpack.c.l.b16 %v3481
        %v3508 = vunpack.c.l.b16 %v3483
        %v3509 = vunpack.c.l.b16 %v3485
        %v3510 = vunpack.c.l.b16 %v3487
        %v3511 = vunpack.c.l.b16 %v3489
        %v3512 = vunpack.c.l.b16 %v3491
        %v3513 = vunpack.c.l.b16 %v3493
        %v3514 = vunpack.c.l.b16 %v3495
        %v3515 = vpack.c.b16 %v3508, %v3507
        %v3516 = vpack.c.b16 %v3510, %v3509
        %v3517 = vpack.c.b16 %v3512, %v3511
        %v3518 = vpack.c.b16 %v3514, %v3513
        %v3521 = vunpack.c.l.b16 %v3497
        %v3522 = vunpack.c.l.b16 %v3498
        %v3523 = vpack.c.b16 %v3522, %v3521
        %v3525 = vsel %vm1559, %v3515, 0
        %v3528 = vsel %vm1559, %v3516, 0
        %v3531 = vsel %vm1559, %v3517, 0
        %v3534 = vsel %vm1559, %v3518, 0
        %v3537 = vsel %vm1572, %v3523, 0
        %3539 = vmatprep.subr.bf16.mxu0 0
        %3540 = vmatpush1.bf16.msra.mxu0 %v3537
        %3541 = vmatprep.subr.bf16.mxu0 0
        %3542 = vmatpush1.bf16.msra.mxu0 0
        %3543 = vmatprep.subr.bf16.mxu0 0
        %3544 = vmatpush1.bf16.msra.mxu0 0
        %3545 = vmatprep.subr.bf16.mxu0 0
        %3546 = vmatpush1.bf16.msra.mxu0 0
        %3547 = vmatprep.subr.bf16.mxu0 0
        %3548 = vmatpush1.bf16.msra.mxu0 0
        %3549 = vmatprep.subr.bf16.mxu0 0
        %3550 = vmatpush1.bf16.msra.mxu0 0
        %3551 = vmatprep.subr.bf16.mxu0 0
        %3552 = vmatpush1.bf16.msra.mxu0 0
        %3553 = vmatprep.subr.bf16.mxu0 0
        %3554 = vmatpush1.bf16.msra.mxu0 0
        %3555 = vmatprep.subr.bf16.mxu0 0
        %3556 = vmatpush1.bf16.msra.mxu0 0
        %3557 = vmatprep.subr.bf16.mxu0 0
        %3558 = vmatpush1.bf16.msra.mxu0 0
        %3559 = vmatprep.subr.bf16.mxu0 0
        %3560 = vmatpush1.bf16.msra.mxu0 0
        %3561 = vmatprep.subr.bf16.mxu0 0
        %3562 = vmatpush1.bf16.msra.mxu0 0
        %3563 = vmatprep.subr.bf16.mxu0 0
        %3564 = vmatpush1.bf16.msra.mxu0 0
        %3565 = vmatprep.subr.bf16.mxu0 0
        %3566 = vmatpush1.bf16.msra.mxu0 0
        %3567 = vmatprep.subr.bf16.mxu0 0
        %3568 = vmatpush1.bf16.msra.mxu0 0
        %3569 = vmatprep.subr.bf16.mxu0 0
        %3570 = vmatpush1.bf16.msra.mxu0 0
        %3571 = vmatprep.mubr.bf16.mxu0 0
        %3572 = vmatmul.mubr.bf16.gmra.mrb[0].mxu0 %v3525
        %v3573 = vpop.f32.mrb[0].mxu0
        %v3574 = vadd.f32 0.0, %v3573
        %v3575 = vpop.f32.mrb[0].mxu0
        %v3576 = vpop.f32.mrb[0].mxu0
        %v3577 = vadd.f32 0.0, %v3576
        %v3578 = vpop.f32.mrb[0].mxu0
        %3579 = vmatprep.mubr.bf16.mxu0 0
        %3580 = vmatmul.mubr.bf16.gmra.mrb[0].mxu0 %v3528
        %v3581 = vpop.f32.mrb[0].mxu0
        %v3582 = vadd.f32 0.0, %v3581
        %v3583 = vpop.f32.mrb[0].mxu0
        %v3584 = vpop.f32.mrb[0].mxu0
        %v3585 = vadd.f32 0.0, %v3584
        %v3586 = vpop.f32.mrb[0].mxu0
        %3587 = vmatprep.mubr.bf16.mxu0 0
        %3588 = vmatmul.mubr.bf16.gmra.mrb[0].mxu0 %v3531
        %v3589 = vpop.f32.mrb[0].mxu0
        %v3590 = vadd.f32 0.0, %v3589
        %v3591 = vpop.f32.mrb[0].mxu0
        %v3592 = vpop.f32.mrb[0].mxu0
        %v3593 = vadd.f32 0.0, %v3592
        %v3594 = vpop.f32.mrb[0].mxu0
        %3595 = vmatprep.mubr.bf16.mxu0 0
        %3596 = vmatmul.mubr.bf16.gmra.mrb[0].mxu0 %v3534
        %v3597 = vpop.f32.mrb[0].mxu0
        %v3598 = vadd.f32 0.0, %v3597
        %v3599 = vpop.f32.mrb[0].mxu0
        %v3600 = vpop.f32.mrb[0].mxu0
        %v3601 = vadd.f32 0.0, %v3600
        %v3602 = vpop.f32.mrb[0].mxu0
        %3603 = vdwg.mxu0
        %v3604 = vadd.f32 %v3293, %v3574
        %v3605 = vadd.f32 %v3294, %v3577
        %v3606 = vadd.f32 %v3295, %v3582
        %v3607 = vadd.f32 %v3296, %v3585
        %v3608 = vadd.f32 %v3297, %v3590
        %v3609 = vadd.f32 %v3298, %v3593
        %v3610 = vadd.f32 %v3299, %v3598
        %v3611 = vadd.f32 %v3300, %v3601
        %s3612 = sadd.s32 4, %s2990
        %s3613 = smul.addr %s3612, 4
        %s3614 = scalar_lea.vmem [#allocation2], %s3613
        %v3615 = vld [vmem:[%s3614] sm:$0xf]
        %v3616 = vld [vmem:[%s3614 + $0x4] sm:$0x1]
        %v3617 = vld [vmem:[%s3614 + $0x8] sm:$0xf]
        %v3618 = vld [vmem:[%s3614 + $0xc] sm:$0x1]
        %v3619 = vld [vmem:[%s3614 + $0x10] sm:$0xf]
        %v3620 = vld [vmem:[%s3614 + $0x14] sm:$0x1]
        %v3621 = vld [vmem:[%s3614 + $0x18] sm:$0xf]
        %v3622 = vld [vmem:[%s3614 + $0x1c] sm:$0x1]
        %v3623 = vld [vmem:[%s3614 + $0x20] sm:$0xf]
        %v3624 = vld [vmem:[%s3614 + $0x24] sm:$0x1]
        %v3625 = vld [vmem:[%s3614 + $0x28] sm:$0xf]
        %v3626 = vld [vmem:[%s3614 + $0x2c] sm:$0x1]
        %v3627 = vld [vmem:[%s3614 + $0x30] sm:$0xf]
        %v3628 = vld [vmem:[%s3614 + $0x34] sm:$0x1]
        %v3629 = vld [vmem:[%s3614 + $0x38] sm:$0xf]
        %v3630 = vld [vmem:[%s3614 + $0x3c] sm:$0x1]
        %v3647 = vunpack.c.l.b16 %v3615
        %v3648 = vunpack.c.l.b16 %v3616
        %v3649 = vunpack.c.l.b16 %v3617
        %v3650 = vunpack.c.l.b16 %v3618
        %v3651 = vunpack.c.l.b16 %v3619
        %v3652 = vunpack.c.l.b16 %v3620
        %v3653 = vunpack.c.l.b16 %v3621
        %v3654 = vunpack.c.l.b16 %v3622
        %v3655 = vunpack.c.l.b16 %v3623
        %v3656 = vunpack.c.l.b16 %v3624
        %v3657 = vunpack.c.l.b16 %v3625
        %v3658 = vunpack.c.l.b16 %v3626
        %v3659 = vunpack.c.l.b16 %v3627
        %v3660 = vunpack.c.l.b16 %v3628
        %v3661 = vunpack.c.l.b16 %v3629
        %v3662 = vunpack.c.l.b16 %v3630
        %v3663 = vpack.c.b16 %v3648, %v3647
        %v3664 = vpack.c.b16 %v3650, %v3649
        %v3665 = vpack.c.b16 %v3652, %v3651
        %v3666 = vpack.c.b16 %v3654, %v3653
        %v3667 = vpack.c.b16 %v3656, %v3655
        %v3668 = vpack.c.b16 %v3658, %v3657
        %v3669 = vpack.c.b16 %v3660, %v3659
        %v3670 = vpack.c.b16 %v3662, %v3661
        %v3672 = vshrl.u32 %v3663, 16
        %v3674 = vshll.u32 %v3663, 16
        %v3676 = vrot.slane %v3674, 1
        %v3677 = vor.u32 %v3672, %v3676
        %v3679 = vshrl.u32 %v3664, 16
        %v3681 = vshll.u32 %v3664, 16
        %v3683 = vrot.slane %v3681, 1
        %v3684 = vor.u32 %v3679, %v3683
        %v3686 = vshrl.u32 %v3665, 16
        %v3688 = vshll.u32 %v3665, 16
        %v3690 = vrot.slane %v3688, 1
        %v3691 = vor.u32 %v3686, %v3690
        %v3693 = vshrl.u32 %v3666, 16
        %v3695 = vshll.u32 %v3666, 16
        %v3697 = vrot.slane %v3695, 1
        %v3698 = vor.u32 %v3693, %v3697
        %v3700 = vshrl.u32 %v3667, 16
        %v3702 = vshll.u32 %v3667, 16
        %v3704 = vrot.slane %v3702, 1
        %v3705 = vor.u32 %v3700, %v3704
        %v3707 = vshrl.u32 %v3668, 16
        %v3709 = vshll.u32 %v3668, 16
        %v3711 = vrot.slane %v3709, 1
        %v3712 = vor.u32 %v3707, %v3711
        %v3714 = vshrl.u32 %v3669, 16
        %v3716 = vshll.u32 %v3669, 16
        %v3718 = vrot.slane %v3716, 1
        %v3719 = vor.u32 %v3714, %v3718
        %v3721 = vshrl.u32 %v3670, 16
        %v3723 = vshll.u32 %v3670, 16
        %v3725 = vrot.slane %v3723, 1
        %v3726 = vor.u32 %v3721, %v3725
        %3727 = vrot.lane.b32.xlu0 %v3677, 4
        %v3728 = vpop.permute.xlu0 %3727
        %3729 = vrot.lane.b32.xlu0 %v3684, 4
        %v3730 = vpop.permute.xlu0 %3729
        %3731 = vrot.lane.b32.xlu0 %v3691, 4
        %v3732 = vpop.permute.xlu0 %3731
        %3733 = vrot.lane.b32.xlu0 %v3698, 4
        %v3734 = vpop.permute.xlu0 %3733
        %3735 = vrot.lane.b32.xlu0 %v3705, 4
        %v3736 = vpop.permute.xlu0 %3735
        %3737 = vrot.lane.b32.xlu0 %v3712, 4
        %v3738 = vpop.permute.xlu0 %3737
        %3739 = vrot.lane.b32.xlu0 %v3719, 4
        %v3740 = vpop.permute.xlu0 %3739
        %3741 = vrot.lane.b32.xlu0 %v3726, 4
        %v3742 = vpop.permute.xlu0 %3741
        %v3743 = vrot.slane %v3663, 1
        %v3744 = vrot.slane %v3664, 1
        %v3745 = vrot.slane %v3665, 1
        %v3746 = vrot.slane %v3666, 1
        %v3747 = vrot.slane %v3667, 1
        %v3748 = vrot.slane %v3668, 1
        %v3749 = vrot.slane %v3669, 1
        %v3750 = vrot.slane %v3670, 1
        %3751 = vrot.lane.b32.xlu0 %v3743, 8
        %v3752 = vpop.permute.xlu0 %3751
        %3753 = vrot.lane.b32.xlu0 %v3744, 8
        %v3754 = vpop.permute.xlu0 %3753
        %3755 = vrot.lane.b32.xlu0 %v3745, 8
        %v3756 = vpop.permute.xlu0 %3755
        %3757 = vrot.lane.b32.xlu0 %v3746, 8
        %v3758 = vpop.permute.xlu0 %3757
        %3759 = vrot.lane.b32.xlu0 %v3747, 8
        %v3760 = vpop.permute.xlu0 %3759
        %3761 = vrot.lane.b32.xlu0 %v3748, 8
        %v3762 = vpop.permute.xlu0 %3761
        %3763 = vrot.lane.b32.xlu0 %v3749, 8
        %v3764 = vpop.permute.xlu0 %3763
        %3765 = vrot.lane.b32.xlu0 %v3750, 8
        %v3766 = vpop.permute.xlu0 %3765
        %v3769 = vsel %vm1292, %v3615, %v3728
        %v3772 = vsel %vm1292, %v3617, %v3730
        %v3775 = vsel %vm1292, %v3619, %v3732
        %v3778 = vsel %vm1292, %v3621, %v3734
        %v3781 = vsel %vm1292, %v3623, %v3736
        %v3784 = vsel %vm1292, %v3625, %v3738
        %v3787 = vsel %vm1292, %v3627, %v3740
        %v3790 = vsel %vm1292, %v3629, %v3742
        %v3792 = vsel %vm1317, %v3769, %v3752
        %v3794 = vsel %vm1317, %v3772, %v3754
        %v3796 = vsel %vm1317, %v3775, %v3756
        %v3798 = vsel %vm1317, %v3778, %v3758
        %v3800 = vsel %vm1317, %v3781, %v3760
        %v3802 = vsel %vm1317, %v3784, %v3762
        %v3804 = vsel %vm1317, %v3787, %v3764
        %v3806 = vsel %vm1317, %v3790, %v3766
        %s3807 = scalar_lea.vmem %s4, 64
        %v3808 = vld [vmem:[%s3807] sm:$0xf]
        %v3809 = vld [vmem:[%s3807 + $0x4] sm:$0x3]
        %v3818 = vunpack.c.l.b16 %v3792
        %v3819 = vunpack.c.l.b16 %v3794
        %v3820 = vunpack.c.l.b16 %v3796
        %v3821 = vunpack.c.l.b16 %v3798
        %v3822 = vunpack.c.l.b16 %v3800
        %v3823 = vunpack.c.l.b16 %v3802
        %v3824 = vunpack.c.l.b16 %v3804
        %v3825 = vunpack.c.l.b16 %v3806
        %v3826 = vpack.c.b16 %v3819, %v3818
        %v3827 = vpack.c.b16 %v3821, %v3820
        %v3828 = vpack.c.b16 %v3823, %v3822
        %v3829 = vpack.c.b16 %v3825, %v3824
        %v3832 = vunpack.c.l.b16 %v3808
        %v3833 = vunpack.c.l.b16 %v3809
        %v3834 = vpack.c.b16 %v3833, %v3832
        %v3836 = vsel %vm1559, %v3826, 0
        %v3839 = vsel %vm1559, %v3827, 0
        %v3842 = vsel %vm1559, %v3828, 0
        %v3845 = vsel %vm1559, %v3829, 0
        %v3848 = vsel %vm1572, %v3834, 0
        %3850 = vmatprep.subr.bf16.mxu0 0
        %3851 = vmatpush1.bf16.msra.mxu0 %v3848
        %3852 = vmatprep.subr.bf16.mxu0 0
        %3853 = vmatpush1.bf16.msra.mxu0 0
        %3854 = vmatprep.subr.bf16.mxu0 0
        %3855 = vmatpush1.bf16.msra.mxu0 0
        %3856 = vmatprep.subr.bf16.mxu0 0
        %3857 = vmatpush1.bf16.msra.mxu0 0
        %3858 = vmatprep.subr.bf16.mxu0 0
        %3859 = vmatpush1.bf16.msra.mxu0 0
        %3860 = vmatprep.subr.bf16.mxu0 0
        %3861 = vmatpush1.bf16.msra.mxu0 0
        %3862 = vmatprep.subr.bf16.mxu0 0
        %3863 = vmatpush1.bf16.msra.mxu0 0
        %3864 = vmatprep.subr.bf16.mxu0 0
        %3865 = vmatpush1.bf16.msra.mxu0 0
        %3866 = vmatprep.subr.bf16.mxu0 0
        %3867 = vmatpush1.bf16.msra.mxu0 0
        %3868 = vmatprep.subr.bf16.mxu0 0
        %3869 = vmatpush1.bf16.msra.mxu0 0
        %3870 = vmatprep.subr.bf16.mxu0 0
        %3871 = vmatpush1.bf16.msra.mxu0 0
        %3872 = vmatprep.subr.bf16.mxu0 0
        %3873 = vmatpush1.bf16.msra.mxu0 0
        %3874 = vmatprep.subr.bf16.mxu0 0
        %3875 = vmatpush1.bf16.msra.mxu0 0
        %3876 = vmatprep.subr.bf16.mxu0 0
        %3877 = vmatpush1.bf16.msra.mxu0 0
        %3878 = vmatprep.subr.bf16.mxu0 0
        %3879 = vmatpush1.bf16.msra.mxu0 0
        %3880 = vmatprep.subr.bf16.mxu0 0
        %3881 = vmatpush1.bf16.msra.mxu0 0
        %3882 = vmatprep.mubr.bf16.mxu0 0
        %3883 = vmatmul.mubr.bf16.gmra.mrb[0].mxu0 %v3836
        %v3884 = vpop.f32.mrb[0].mxu0
        %v3885 = vadd.f32 0.0, %v3884
        %v3886 = vpop.f32.mrb[0].mxu0
        %v3887 = vpop.f32.mrb[0].mxu0
        %v3888 = vadd.f32 0.0, %v3887
        %v3889 = vpop.f32.mrb[0].mxu0
        %3890 = vmatprep.mubr.bf16.mxu0 0
        %3891 = vmatmul.mubr.bf16.gmra.mrb[0].mxu0 %v3839
        %v3892 = vpop.f32.mrb[0].mxu0
        %v3893 = vadd.f32 0.0, %v3892
        %v3894 = vpop.f32.mrb[0].mxu0
        %v3895 = vpop.f32.mrb[0].mxu0
        %v3896 = vadd.f32 0.0, %v3895
        %v3897 = vpop.f32.mrb[0].mxu0
        %3898 = vmatprep.mubr.bf16.mxu0 0
        %3899 = vmatmul.mubr.bf16.gmra.mrb[0].mxu0 %v3842
        %v3900 = vpop.f32.mrb[0].mxu0
        %v3901 = vadd.f32 0.0, %v3900
        %v3902 = vpop.f32.mrb[0].mxu0
        %v3903 = vpop.f32.mrb[0].mxu0
        %v3904 = vadd.f32 0.0, %v3903
        %v3905 = vpop.f32.mrb[0].mxu0
        %3906 = vmatprep.mubr.bf16.mxu0 0
        %3907 = vmatmul.mubr.bf16.gmra.mrb[0].mxu0 %v3845
        %v3908 = vpop.f32.mrb[0].mxu0
        %v3909 = vadd.f32 0.0, %v3908
        %v3910 = vpop.f32.mrb[0].mxu0
        %v3911 = vpop.f32.mrb[0].mxu0
        %v3912 = vadd.f32 0.0, %v3911
        %v3913 = vpop.f32.mrb[0].mxu0
        %3914 = vdwg.mxu0
        %v3915 = vadd.f32 %v3604, %v3885
        %v3916 = vadd.f32 %v3605, %v3888
        %v3917 = vadd.f32 %v3606, %v3893
        %v3918 = vadd.f32 %v3607, %v3896
        %v3919 = vadd.f32 %v3608, %v3901
        %v3920 = vadd.f32 %v3609, %v3904
        %v3921 = vadd.f32 %v3610, %v3909
        %v3922 = vadd.f32 %v3611, %v3912
        %v3923 = vld [vmem:[%s5] sm:$0x1]
        %v3925 = vlaneseq
        %v3926 = vshrl.u32 %v3925, 7
        %v3927 = vsub.s32 0, %v3926
        %v3928 = vrot.slane %v3923, %v3927
        %v3930 = vadd.f32 %v3915, %v3928
        %v3931 = vadd.f32 %v3916, %v3928
        %v3932 = vadd.f32 %v3917, %v3928
        %v3933 = vadd.f32 %v3918, %v3928
        %v3934 = vadd.f32 %v3919, %v3928
        %v3935 = vadd.f32 %v3920, %v3928
        %v3936 = vadd.f32 %v3921, %v3928
        %v3937 = vadd.f32 %v3922, %v3928
        %v3938 = vmax.f32 %v3930, 0.0
        %v3939 = vmax.f32 %v3931, 0.0
        %v3940 = vmax.f32 %v3932, 0.0
        %v3941 = vmax.f32 %v3933, 0.0
        %v3942 = vmax.f32 %v3934, 0.0
        %v3943 = vmax.f32 %v3935, 0.0
        %v3944 = vmax.f32 %v3936, 0.0
        %v3945 = vmax.f32 %v3937, 0.0
        %v3946 = vpack.c.bf16 %v3939, %v3938
        %v3947 = vpack.c.bf16 %v3941, %v3940
        %v3948 = vpack.c.bf16 %v3943, %v3942
        %v3949 = vpack.c.bf16 %v3945, %v3944
        %v3950 = vld [vmem:[%s6] sm:$0x3]
        %p3951 = scmp.lt.s32.totalorder %s33, 0
        %s3952 = ssub.s32 0, %s33
        %s3953 = scalar_select %p3951, %s3952, %s33
        %s3954 = sand.u32 %s3953, 1
        %s3955 = ssub.s32 0, %s3954
        %s3956 = scalar_select %p3951, %s3955, %s3954
        %s3957 = smul.u32 %s3956, 64
        %s3958 = scalar_lea.vmem [#allocation3], %s3957
        %v3959 = vld [vmem:[%s3958] sm:$0xff]
        %v3960 = vld [vmem:[%s3958 + $0x8] sm:$0xff]
        %v3961 = vld [vmem:[%s3958 + $0x10] sm:$0xff]
        %v3962 = vld [vmem:[%s3958 + $0x18] sm:$0xff]
        %v3963 = vld [vmem:[%s3958 + $0x20] sm:$0xff]
        %v3964 = vld [vmem:[%s3958 + $0x28] sm:$0xff]
        %v3965 = vld [vmem:[%s3958 + $0x30] sm:$0xff]
        %v3966 = vld [vmem:[%s3958 + $0x38] sm:$0xff]
        %v3967 = vld [vmem:[%s7] sm:$0x1]
        %v3969 = vlaneseq
        %v3970 = vshrl.u32 %v3969, 7
        %v3971 = vsub.s32 0, %v3970
        %v3972 = vrot.slane %v3967, %v3971
        %v3975 = vsel %vm1292, %v3946, 0
        %v3978 = vsel %vm1292, %v3947, 0
        %v3981 = vsel %vm1292, %v3948, 0
        %v3984 = vsel %vm1292, %v3949, 0
        %vm3986 = vcmask 1041408
        %v3988 = vsel %vm3986, %v3950, 0
        %3990 = vmatprep.subr.bf16.mxu0 0
        %3991 = vmatpush1.bf16.msra.mxu0 %v3988
        %3992 = vmatprep.subr.bf16.mxu0 0
        %3993 = vmatpush1.bf16.msra.mxu0 0
        %3994 = vmatprep.subr.bf16.mxu0 0
        %3995 = vmatpush1.bf16.msra.mxu0 0
        %3996 = vmatprep.subr.bf16.mxu0 0
        %3997 = vmatpush1.bf16.msra.mxu0 0
        %3998 = vmatprep.subr.bf16.mxu0 0
        %3999 = vmatpush1.bf16.msra.mxu0 0
        %4000 = vmatprep.subr.bf16.mxu0 0
        %4001 = vmatpush1.bf16.msra.mxu0 0
        %4002 = vmatprep.subr.bf16.mxu0 0
        %4003 = vmatpush1.bf16.msra.mxu0 0
        %4004 = vmatprep.subr.bf16.mxu0 0
        %4005 = vmatpush1.bf16.msra.mxu0 0
        %4006 = vmatprep.subr.bf16.mxu0 0
        %4007 = vmatpush1.bf16.msra.mxu0 0
        %4008 = vmatprep.subr.bf16.mxu0 0
        %4009 = vmatpush1.bf16.msra.mxu0 0
        %4010 = vmatprep.subr.bf16.mxu0 0
        %4011 = vmatpush1.bf16.msra.mxu0 0
        %4012 = vmatprep.subr.bf16.mxu0 0
        %4013 = vmatpush1.bf16.msra.mxu0 0
        %4014 = vmatprep.subr.bf16.mxu0 0
        %4015 = vmatpush1.bf16.msra.mxu0 0
        %4016 = vmatprep.subr.bf16.mxu0 0
        %4017 = vmatpush1.bf16.msra.mxu0 0
        %4018 = vmatprep.subr.bf16.mxu0 0
        %4019 = vmatpush1.bf16.msra.mxu0 0
        %4020 = vmatprep.subr.bf16.mxu0 0
        %4021 = vmatpush1.bf16.msra.mxu0 0
        %4022 = vmatprep.mubr.bf16.mxu0 0
        %4023 = vmatmul.mubr.bf16.gmra.mrb[0].mxu0 %v3975
        %v4024 = vpop.f32.mrb[0].mxu0
        %v4025 = vadd.f32 %v3972, %v4024
        %v4026 = vpop.f32.mrb[0].mxu0
        %v4027 = vpop.f32.mrb[0].mxu0
        %v4028 = vadd.f32 %v3972, %v4027
        %v4029 = vpop.f32.mrb[0].mxu0
        %4030 = vmatprep.mubr.bf16.mxu0 0
        %4031 = vmatmul.mubr.bf16.gmra.mrb[0].mxu0 %v3978
        %v4032 = vpop.f32.mrb[0].mxu0
        %v4033 = vadd.f32 %v3972, %v4032
        %v4034 = vpop.f32.mrb[0].mxu0
        %v4035 = vpop.f32.mrb[0].mxu0
        %v4036 = vadd.f32 %v3972, %v4035
        %v4037 = vpop.f32.mrb[0].mxu0
        %4038 = vmatprep.mubr.bf16.mxu0 0
        %4039 = vmatmul.mubr.bf16.gmra.mrb[0].mxu0 %v3981
        %v4040 = vpop.f32.mrb[0].mxu0
        %v4041 = vadd.f32 %v3972, %v4040
        %v4042 = vpop.f32.mrb[0].mxu0
        %v4043 = vpop.f32.mrb[0].mxu0
        %v4044 = vadd.f32 %v3972, %v4043
        %v4045 = vpop.f32.mrb[0].mxu0
        %4046 = vmatprep.mubr.bf16.mxu0 0
        %4047 = vmatmul.mubr.bf16.gmra.mrb[0].mxu0 %v3984
        %v4048 = vpop.f32.mrb[0].mxu0
        %v4049 = vadd.f32 %v3972, %v4048
        %v4050 = vpop.f32.mrb[0].mxu0
        %v4051 = vpop.f32.mrb[0].mxu0
        %v4052 = vadd.f32 %v3972, %v4051
        %v4053 = vpop.f32.mrb[0].mxu0
        %4054 = vdwg.mxu0
        %v4055 = vadd.f32 %v4025, %v3959
        %v4056 = vadd.f32 %v4028, %v3960
        %v4057 = vadd.f32 %v4033, %v3961
        %v4058 = vadd.f32 %v4036, %v3962
        %v4059 = vadd.f32 %v4041, %v3963
        %v4060 = vadd.f32 %v4044, %v3964
        %v4061 = vadd.f32 %v4049, %v3965
        %v4062 = vadd.f32 %v4052, %v3966
        %v4063 = vmax.f32 %v4055, 0.0
        %v4064 = vmax.f32 %v4056, 0.0
        %v4065 = vmax.f32 %v4057, 0.0
        %v4066 = vmax.f32 %v4058, 0.0
        %v4067 = vmax.f32 %v4059, 0.0
        %v4068 = vmax.f32 %v4060, 0.0
        %v4069 = vmax.f32 %v4061, 0.0
        %v4070 = vmax.f32 %v4062, 0.0
        %vm4071 = vcmask 130048
        %4072 = vst.msk [vmem:[%s390] sm:$0xff] %vm4071, %v4063
        %4073 = vst.msk [vmem:[%s390 + $0x8] sm:$0xff] %vm4071, %v4064
        %4074 = vst.msk [vmem:[%s390 + $0x10] sm:$0xff] %vm4071, %v4065
        %4075 = vst.msk [vmem:[%s390 + $0x18] sm:$0xff] %vm4071, %v4066
        %4076 = vst.msk [vmem:[%s390 + $0x20] sm:$0xff] %vm4071, %v4067
        %4077 = vst.msk [vmem:[%s390 + $0x28] sm:$0xff] %vm4071, %v4068
        %4078 = vst.msk [vmem:[%s390 + $0x30] sm:$0xff] %vm4071, %v4069
        %4079 = vst.msk [vmem:[%s390 + $0x38] sm:$0xff] %vm4071, %v4070
        %s4080 = sand.u32 %s236, 1
        %s4081 = scalar_lea.sflag [#allocation6], %s4080
        %s4082 = sand.u32 %s236, 1
        %s4083 = smul.addr %s4082, 64
        %s4084 = scalar_lea.vmem [#allocation9], %s4083
        // Predicated region
        $region73: #{tpu_custom_call.1} parent=51 // pred_check
          %p4085 = pneg %p246
        $region74: #{tpu_custom_call.1} parent=51 // pred_check_branch
          %4087 = sbr.rel (%p4085) target = $region76
        $region75: #{tpu_custom_call.1} parent=51 // pred_region
          %s4089 = ssub.s32 1024, 1024
          %4090 = vsyncadd %s4081, %s4089
          %s4091 = smul.addr %s33, 8
          %s4092 = smul.addr %s32, 64
          %s4093 = sadd.s32 %s4091, %s4092
          %s4094 = smul.addr %s4093, 128
          %s4095 = scalar_lea.hbm %s8, %s4094
          %s4096 = sshll.u32 %s4084, 4
          %s4097 = int_to_ptr.vmem [resolvable:$true] %s4096
          %4102 = dma.vmem_to_hbm [thread:$0]  %s4097, 1024, %s4095, %s4081, 128, 128, 8
        $region76: #{tpu_custom_call.1} parent=51 // pred_fallthru
          _
      $region52: #{tpu_custom_call.1} parent=5 // pred_fallthru
        _
      %p4103 = scmp.le.s32.totalorder 2, %s23
      // Predicated region
      $region77: #{tpu_custom_call.1} parent=5 // pred_check
        %p4104 = pneg %p4103
      $region78: #{tpu_custom_call.1} parent=5 // pred_check_branch
        %4106 = sbr.rel (%p4104) target = $region80
      $region79: #{tpu_custom_call.1} parent=5 // pred_region
        %s4107 = ssub.s32 %s23, 2
        // Predicated region
        $region81: #{tpu_custom_call.1} parent=79 // pred_check
          %p4108 = pneg %p252
        $region82: #{tpu_custom_call.1} parent=79 // pred_check_branch
          %4110 = sbr.rel (%p4108) target = $region84
        $region83: #{tpu_custom_call.1} parent=79 // pred_region
          %s4111 = sand.u32 %s237, 1
          %s4112 = scalar_lea.sflag [#allocation6], %s4111
          %s4113 = sand.u32 %s237, 1
          %s4114 = smul.addr %s4113, 64
          %s4115 = scalar_lea.vmem [#allocation9], %s4114
          %4116 = dma.done %s4112, 1024
        $region84: #{tpu_custom_call.1} parent=79 // pred_fallthru
          _
      $region80: #{tpu_custom_call.1} parent=5 // pred_fallthru
        _
    $region6: #{tpu_custom_call.1} parent=1 // loop_footer
      %s27 = sadd.s32 1, %s23
    $region7: #{tpu_custom_call.1} parent=1 // loop_footer_branch
      %22 = sbr.rel target = $region3
    $region8: #{tpu_custom_call.1} parent=1 // loop_exit
      _
    %4117 = vsyncpa [#allocation5], 1
    %s4118 = scalar_lea.sflag [#allocation5], 1
    %4119 = vsyncpa %s4118, 1
    %4120 = vsyncpa [#allocation8], 1
    %s4121 = scalar_lea.sflag [#allocation8], 1
    %4122 = vsyncpa %s4121, 1
    %4123 = vsyncpa [#allocation6], 1
    %s4124 = scalar_lea.sflag [#allocation6], 1
    %4125 = vsyncpa %s4124, 1

</llo_original>
